<compile_context>
chip_gen: v6e
topology: v6e:2x2x1
jax: 0.10.0
libtpu: 0.0.40
codegen_flags: <defaults>
</compile_context>

<pallas_src>
import jax
import jax.numpy as jnp
from jax import lax
from jax.experimental import pallas as pl
from jax.experimental.pallas import tpu as pltpu

# ---- model_cfg (mirrors the PyTorch module's constructor arguments) ----
MEAN_NUM  = 8      # model_cfg['mean_val']  -> LSTM input_size
FEATURES  = 32     # model_cfg['features']  -> LSTM_system hidden_size
LAYERS    = 2      # model_cfg['layers']    -> LSTM_system num_layers (kernel built for 2)
DFLT_SEQ  = 8      # model_cfg['dflt_seq']  -> xd sequence length
HIST_SEQ  = 8      # model_cfg['hist_seq']  -> xs sequence length
H_DEFAULT = 64     # LSTM_default hidden size (hard-coded 64 in the module)
NN_HID    = FEATURES // 2   # 16
CAT_DIM   = H_DEFAULT + FEATURES + MEAN_NUM + 1   # 105
BATCH     = 8
BN_EPS    = 1e-5


# ---------------------------------------------------------------------------
# Fused kernel: interleaved LSTM_default + LSTM_system(2 layers) + head
# ---------------------------------------------------------------------------
def _hybrid_lstm_kernel(
        # data
        xd_ref, xs_ref, xa_ref, xm_ref,
        # LSTM_default (1 layer, hidden 64): W_ih^T, W_hh^T, b_ih+b_hh
        wih_d_ref, whh_d_ref, b_d_ref,
        # LSTM_system layer 0 (hidden FEATURES)
        wih_s0_ref, whh_s0_ref, b_s0_ref,
        # LSTM_system layer 1: merged [W_ih^T ; W_hh^T] and summed bias
        w_s1_ref, b_s1_ref,
        # head: BN1 folded scale/shift split per concat segment, split Linear1,
        #       BN2 folded, Linear2
        bn1d_ref, bn1s_ref, bn1a_ref, bn1m_ref,
        w1d_ref, w1s_ref, w1a_ref, w1m_ref, b1_ref,
        bn2_ref, w2_ref, b2_ref,
        # output
        out_ref,
        # VMEM scratch for precomputed input projections
        gxd_scr, gxs_scr):
    f32 = jnp.float32
    N = xa_ref.shape[0]
    HD = whh_d_ref.shape[0]          # 64
    HS = whh_s0_ref.shape[0]         # FEATURES
    Td = xd_ref.shape[0] // N
    Ts = xs_ref.shape[0] // N
    Tmin = min(Td, Ts)

    def lstm_gate_step(gates, c, H):
        # One sigmoid over the full (N, 4H) gates, one tanh on the g slice,
        # one tanh on the new cell.  PyTorch gate order: i, f, g, o.
        sig = jax.nn.sigmoid(gates)
        i = sig[:, 0 * H:1 * H]
        f = sig[:, 1 * H:2 * H]
        o = sig[:, 3 * H:4 * H]
        g = jnp.tanh(gates[:, 2 * H:3 * H])
        c_new = f * c + i * g
        h_new = o * jnp.tanh(c_new)
        return h_new, c_new

    # ---------------- prologue: BOTH input projections up-front -------------
    # One (T*N, M) matmul per LSTM input layer, held in VMEM scratch so the
    # per-step work is only the recurrent h @ W_hh (+ stacked-layer path).
    gxd_scr[...] = (jnp.dot(xd_ref[...], wih_d_ref[...],
                            preferred_element_type=f32) + b_d_ref[...])
    gxs_scr[...] = (jnp.dot(xs_ref[...], wih_s0_ref[...],
                            preferred_element_type=f32) + b_s0_ref[...])

    # Small system weights hoisted (≈13 vregs); the big (64, 4*64) default
    # W_hh is deliberately re-loaded per unrolled step (spill control).
    whh_s0 = whh_s0_ref[...]
    w_s1 = w_s1_ref[...]
    bias_s1 = jnp.broadcast_to(b_s1_ref[...], (N, 4 * HS))   # hoisted broadcast

    def default_gates(t, h_d):
        row = pl.multiple_of(t * N, N)
        return gxd_scr[pl.ds(row, N), :] + jnp.dot(
            h_d, whh_d_ref[...], preferred_element_type=f32)

    def sys_gates0(t, h0):
        row = pl.multiple_of(t * N, N)
        return gxs_scr[pl.ds(row, N), :] + jnp.dot(
            h0, whh_s0, preferred_element_type=f32)

    def sys_layer1(h0_new, h1, c1):
        # Merged layer-1 matmul: [h0_new | h1] @ [W_ih_l1 ; W_hh_l1]
        h01 = jnp.concatenate([h0_new, h1], axis=-1)        # (N, 2*HS)
        g1 = jnp.dot(h01, w_s1, preferred_element_type=f32) + bias_s1
        return lstm_gate_step(g1, c1, HS)

    # --------------- interleaved recurrence over the common prefix ----------
    def fused_step(t, carry):
        h_d, c_d, h0, c0, h1, c1 = carry
        # Issue both independent MXU chains back-to-back so their latencies
        # overlap, then run the gate nonlinearities.
        gd = default_gates(t, h_d)
        g0 = sys_gates0(t, h0)
        h_d, c_d = lstm_gate_step(gd, c_d, HD)
        h0, c0 = lstm_gate_step(g0, c0, HS)
        h1, c1 = sys_layer1(h0, h1, c1)
        return h_d, c_d, h0, c0, h1, c1

    zd = jnp.zeros((N, HD), f32)
    zs = jnp.zeros((N, HS), f32)
    carry = lax.fori_loop(0, Tmin, fused_step, (zd, zd, zs, zs, zs, zs),
                          unroll=True)
    h_d, c_d, h0, c0, h1, c1 = carry

    # ---------------- tails (only traced if Td != Ts; empty here) -----------
    if Td > Tmin:
        def step_d(t, c_):
            hd_, cd_ = c_
            return lstm_gate_step(default_gates(t, hd_), cd_, HD)
        h_d, c_d = lax.fori_loop(Tmin, Td, step_d, (h_d, c_d), unroll=True)

    if Ts > Tmin:
        def step_s(t, c_):
            h0_, c0_, h1_, c1_ = c_
            h0_, c0_ = lstm_gate_step(sys_gates0(t, h0_), c0_, HS)
            h1_, c1_ = sys_layer1(h0_, h1_, c1_)
            return h0_, c0_, h1_, c1_
        h0, c0, h1, c1 = lax.fori_loop(Tmin, Ts, step_s, (h0, c0, h1, c1),
                                       unroll=True)

    h_s = h1   # last layer's last hidden state == xs_out[:, -1, :]

    # ---------------- Head: BN1 -> ReLU -> Linear1 -> BN2 -> ReLU ----------
    #                  -> Dropout(identity, eval) -> Linear2
    # concat(xd_out, xs_out, xa, xm) decomposed per segment: BN+ReLU are
    # per-feature, Linear1 splits into per-segment row blocks of W1.
    def bn_relu(x, bn_ref):
        return jnp.maximum(x * bn_ref[0:1, :] + bn_ref[1:2, :], 0.0)

    xa = xa_ref[...]                     # (N, MEAN_NUM)
    xm = xm_ref[...]                     # (N, 1)
    z1 = (jnp.dot(bn_relu(h_d, bn1d_ref), w1d_ref[...],
                  preferred_element_type=f32)
          + jnp.dot(bn_relu(h_s, bn1s_ref), w1s_ref[...],
                    preferred_element_type=f32)
          + jnp.dot(bn_relu(xa, bn1a_ref), w1a_ref[...],
                    preferred_element_type=f32)
          + bn_relu(xm, bn1m_ref) * w1m_ref[...]        # (N,1)*(1,NN_HID)
          + b1_ref[...])                                # (N, NN_HID)
    z2 = bn_relu(z1, bn2_ref)
    # Dropout(0.1): identity under inference semantics.
    out = jnp.sum(z2 * w2_ref[...], axis=-1, keepdims=True) + b2_ref[...]
    out_ref[...] = out.astype(out_ref.dtype)


# ---------------------------------------------------------------------------
# Host-side parameter packing (BN folding + per-segment splits) and wrapper
# ---------------------------------------------------------------------------
def _fold_bn(gamma, beta, mean, var):
    scale = gamma * jax.lax.rsqrt(var + BN_EPS)
    shift = beta - mean * scale
    return jnp.stack([scale, shift]).astype(jnp.float32)   # (2, C)


def _pack_head(head):
    bn1 = _fold_bn(*head["bn1"])                            # (2, CAT_DIM)
    o1 = H_DEFAULT
    o2 = H_DEFAULT + FEATURES
    o3 = H_DEFAULT + FEATURES + MEAN_NUM
    w1 = head["w1"]                                          # (CAT_DIM, NN_HID)
    return dict(
        bn1d=bn1[:, :o1], bn1s=bn1[:, o1:o2],
        bn1a=bn1[:, o2:o3], bn1m=bn1[:, o3:],
        w1d=w1[:o1], w1s=w1[o1:o2], w1a=w1[o2:o3], w1m=w1[o3:],
        b1=head["b1"].reshape(1, -1),
        bn2=_fold_bn(*head["bn2"]),
        w2=head["w2"].T,                                     # (1, NN_HID)
        b2=head["b2"].reshape(1, 1),
    )


def _cost_estimate(N, Td, Ts, M, HD, HS, bytes_accessed):
    flops = (2 * Td * N * M * 4 * HD            # xd input projection
             + 2 * Ts * N * M * 4 * HS          # xs layer-0 input projection
             + Td * 2 * N * HD * 4 * HD         # default recurrence
             + Ts * 2 * N * HS * 4 * HS         # system layer-0 recurrence
             + Ts * 2 * N * 2 * HS * 4 * HS     # system layer-1 merged matmul
             + 2 * N * CAT_DIM * NN_HID + 2 * N * NN_HID)
    transcendentals = (Td * N * (4 * HD + 2 * HD)
                       + Ts * N * (4 * HS + 2 * HS) * 2)
    return pl.CostEstimate(flops=int(flops),
                           transcendentals=int(transcendentals),
                           bytes_accessed=int(bytes_accessed))


def hybrid_lstm_forward(xd, xs, xa, xm, params):
    """xd:(N,Td,M)  xs:(N,Ts,M)  xa:(N,M)  xm:(N,) — batch-first like PyTorch."""
    assert len(params["lstm_system"]) == 2, "kernel is built for LAYERS == 2"
    N, Td, M = xd.shape
    Ts = xs.shape[1]
    # The per-step pl.ds(t*N, N) into the (T*N, 4H) scratch assumes sublane
    # alignment of the batch.
    assert N % 8 == 0, "batch must be a multiple of 8 (sublane alignment)"

    # time-major + flattened so each input projection is one (T*N, M) matmul
    xd_flat = jnp.transpose(xd, (1, 0, 2)).reshape(Td * N, M)
    xs_flat = jnp.transpose(xs, (1, 0, 2)).reshape(Ts * N, M)

    wih_d, whh_d, b_d = params["lstm_default"]
    (wih_s0, whh_s0, b_s0), (wih_s1, whh_s1, b_s1) = params["lstm_system"]
    # Merge layer-1 input & recurrent weights row-wise: (2*HS, 4*HS)
    w_s1 = jnp.concatenate([wih_s1, whh_s1], axis=0)
    hp = _pack_head(params["head"])
    HD = whh_d.shape[0]
    HS = whh_s0.shape[0]

    args = (xd_flat, xs_flat, xa, xm.reshape(-1, 1),
            wih_d, whh_d, b_d,
            wih_s0, whh_s0, b_s0,
            w_s1, b_s1,
            hp["bn1d"], hp["bn1s"], hp["bn1a"], hp["bn1m"],
            hp["w1d"], hp["w1s"], hp["w1a"], hp["w1m"], hp["b1"],
            hp["bn2"], hp["w2"], hp["b2"])

    bytes_accessed = sum(int(a.size) * a.dtype.itemsize for a in args) + N * 4

    out = pl.pallas_call(
        _hybrid_lstm_kernel,
        out_shape=jax.ShapeDtypeStruct((N, 1), jnp.float32),
        # no grid: single invocation; everything resident in VMEM (sub-MiB
        # footprint), no double-buffering of grid-invariant weights.
        in_specs=[pl.BlockSpec(memory_space=pltpu.MemorySpace.VMEM)
                  for _ in args],
        out_specs=pl.BlockSpec(memory_space=pltpu.MemorySpace.VMEM),
        scratch_shapes=[
            pltpu.VMEM((Td * N, 4 * HD), jnp.float32),   # gx for LSTM_default
            pltpu.VMEM((Ts * N, 4 * HS), jnp.float32),   # gx for LSTM_system L0
        ],
        cost_estimate=_cost_estimate(N, Td, Ts, M, HD, HS, bytes_accessed),
    )(*args)
    return out.reshape(-1)


# ---------------------------------------------------------------------------
# Deterministic parameter init (shapes follow nn.LSTM / nn.Linear / BatchNorm1d;
# LSTM/Linear weights stored pre-transposed as (in, out), LSTM biases pre-summed)
# ---------------------------------------------------------------------------
def init_params(key):
    ks = iter(jax.random.split(key, 16))

    def uni(k, shape, s):
        return jax.random.uniform(k, shape, minval=-s, maxval=s, dtype=jnp.float32)

    def lstm_layer(k, d_in, hidden):
        s = 1.0 / (hidden ** 0.5)
        k1, k2, k3, k4 = jax.random.split(k, 4)
        w_ih = uni(k1, (d_in, 4 * hidden), s)        # W_ih^T
        w_hh = uni(k2, (hidden, 4 * hidden), s)      # W_hh^T
        bias = (uni(k3, (4 * hidden,), s) + uni(k4, (4 * hidden,), s)).reshape(1, -1)
        return w_ih, w_hh, bias

    def linear(k, fan_in, fan_out):
        s = 1.0 / (fan_in ** 0.5)
        k1, k2 = jax.random.split(k)
        return uni(k1, (fan_in, fan_out), s), uni(k2, (fan_out,), s)

    def bn(k, c):  # randomized running stats so the BN path is actually exercised
        k1, k2, k3, k4 = jax.random.split(k, 4)
        gamma = jax.random.uniform(k1, (c,), minval=0.5, maxval=1.5, dtype=jnp.float32)
        beta = jax.random.uniform(k2, (c,), minval=-0.5, maxval=0.5, dtype=jnp.float32)
        mean = jax.random.uniform(k3, (c,), minval=-0.5, maxval=0.5, dtype=jnp.float32)
        var = jax.random.uniform(k4, (c,), minval=0.5, maxval=1.5, dtype=jnp.float32)
        return gamma, beta, mean, var

    lstm_default = lstm_layer(next(ks), MEAN_NUM, H_DEFAULT)
    lstm_system = [lstm_layer(next(ks), MEAN_NUM, FEATURES),
                   lstm_layer(next(ks), FEATURES, FEATURES)]
    assert LAYERS == 2

    w1, b1 = linear(next(ks), CAT_DIM, NN_HID)
    w2, b2 = linear(next(ks), NN_HID, 1)
    head = dict(bn1=bn(next(ks), CAT_DIM), w1=w1, b1=b1,
                bn2=bn(next(ks), NN_HID), w2=w2, b2=b2)
    return dict(lstm_default=lstm_default, lstm_system=lstm_system, head=head)


# ---------------------------------------------------------------------------
# Pure-JAX reference (mirrors the PyTorch forward; for correctness check only)
# ---------------------------------------------------------------------------
def reference_forward(xd, xs, xa, xm, params):
    def run_lstm(x_btd, layers):
        h_seq = jnp.transpose(x_btd, (1, 0, 2))
        for (w_ih, w_hh, b) in layers:
            T, N, _ = h_seq.shape
            H = w_hh.shape[0]
            h = jnp.zeros((N, H), jnp.float32)
            c = jnp.zeros((N, H), jnp.float32)
            outs = []
            for t in range(T):
                gates = h_seq[t] @ w_ih + h @ w_hh + b
                i = jax.nn.sigmoid(gates[:, :H])
                f = jax.nn.sigmoid(gates[:, H:2 * H])
                g = jnp.tanh(gates[:, 2 * H:3 * H])
                o = jax.nn.sigmoid(gates[:, 3 * H:])
                c = f * c + i * g
                h = o * jnp.tanh(c)
                outs.append(h)
            h_seq = jnp.stack(outs, 0)
        return h_seq[-1]

    xd_out = run_lstm(xd, [params["lstm_default"]])
    xs_out = run_lstm(xs, params["lstm_system"])
    tmp = jnp.concatenate([xd_out, xs_out, xa, xm.reshape(-1, 1)], axis=1)

    def bn_eval(x, p):
        g, b, m, v = p
        return (x - m) * jax.lax.rsqrt(v + BN_EPS) * g + b

    p = params["head"]
    x = jnp.maximum(bn_eval(tmp, p["bn1"]), 0.0) @ p["w1"] + p["b1"]
    x = jnp.maximum(bn_eval(x, p["bn2"]), 0.0)
    x = x @ p["w2"] + p["b2"]          # Dropout(0.1) is identity in eval mode
    return x.reshape(-1)


if __name__ == "__main__":
    key = jax.random.PRNGKey(0)
    kxd, kxs, kxa, kxm, kp = jax.random.split(key, 5)
    xd = jax.random.normal(kxd, (BATCH, DFLT_SEQ, MEAN_NUM), dtype=jnp.float32)
    xs = jax.random.normal(kxs, (BATCH, HIST_SEQ, MEAN_NUM), dtype=jnp.float32)
    xa = jax.random.normal(kxa, (BATCH, MEAN_NUM), dtype=jnp.float32)
    xm = jax.random.normal(kxm, (BATCH,), dtype=jnp.float32)
    params = init_params(kp)

    out = jax.block_until_ready(hybrid_lstm_forward(xd, xs, xa, xm, params))
    assert out.shape == (BATCH,), out.shape

    ref = jax.block_until_ready(reference_forward(xd, xs, xa, xm, params))
    assert jnp.allclose(out, ref, atol=2e-3, rtol=2e-3), (out, ref)

    print("KERNEL_OK")
</pallas_src>

<mosaic_0001>
module attributes {stable_mosaic.version = 11 : i64} {
  func.func @_hybrid_lstm_kernel(%arg0: memref<64x8xf32, #tpu.memory_space<vmem>>, %arg1: memref<64x8xf32, #tpu.memory_space<vmem>>, %arg2: memref<8x8xf32, #tpu.memory_space<vmem>>, %arg3: memref<8x1xf32, #tpu.memory_space<vmem>>, %arg4: memref<8x256xf32, #tpu.memory_space<vmem>>, %arg5: memref<64x256xf32, #tpu.memory_space<vmem>>, %arg6: memref<1x256xf32, #tpu.memory_space<vmem>>, %arg7: memref<8x128xf32, #tpu.memory_space<vmem>>, %arg8: memref<32x128xf32, #tpu.memory_space<vmem>>, %arg9: memref<1x128xf32, #tpu.memory_space<vmem>>, %arg10: memref<64x128xf32, #tpu.memory_space<vmem>>, %arg11: memref<1x128xf32, #tpu.memory_space<vmem>>, %arg12: memref<2x64xf32, #tpu.memory_space<vmem>>, %arg13: memref<2x32xf32, #tpu.memory_space<vmem>>, %arg14: memref<2x8xf32, #tpu.memory_space<vmem>>, %arg15: memref<2x1xf32, #tpu.memory_space<vmem>>, %arg16: memref<64x16xf32, #tpu.memory_space<vmem>>, %arg17: memref<32x16xf32, #tpu.memory_space<vmem>>, %arg18: memref<8x16xf32, #tpu.memory_space<vmem>>, %arg19: memref<1x16xf32, #tpu.memory_space<vmem>>, %arg20: memref<1x16xf32, #tpu.memory_space<vmem>>, %arg21: memref<2x16xf32, #tpu.memory_space<vmem>>, %arg22: memref<1x16xf32, #tpu.memory_space<vmem>>, %arg23: memref<1x1xf32, #tpu.memory_space<vmem>>, %arg24: memref<8x1xf32, #tpu.memory_space<vmem>>, %arg25: memref<64x256xf32, #tpu.memory_space<vmem>>, %arg26: memref<64x128xf32, #tpu.memory_space<vmem>>) attributes {dimension_semantics = [], scalar_prefetch = 0 : i64, scratch_operands = 2 : i64, tpu.core_type = #tpu.core_type<tc>} {
    %c0 = arith.constant 0 : index
    %c0_0 = arith.constant 0 : index
    %0 = vector.load %arg0[%c0, %c0_0] : memref<64x8xf32, #tpu.memory_space<vmem>>, vector<64x8xf32>
    %c0_1 = arith.constant 0 : index
    %c0_2 = arith.constant 0 : index
    %1 = vector.load %arg4[%c0_1, %c0_2] : memref<8x256xf32, #tpu.memory_space<vmem>>, vector<8x256xf32>
    %cst = arith.constant dense<0.000000e+00> : vector<64x256xf32>
    %2 = tpu.matmul %0, %1, %cst {dimension_numbers = #tpu.dot_dimension_numbers<[1], [0], [0], [1], [0, 0, 1, 1], [], []>} : vector<64x8xf32>, vector<8x256xf32>, vector<64x256xf32> -> vector<64x256xf32>
    %c0_3 = arith.constant 0 : index
    %c0_4 = arith.constant 0 : index
    %3 = vector.load %arg6[%c0_3, %c0_4] : memref<1x256xf32, #tpu.memory_space<vmem>>, vector<1x256xf32>
    %4 = vector.broadcast %3 : vector<1x256xf32> to vector<64x256xf32>
    %5 = arith.addf %2, %4 : vector<64x256xf32>
    %c0_5 = arith.constant 0 : index
    %c0_6 = arith.constant 0 : index
    %6 = vector.load %arg25[%c0_5, %c0_6] : memref<64x256xf32, #tpu.memory_space<vmem>>, vector<64x256xf32>
    tpu.vector_store %arg25[%c0_5, %c0_6], %5 {strides = array<i32>} : memref<64x256xf32, #tpu.memory_space<vmem>>, vector<64x256xf32>,
    %c0_7 = arith.constant 0 : index
    %c0_8 = arith.constant 0 : index
    %7 = vector.load %arg1[%c0_7, %c0_8] : memref<64x8xf32, #tpu.memory_space<vmem>>, vector<64x8xf32>
    %c0_9 = arith.constant 0 : index
    %c0_10 = arith.constant 0 : index
    %8 = vector.load %arg7[%c0_9, %c0_10] : memref<8x128xf32, #tpu.memory_space<vmem>>, vector<8x128xf32>
    %cst_11 = arith.constant dense<0.000000e+00> : vector<64x128xf32>
    %9 = tpu.matmul %7, %8, %cst_11 {dimension_numbers = #tpu.dot_dimension_numbers<[1], [0], [0], [1], [0, 0, 1, 1], [], []>} : vector<64x8xf32>, vector<8x128xf32>, vector<64x128xf32> -> vector<64x128xf32>
    %c0_12 = arith.constant 0 : index
    %c0_13 = arith.constant 0 : index
    %10 = vector.load %arg9[%c0_12, %c0_13] : memref<1x128xf32, #tpu.memory_space<vmem>>, vector<1x128xf32>
    %11 = vector.broadcast %10 : vector<1x128xf32> to vector<64x128xf32>
    %12 = arith.addf %9, %11 : vector<64x128xf32>
    %c0_14 = arith.constant 0 : index
    %c0_15 = arith.constant 0 : index
    %13 = vector.load %arg26[%c0_14, %c0_15] : memref<64x128xf32, #tpu.memory_space<vmem>>, vector<64x128xf32>
    tpu.vector_store %arg26[%c0_14, %c0_15], %12 {strides = array<i32>} : memref<64x128xf32, #tpu.memory_space<vmem>>, vector<64x128xf32>,
    %c0_16 = arith.constant 0 : index
    %c0_17 = arith.constant 0 : index
    %14 = vector.load %arg8[%c0_16, %c0_17] : memref<32x128xf32, #tpu.memory_space<vmem>>, vector<32x128xf32>
    %c0_18 = arith.constant 0 : index
    %c0_19 = arith.constant 0 : index
    %15 = vector.load %arg10[%c0_18, %c0_19] : memref<64x128xf32, #tpu.memory_space<vmem>>, vector<64x128xf32>
    %c0_20 = arith.constant 0 : index
    %c0_21 = arith.constant 0 : index
    %16 = vector.load %arg11[%c0_20, %c0_21] : memref<1x128xf32, #tpu.memory_space<vmem>>, vector<1x128xf32>
    %17 = vector.shape_cast %16 : vector<1x128xf32> to vector<1x128xf32>
    %18 = vector.broadcast %17 : vector<1x128xf32> to vector<8x128xf32>
    %cst_22 = arith.constant 0.000000e+00 : f32
    %19 = vector.broadcast %cst_22 : f32 to vector<8x64xf32>
    %cst_23 = arith.constant 0.000000e+00 : f32
    %20 = vector.broadcast %cst_23 : f32 to vector<8x32xf32>
    %c0_i32 = arith.constant 0 : i32
    %c8_i32 = arith.constant 8 : i32
    %21 = arith.muli %c0_i32, %c8_i32 : i32
    %22 = tpu.assume_multiple %21, 8 : i32
    %23 = arith.index_cast %22 : i32 to index
    %c0_24 = arith.constant 0 : index
    %24 = vector.load %arg25[%23, %c0_24] : memref<64x256xf32, #tpu.memory_space<vmem>>, vector<8x256xf32>
    %c0_25 = arith.constant 0 : index
    %c0_26 = arith.constant 0 : index
    %25 = vector.load %arg5[%c0_25, %c0_26] : memref<64x256xf32, #tpu.memory_space<vmem>>, vector<64x256xf32>
    %cst_27 = arith.constant dense<0.000000e+00> : vector<8x256xf32>
    %26 = tpu.matmul %19, %25, %cst_27 {dimension_numbers = #tpu.dot_dimension_numbers<[1], [0], [0], [1], [0, 0, 1, 1], [], []>} : vector<8x64xf32>, vector<64x256xf32>, vector<8x256xf32> -> vector<8x256xf32>
    %27 = arith.addf %24, %26 : vector<8x256xf32>
    %c8_i32_28 = arith.constant 8 : i32
    %28 = arith.muli %c0_i32, %c8_i32_28 : i32
    %29 = tpu.assume_multiple %28, 8 : i32
    %30 = arith.index_cast %29 : i32 to index
    %c0_29 = arith.constant 0 : index
    %31 = vector.load %arg26[%30, %c0_29] : memref<64x128xf32, #tpu.memory_space<vmem>>, vector<8x128xf32>
    %cst_30 = arith.constant dense<0.000000e+00> : vector<8x128xf32>
    %32 = tpu.matmul %20, %14, %cst_30 {dimension_numbers = #tpu.dot_dimension_numbers<[1], [0], [0], [1], [0, 0, 1, 1], [], []>} : vector<8x32xf32>, vector<32x128xf32>, vector<8x128xf32> -> vector<8x128xf32>
    %33 = arith.addf %31, %32 : vector<8x128xf32>
    %34 = arith.negf %27 : vector<8x256xf32>
    %35 = math.exp %34 : vector<8x256xf32>
    %cst_31 = arith.constant 1.000000e+00 : f32
    %36 = vector.broadcast %cst_31 : f32 to vector<8x256xf32>
    %37 = arith.addf %36, %35 : vector<8x256xf32>
    %38 = arith.divf %36, %37 : vector<8x256xf32>
    %39 = vector.extract_strided_slice %38 {offsets = [0, 0], sizes = [8, 64], strides = [1, 1]} : vector<8x256xf32> to vector<8x64xf32>
    %40 = vector.extract_strided_slice %38 {offsets = [0, 64], sizes = [8, 64], strides = [1, 1]} : vector<8x256xf32> to vector<8x64xf32>
    %41 = vector.extract_strided_slice %38 {offsets = [0, 192], sizes = [8, 64], strides = [1, 1]} : vector<8x256xf32> to vector<8x64xf32>
    %42 = vector.extract_strided_slice %27 {offsets = [0, 128], sizes = [8, 64], strides = [1, 1]} : vector<8x256xf32> to vector<8x64xf32>
    %43 = math.tanh %42 : vector<8x64xf32>
    %44 = arith.mulf %40, %19 : vector<8x64xf32>
    %45 = arith.mulf %39, %43 : vector<8x64xf32>
    %46 = arith.addf %44, %45 : vector<8x64xf32>
    %47 = math.tanh %46 : vector<8x64xf32>
    %48 = arith.mulf %41, %47 : vector<8x64xf32>
    %49 = arith.negf %33 : vector<8x128xf32>
    %50 = math.exp %49 : vector<8x128xf32>
    %cst_32 = arith.constant 1.000000e+00 : f32
    %51 = vector.broadcast %cst_32 : f32 to vector<8x128xf32>
    %52 = arith.addf %51, %50 : vector<8x128xf32>
    %53 = arith.divf %51, %52 : vector<8x128xf32>
    %54 = vector.extract_strided_slice %53 {offsets = [0, 0], sizes = [8, 32], strides = [1, 1]} : vector<8x128xf32> to vector<8x32xf32>
    %55 = vector.extract_strided_slice %53 {offsets = [0, 32], sizes = [8, 32], strides = [1, 1]} : vector<8x128xf32> to vector<8x32xf32>
    %56 = vector.extract_strided_slice %53 {offsets = [0, 96], sizes = [8, 32], strides = [1, 1]} : vector<8x128xf32> to vector<8x32xf32>
    %57 = vector.extract_strided_slice %33 {offsets = [0, 64], sizes = [8, 32], strides = [1, 1]} : vector<8x128xf32> to vector<8x32xf32>
    %58 = math.tanh %57 : vector<8x32xf32>
    %59 = arith.mulf %55, %20 : vector<8x32xf32>
    %60 = arith.mulf %54, %58 : vector<8x32xf32>
    %61 = arith.addf %59, %60 : vector<8x32xf32>
    %62 = math.tanh %61 : vector<8x32xf32>
    %63 = arith.mulf %56, %62 : vector<8x32xf32>
    %64 = tpu.concatenate %63, %20 in 1 : vector<8x32xf32>, vector<8x32xf32> -> vector<8x64xf32>
    %cst_33 = arith.constant dense<0.000000e+00> : vector<8x128xf32>
    %65 = tpu.matmul %64, %15, %cst_33 {dimension_numbers = #tpu.dot_dimension_numbers<[1], [0], [0], [1], [0, 0, 1, 1], [], []>} : vector<8x64xf32>, vector<64x128xf32>, vector<8x128xf32> -> vector<8x128xf32>
    %66 = arith.addf %65, %18 : vector<8x128xf32>
    %67 = arith.negf %66 : vector<8x128xf32>
    %68 = math.exp %67 : vector<8x128xf32>
    %cst_34 = arith.constant 1.000000e+00 : f32
    %69 = vector.broadcast %cst_34 : f32 to vector<8x128xf32>
    %70 = arith.addf %69, %68 : vector<8x128xf32>
    %71 = arith.divf %69, %70 : vector<8x128xf32>
    %72 = vector.extract_strided_slice %71 {offsets = [0, 0], sizes = [8, 32], strides = [1, 1]} : vector<8x128xf32> to vector<8x32xf32>
    %73 = vector.extract_strided_slice %71 {offsets = [0, 32], sizes = [8, 32], strides = [1, 1]} : vector<8x128xf32> to vector<8x32xf32>
    %74 = vector.extract_strided_slice %71 {offsets = [0, 96], sizes = [8, 32], strides = [1, 1]} : vector<8x128xf32> to vector<8x32xf32>
    %75 = vector.extract_strided_slice %66 {offsets = [0, 64], sizes = [8, 32], strides = [1, 1]} : vector<8x128xf32> to vector<8x32xf32>
    %76 = math.tanh %75 : vector<8x32xf32>
    %77 = arith.mulf %73, %20 : vector<8x32xf32>
    %78 = arith.mulf %72, %76 : vector<8x32xf32>
    %79 = arith.addf %77, %78 : vector<8x32xf32>
    %80 = math.tanh %79 : vector<8x32xf32>
    %81 = arith.mulf %74, %80 : vector<8x32xf32>
    %c1_i32 = arith.constant 1 : i32
    %c8_i32_35 = arith.constant 8 : i32
    %82 = arith.muli %c1_i32, %c8_i32_35 : i32
    %83 = tpu.assume_multiple %82, 8 : i32
    %84 = arith.index_cast %83 : i32 to index
    %c0_36 = arith.constant 0 : index
    %85 = vector.load %arg25[%84, %c0_36] : memref<64x256xf32, #tpu.memory_space<vmem>>, vector<8x256xf32>
    %c0_37 = arith.constant 0 : index
    %c0_38 = arith.constant 0 : index
    %86 = vector.load %arg5[%c0_37, %c0_38] : memref<64x256xf32, #tpu.memory_space<vmem>>, vector<64x256xf32>
    %cst_39 = arith.constant dense<0.000000e+00> : vector<8x256xf32>
    %87 = tpu.matmul %48, %86, %cst_39 {dimension_numbers = #tpu.dot_dimension_numbers<[1], [0], [0], [1], [0, 0, 1, 1], [], []>} : vector<8x64xf32>, vector<64x256xf32>, vector<8x256xf32> -> vector<8x256xf32>
    %88 = arith.addf %85, %87 : vector<8x256xf32>
    %c8_i32_40 = arith.constant 8 : i32
    %89 = arith.muli %c1_i32, %c8_i32_40 : i32
    %90 = tpu.assume_multiple %89, 8 : i32
    %91 = arith.index_cast %90 : i32 to index
    %c0_41 = arith.constant 0 : index
    %92 = vector.load %arg26[%91, %c0_41] : memref<64x128xf32, #tpu.memory_space<vmem>>, vector<8x128xf32>
    %cst_42 = arith.constant dense<0.000000e+00> : vector<8x128xf32>
    %93 = tpu.matmul %63, %14, %cst_42 {dimension_numbers = #tpu.dot_dimension_numbers<[1], [0], [0], [1], [0, 0, 1, 1], [], []>} : vector<8x32xf32>, vector<32x128xf32>, vector<8x128xf32> -> vector<8x128xf32>
    %94 = arith.addf %92, %93 : vector<8x128xf32>
    %95 = arith.negf %88 : vector<8x256xf32>
    %96 = math.exp %95 : vector<8x256xf32>
    %cst_43 = arith.constant 1.000000e+00 : f32
    %97 = vector.broadcast %cst_43 : f32 to vector<8x256xf32>
    %98 = arith.addf %97, %96 : vector<8x256xf32>
    %99 = arith.divf %97, %98 : vector<8x256xf32>
    %100 = vector.extract_strided_slice %99 {offsets = [0, 0], sizes = [8, 64], strides = [1, 1]} : vector<8x256xf32> to vector<8x64xf32>
    %101 = vector.extract_strided_slice %99 {offsets = [0, 64], sizes = [8, 64], strides = [1, 1]} : vector<8x256xf32> to vector<8x64xf32>
    %102 = vector.extract_strided_slice %99 {offsets = [0, 192], sizes = [8, 64], strides = [1, 1]} : vector<8x256xf32> to vector<8x64xf32>
    %103 = vector.extract_strided_slice %88 {offsets = [0, 128], sizes = [8, 64], strides = [1, 1]} : vector<8x256xf32> to vector<8x64xf32>
    %104 = math.tanh %103 : vector<8x64xf32>
    %105 = arith.mulf %101, %46 : vector<8x64xf32>
    %106 = arith.mulf %100, %104 : vector<8x64xf32>
    %107 = arith.addf %105, %106 : vector<8x64xf32>
    %108 = math.tanh %107 : vector<8x64xf32>
    %109 = arith.mulf %102, %108 : vector<8x64xf32>
    %110 = arith.negf %94 : vector<8x128xf32>
    %111 = math.exp %110 : vector<8x128xf32>
    %cst_44 = arith.constant 1.000000e+00 : f32
    %112 = vector.broadcast %cst_44 : f32 to vector<8x128xf32>
    %113 = arith.addf %112, %111 : vector<8x128xf32>
    %114 = arith.divf %112, %113 : vector<8x128xf32>
    %115 = vector.extract_strided_slice %114 {offsets = [0, 0], sizes = [8, 32], strides = [1, 1]} : vector<8x128xf32> to vector<8x32xf32>
    %116 = vector.extract_strided_slice %114 {offsets = [0, 32], sizes = [8, 32], strides = [1, 1]} : vector<8x128xf32> to vector<8x32xf32>
    %117 = vector.extract_strided_slice %114 {offsets = [0, 96], sizes = [8, 32], strides = [1, 1]} : vector<8x128xf32> to vector<8x32xf32>
    %118 = vector.extract_strided_slice %94 {offsets = [0, 64], sizes = [8, 32], strides = [1, 1]} : vector<8x128xf32> to vector<8x32xf32>
    %119 = math.tanh %118 : vector<8x32xf32>
    %120 = arith.mulf %116, %61 : vector<8x32xf32>
    %121 = arith.mulf %115, %119 : vector<8x32xf32>
    %122 = arith.addf %120, %121 : vector<8x32xf32>
    %123 = math.tanh %122 : vector<8x32xf32>
    %124 = arith.mulf %117, %123 : vector<8x32xf32>
    %125 = tpu.concatenate %124, %81 in 1 : vector<8x32xf32>, vector<8x32xf32> -> vector<8x64xf32>
    %cst_45 = arith.constant dense<0.000000e+00> : vector<8x128xf32>
    %126 = tpu.matmul %125, %15, %cst_45 {dimension_numbers = #tpu.dot_dimension_numbers<[1], [0], [0], [1], [0, 0, 1, 1], [], []>} : vector<8x64xf32>, vector<64x128xf32>, vector<8x128xf32> -> vector<8x128xf32>
    %127 = arith.addf %126, %18 : vector<8x128xf32>
    %128 = arith.negf %127 : vector<8x128xf32>
    %129 = math.exp %128 : vector<8x128xf32>
    %cst_46 = arith.constant 1.000000e+00 : f32
    %130 = vector.broadcast %cst_46 : f32 to vector<8x128xf32>
    %131 = arith.addf %130, %129 : vector<8x128xf32>
    %132 = arith.divf %130, %131 : vector<8x128xf32>
    %133 = vector.extract_strided_slice %132 {offsets = [0, 0], sizes = [8, 32], strides = [1, 1]} : vector<8x128xf32> to vector<8x32xf32>
    %134 = vector.extract_strided_slice %132 {offsets = [0, 32], sizes = [8, 32], strides = [1, 1]} : vector<8x128xf32> to vector<8x32xf32>
    %135 = vector.extract_strided_slice %132 {offsets = [0, 96], sizes = [8, 32], strides = [1, 1]} : vector<8x128xf32> to vector<8x32xf32>
    %136 = vector.extract_strided_slice %127 {offsets = [0, 64], sizes = [8, 32], strides = [1, 1]} : vector<8x128xf32> to vector<8x32xf32>
    %137 = math.tanh %136 : vector<8x32xf32>
    %138 = arith.mulf %134, %79 : vector<8x32xf32>
    %139 = arith.mulf %133, %137 : vector<8x32xf32>
    %140 = arith.addf %138, %139 : vector<8x32xf32>
    %141 = math.tanh %140 : vector<8x32xf32>
    %142 = arith.mulf %135, %141 : vector<8x32xf32>
    %c2_i32 = arith.constant 2 : i32
    %c8_i32_47 = arith.constant 8 : i32
    %143 = arith.muli %c2_i32, %c8_i32_47 : i32
    %144 = tpu.assume_multiple %143, 8 : i32
    %145 = arith.index_cast %144 : i32 to index
    %c0_48 = arith.constant 0 : index
    %146 = vector.load %arg25[%145, %c0_48] : memref<64x256xf32, #tpu.memory_space<vmem>>, vector<8x256xf32>
    %c0_49 = arith.constant 0 : index
    %c0_50 = arith.constant 0 : index
    %147 = vector.load %arg5[%c0_49, %c0_50] : memref<64x256xf32, #tpu.memory_space<vmem>>, vector<64x256xf32>
    %cst_51 = arith.constant dense<0.000000e+00> : vector<8x256xf32>
    %148 = tpu.matmul %109, %147, %cst_51 {dimension_numbers = #tpu.dot_dimension_numbers<[1], [0], [0], [1], [0, 0, 1, 1], [], []>} : vector<8x64xf32>, vector<64x256xf32>, vector<8x256xf32> -> vector<8x256xf32>
    %149 = arith.addf %146, %148 : vector<8x256xf32>
    %c8_i32_52 = arith.constant 8 : i32
    %150 = arith.muli %c2_i32, %c8_i32_52 : i32
    %151 = tpu.assume_multiple %150, 8 : i32
    %152 = arith.index_cast %151 : i32 to index
    %c0_53 = arith.constant 0 : index
    %153 = vector.load %arg26[%152, %c0_53] : memref<64x128xf32, #tpu.memory_space<vmem>>, vector<8x128xf32>
    %cst_54 = arith.constant dense<0.000000e+00> : vector<8x128xf32>
    %154 = tpu.matmul %124, %14, %cst_54 {dimension_numbers = #tpu.dot_dimension_numbers<[1], [0], [0], [1], [0, 0, 1, 1], [], []>} : vector<8x32xf32>, vector<32x128xf32>, vector<8x128xf32> -> vector<8x128xf32>
    %155 = arith.addf %153, %154 : vector<8x128xf32>
    %156 = arith.negf %149 : vector<8x256xf32>
    %157 = math.exp %156 : vector<8x256xf32>
    %cst_55 = arith.constant 1.000000e+00 : f32
    %158 = vector.broadcast %cst_55 : f32 to vector<8x256xf32>
    %159 = arith.addf %158, %157 : vector<8x256xf32>
    %160 = arith.divf %158, %159 : vector<8x256xf32>
    %161 = vector.extract_strided_slice %160 {offsets = [0, 0], sizes = [8, 64], strides = [1, 1]} : vector<8x256xf32> to vector<8x64xf32>
    %162 = vector.extract_strided_slice %160 {offsets = [0, 64], sizes = [8, 64], strides = [1, 1]} : vector<8x256xf32> to vector<8x64xf32>
    %163 = vector.extract_strided_slice %160 {offsets = [0, 192], sizes = [8, 64], strides = [1, 1]} : vector<8x256xf32> to vector<8x64xf32>
    %164 = vector.extract_strided_slice %149 {offsets = [0, 128], sizes = [8, 64], strides = [1, 1]} : vector<8x256xf32> to vector<8x64xf32>
    %165 = math.tanh %164 : vector<8x64xf32>
    %166 = arith.mulf %162, %107 : vector<8x64xf32>
    %167 = arith.mulf %161, %165 : vector<8x64xf32>
    %168 = arith.addf %166, %167 : vector<8x64xf32>
    %169 = math.tanh %168 : vector<8x64xf32>
    %170 = arith.mulf %163, %169 : vector<8x64xf32>
    %171 = arith.negf %155 : vector<8x128xf32>
    %172 = math.exp %171 : vector<8x128xf32>
    %cst_56 = arith.constant 1.000000e+00 : f32
    %173 = vector.broadcast %cst_56 : f32 to vector<8x128xf32>
    %174 = arith.addf %173, %172 : vector<8x128xf32>
    %175 = arith.divf %173, %174 : vector<8x128xf32>
    %176 = vector.extract_strided_slice %175 {offsets = [0, 0], sizes = [8, 32], strides = [1, 1]} : vector<8x128xf32> to vector<8x32xf32>
    %177 = vector.extract_strided_slice %175 {offsets = [0, 32], sizes = [8, 32], strides = [1, 1]} : vector<8x128xf32> to vector<8x32xf32>
    %178 = vector.extract_strided_slice %175 {offsets = [0, 96], sizes = [8, 32], strides = [1, 1]} : vector<8x128xf32> to vector<8x32xf32>
    %179 = vector.extract_strided_slice %155 {offsets = [0, 64], sizes = [8, 32], strides = [1, 1]} : vector<8x128xf32> to vector<8x32xf32>
    %180 = math.tanh %179 : vector<8x32xf32>
    %181 = arith.mulf %177, %122 : vector<8x32xf32>
    %182 = arith.mulf %176, %180 : vector<8x32xf32>
    %183 = arith.addf %181, %182 : vector<8x32xf32>
    %184 = math.tanh %183 : vector<8x32xf32>
    %185 = arith.mulf %178, %184 : vector<8x32xf32>
    %186 = tpu.concatenate %185, %142 in 1 : vector<8x32xf32>, vector<8x32xf32> -> vector<8x64xf32>
    %cst_57 = arith.constant dense<0.000000e+00> : vector<8x128xf32>
    %187 = tpu.matmul %186, %15, %cst_57 {dimension_numbers = #tpu.dot_dimension_numbers<[1], [0], [0], [1], [0, 0, 1, 1], [], []>} : vector<8x64xf32>, vector<64x128xf32>, vector<8x128xf32> -> vector<8x128xf32>
    %188 = arith.addf %187, %18 : vector<8x128xf32>
    %189 = arith.negf %188 : vector<8x128xf32>
    %190 = math.exp %189 : vector<8x128xf32>
    %cst_58 = arith.constant 1.000000e+00 : f32
    %191 = vector.broadcast %cst_58 : f32 to vector<8x128xf32>
    %192 = arith.addf %191, %190 : vector<8x128xf32>
    %193 = arith.divf %191, %192 : vector<8x128xf32>
    %194 = vector.extract_strided_slice %193 {offsets = [0, 0], sizes = [8, 32], strides = [1, 1]} : vector<8x128xf32> to vector<8x32xf32>
    %195 = vector.extract_strided_slice %193 {offsets = [0, 32], sizes = [8, 32], strides = [1, 1]} : vector<8x128xf32> to vector<8x32xf32>
    %196 = vector.extract_strided_slice %193 {offsets = [0, 96], sizes = [8, 32], strides = [1, 1]} : vector<8x128xf32> to vector<8x32xf32>
    %197 = vector.extract_strided_slice %188 {offsets = [0, 64], sizes = [8, 32], strides = [1, 1]} : vector<8x128xf32> to vector<8x32xf32>
    %198 = math.tanh %197 : vector<8x32xf32>
    %199 = arith.mulf %195, %140 : vector<8x32xf32>
    %200 = arith.mulf %194, %198 : vector<8x32xf32>
    %201 = arith.addf %199, %200 : vector<8x32xf32>
    %202 = math.tanh %201 : vector<8x32xf32>
    %203 = arith.mulf %196, %202 : vector<8x32xf32>
    %c3_i32 = arith.constant 3 : i32
    %c8_i32_59 = arith.constant 8 : i32
    %204 = arith.muli %c3_i32, %c8_i32_59 : i32
    %205 = tpu.assume_multiple %204, 8 : i32
    %206 = arith.index_cast %205 : i32 to index
    %c0_60 = arith.constant 0 : index
    %207 = vector.load %arg25[%206, %c0_60] : memref<64x256xf32, #tpu.memory_space<vmem>>, vector<8x256xf32>
    %c0_61 = arith.constant 0 : index
    %c0_62 = arith.constant 0 : index
    %208 = vector.load %arg5[%c0_61, %c0_62] : memref<64x256xf32, #tpu.memory_space<vmem>>, vector<64x256xf32>
    %cst_63 = arith.constant dense<0.000000e+00> : vector<8x256xf32>
    %209 = tpu.matmul %170, %208, %cst_63 {dimension_numbers = #tpu.dot_dimension_numbers<[1], [0], [0], [1], [0, 0, 1, 1], [], []>} : vector<8x64xf32>, vector<64x256xf32>, vector<8x256xf32> -> vector<8x256xf32>
    %210 = arith.addf %207, %209 : vector<8x256xf32>
    %c8_i32_64 = arith.constant 8 : i32
    %211 = arith.muli %c3_i32, %c8_i32_64 : i32
    %212 = tpu.assume_multiple %211, 8 : i32
    %213 = arith.index_cast %212 : i32 to index
    %c0_65 = arith.constant 0 : index
    %214 = vector.load %arg26[%213, %c0_65] : memref<64x128xf32, #tpu.memory_space<vmem>>, vector<8x128xf32>
    %cst_66 = arith.constant dense<0.000000e+00> : vector<8x128xf32>
    %215 = tpu.matmul %185, %14, %cst_66 {dimension_numbers = #tpu.dot_dimension_numbers<[1], [0], [0], [1], [0, 0, 1, 1], [], []>} : vector<8x32xf32>, vector<32x128xf32>, vector<8x128xf32> -> vector<8x128xf32>
    %216 = arith.addf %214, %215 : vector<8x128xf32>
    %217 = arith.negf %210 : vector<8x256xf32>
    %218 = math.exp %217 : vector<8x256xf32>
    %cst_67 = arith.constant 1.000000e+00 : f32
    %219 = vector.broadcast %cst_67 : f32 to vector<8x256xf32>
    %220 = arith.addf %219, %218 : vector<8x256xf32>
    %221 = arith.divf %219, %220 : vector<8x256xf32>
    %222 = vector.extract_strided_slice %221 {offsets = [0, 0], sizes = [8, 64], strides = [1, 1]} : vector<8x256xf32> to vector<8x64xf32>
    %223 = vector.extract_strided_slice %221 {offsets = [0, 64], sizes = [8, 64], strides = [1, 1]} : vector<8x256xf32> to vector<8x64xf32>
    %224 = vector.extract_strided_slice %221 {offsets = [0, 192], sizes = [8, 64], strides = [1, 1]} : vector<8x256xf32> to vector<8x64xf32>
    %225 = vector.extract_strided_slice %210 {offsets = [0, 128], sizes = [8, 64], strides = [1, 1]} : vector<8x256xf32> to vector<8x64xf32>
    %226 = math.tanh %225 : vector<8x64xf32>
    %227 = arith.mulf %223, %168 : vector<8x64xf32>
    %228 = arith.mulf %222, %226 : vector<8x64xf32>
    %229 = arith.addf %227, %228 : vector<8x64xf32>
    %230 = math.tanh %229 : vector<8x64xf32>
    %231 = arith.mulf %224, %230 : vector<8x64xf32>
    %232 = arith.negf %216 : vector<8x128xf32>
    %233 = math.exp %232 : vector<8x128xf32>
    %cst_68 = arith.constant 1.000000e+00 : f32
    %234 = vector.broadcast %cst_68 : f32 to vector<8x128xf32>
    %235 = arith.addf %234, %233 : vector<8x128xf32>
    %236 = arith.divf %234, %235 : vector<8x128xf32>
    %237 = vector.extract_strided_slice %236 {offsets = [0, 0], sizes = [8, 32], strides = [1, 1]} : vector<8x128xf32> to vector<8x32xf32>
    %238 = vector.extract_strided_slice %236 {offsets = [0, 32], sizes = [8, 32], strides = [1, 1]} : vector<8x128xf32> to vector<8x32xf32>
    %239 = vector.extract_strided_slice %236 {offsets = [0, 96], sizes = [8, 32], strides = [1, 1]} : vector<8x128xf32> to vector<8x32xf32>
    %240 = vector.extract_strided_slice %216 {offsets = [0, 64], sizes = [8, 32], strides = [1, 1]} : vector<8x128xf32> to vector<8x32xf32>
    %241 = math.tanh %240 : vector<8x32xf32>
    %242 = arith.mulf %238, %183 : vector<8x32xf32>
    %243 = arith.mulf %237, %241 : vector<8x32xf32>
    %244 = arith.addf %242, %243 : vector<8x32xf32>
    %245 = math.tanh %244 : vector<8x32xf32>
    %246 = arith.mulf %239, %245 : vector<8x32xf32>
    %247 = tpu.concatenate %246, %203 in 1 : vector<8x32xf32>, vector<8x32xf32> -> vector<8x64xf32>
    %cst_69 = arith.constant dense<0.000000e+00> : vector<8x128xf32>
    %248 = tpu.matmul %247, %15, %cst_69 {dimension_numbers = #tpu.dot_dimension_numbers<[1], [0], [0], [1], [0, 0, 1, 1], [], []>} : vector<8x64xf32>, vector<64x128xf32>, vector<8x128xf32> -> vector<8x128xf32>
    %249 = arith.addf %248, %18 : vector<8x128xf32>
    %250 = arith.negf %249 : vector<8x128xf32>
    %251 = math.exp %250 : vector<8x128xf32>
    %cst_70 = arith.constant 1.000000e+00 : f32
    %252 = vector.broadcast %cst_70 : f32 to vector<8x128xf32>
    %253 = arith.addf %252, %251 : vector<8x128xf32>
    %254 = arith.divf %252, %253 : vector<8x128xf32>
    %255 = vector.extract_strided_slice %254 {offsets = [0, 0], sizes = [8, 32], strides = [1, 1]} : vector<8x128xf32> to vector<8x32xf32>
    %256 = vector.extract_strided_slice %254 {offsets = [0, 32], sizes = [8, 32], strides = [1, 1]} : vector<8x128xf32> to vector<8x32xf32>
    %257 = vector.extract_strided_slice %254 {offsets = [0, 96], sizes = [8, 32], strides = [1, 1]} : vector<8x128xf32> to vector<8x32xf32>
    %258 = vector.extract_strided_slice %249 {offsets = [0, 64], sizes = [8, 32], strides = [1, 1]} : vector<8x128xf32> to vector<8x32xf32>
    %259 = math.tanh %258 : vector<8x32xf32>
    %260 = arith.mulf %256, %201 : vector<8x32xf32>
    %261 = arith.mulf %255, %259 : vector<8x32xf32>
    %262 = arith.addf %260, %261 : vector<8x32xf32>
    %263 = math.tanh %262 : vector<8x32xf32>
    %264 = arith.mulf %257, %263 : vector<8x32xf32>
    %c4_i32 = arith.constant 4 : i32
    %c8_i32_71 = arith.constant 8 : i32
    %265 = arith.muli %c4_i32, %c8_i32_71 : i32
    %266 = tpu.assume_multiple %265, 8 : i32
    %267 = arith.index_cast %266 : i32 to index
    %c0_72 = arith.constant 0 : index
    %268 = vector.load %arg25[%267, %c0_72] : memref<64x256xf32, #tpu.memory_space<vmem>>, vector<8x256xf32>
    %c0_73 = arith.constant 0 : index
    %c0_74 = arith.constant 0 : index
    %269 = vector.load %arg5[%c0_73, %c0_74] : memref<64x256xf32, #tpu.memory_space<vmem>>, vector<64x256xf32>
    %cst_75 = arith.constant dense<0.000000e+00> : vector<8x256xf32>
    %270 = tpu.matmul %231, %269, %cst_75 {dimension_numbers = #tpu.dot_dimension_numbers<[1], [0], [0], [1], [0, 0, 1, 1], [], []>} : vector<8x64xf32>, vector<64x256xf32>, vector<8x256xf32> -> vector<8x256xf32>
    %271 = arith.addf %268, %270 : vector<8x256xf32>
    %c8_i32_76 = arith.constant 8 : i32
    %272 = arith.muli %c4_i32, %c8_i32_76 : i32
    %273 = tpu.assume_multiple %272, 8 : i32
    %274 = arith.index_cast %273 : i32 to index
    %c0_77 = arith.constant 0 : index
    %275 = vector.load %arg26[%274, %c0_77] : memref<64x128xf32, #tpu.memory_space<vmem>>, vector<8x128xf32>
    %cst_78 = arith.constant dense<0.000000e+00> : vector<8x128xf32>
    %276 = tpu.matmul %246, %14, %cst_78 {dimension_numbers = #tpu.dot_dimension_numbers<[1], [0], [0], [1], [0, 0, 1, 1], [], []>} : vector<8x32xf32>, vector<32x128xf32>, vector<8x128xf32> -> vector<8x128xf32>
    %277 = arith.addf %275, %276 : vector<8x128xf32>
    %278 = arith.negf %271 : vector<8x256xf32>
    %279 = math.exp %278 : vector<8x256xf32>
    %cst_79 = arith.constant 1.000000e+00 : f32
    %280 = vector.broadcast %cst_79 : f32 to vector<8x256xf32>
    %281 = arith.addf %280, %279 : vector<8x256xf32>
    %282 = arith.divf %280, %281 : vector<8x256xf32>
    %283 = vector.extract_strided_slice %282 {offsets = [0, 0], sizes = [8, 64], strides = [1, 1]} : vector<8x256xf32> to vector<8x64xf32>
    %284 = vector.extract_strided_slice %282 {offsets = [0, 64], sizes = [8, 64], strides = [1, 1]} : vector<8x256xf32> to vector<8x64xf32>
    %285 = vector.extract_strided_slice %282 {offsets = [0, 192], sizes = [8, 64], strides = [1, 1]} : vector<8x256xf32> to vector<8x64xf32>
    %286 = vector.extract_strided_slice %271 {offsets = [0, 128], sizes = [8, 64], strides = [1, 1]} : vector<8x256xf32> to vector<8x64xf32>
    %287 = math.tanh %286 : vector<8x64xf32>
    %288 = arith.mulf %284, %229 : vector<8x64xf32>
    %289 = arith.mulf %283, %287 : vector<8x64xf32>
    %290 = arith.addf %288, %289 : vector<8x64xf32>
    %291 = math.tanh %290 : vector<8x64xf32>
    %292 = arith.mulf %285, %291 : vector<8x64xf32>
    %293 = arith.negf %277 : vector<8x128xf32>
    %294 = math.exp %293 : vector<8x128xf32>
    %cst_80 = arith.constant 1.000000e+00 : f32
    %295 = vector.broadcast %cst_80 : f32 to vector<8x128xf32>
    %296 = arith.addf %295, %294 : vector<8x128xf32>
    %297 = arith.divf %295, %296 : vector<8x128xf32>
    %298 = vector.extract_strided_slice %297 {offsets = [0, 0], sizes = [8, 32], strides = [1, 1]} : vector<8x128xf32> to vector<8x32xf32>
    %299 = vector.extract_strided_slice %297 {offsets = [0, 32], sizes = [8, 32], strides = [1, 1]} : vector<8x128xf32> to vector<8x32xf32>
    %300 = vector.extract_strided_slice %297 {offsets = [0, 96], sizes = [8, 32], strides = [1, 1]} : vector<8x128xf32> to vector<8x32xf32>
    %301 = vector.extract_strided_slice %277 {offsets = [0, 64], sizes = [8, 32], strides = [1, 1]} : vector<8x128xf32> to vector<8x32xf32>
    %302 = math.tanh %301 : vector<8x32xf32>
    %303 = arith.mulf %299, %244 : vector<8x32xf32>
    %304 = arith.mulf %298, %302 : vector<8x32xf32>
    %305 = arith.addf %303, %304 : vector<8x32xf32>
    %306 = math.tanh %305 : vector<8x32xf32>
    %307 = arith.mulf %300, %306 : vector<8x32xf32>
    %308 = tpu.concatenate %307, %264 in 1 : vector<8x32xf32>, vector<8x32xf32> -> vector<8x64xf32>
    %cst_81 = arith.constant dense<0.000000e+00> : vector<8x128xf32>
    %309 = tpu.matmul %308, %15, %cst_81 {dimension_numbers = #tpu.dot_dimension_numbers<[1], [0], [0], [1], [0, 0, 1, 1], [], []>} : vector<8x64xf32>, vector<64x128xf32>, vector<8x128xf32> -> vector<8x128xf32>
    %310 = arith.addf %309, %18 : vector<8x128xf32>
    %311 = arith.negf %310 : vector<8x128xf32>
    %312 = math.exp %311 : vector<8x128xf32>
    %cst_82 = arith.constant 1.000000e+00 : f32
    %313 = vector.broadcast %cst_82 : f32 to vector<8x128xf32>
    %314 = arith.addf %313, %312 : vector<8x128xf32>
    %315 = arith.divf %313, %314 : vector<8x128xf32>
    %316 = vector.extract_strided_slice %315 {offsets = [0, 0], sizes = [8, 32], strides = [1, 1]} : vector<8x128xf32> to vector<8x32xf32>
    %317 = vector.extract_strided_slice %315 {offsets = [0, 32], sizes = [8, 32], strides = [1, 1]} : vector<8x128xf32> to vector<8x32xf32>
    %318 = vector.extract_strided_slice %315 {offsets = [0, 96], sizes = [8, 32], strides = [1, 1]} : vector<8x128xf32> to vector<8x32xf32>
    %319 = vector.extract_strided_slice %310 {offsets = [0, 64], sizes = [8, 32], strides = [1, 1]} : vector<8x128xf32> to vector<8x32xf32>
    %320 = math.tanh %319 : vector<8x32xf32>
    %321 = arith.mulf %317, %262 : vector<8x32xf32>
    %322 = arith.mulf %316, %320 : vector<8x32xf32>
    %323 = arith.addf %321, %322 : vector<8x32xf32>
    %324 = math.tanh %323 : vector<8x32xf32>
    %325 = arith.mulf %318, %324 : vector<8x32xf32>
    %c5_i32 = arith.constant 5 : i32
    %c8_i32_83 = arith.constant 8 : i32
    %326 = arith.muli %c5_i32, %c8_i32_83 : i32
    %327 = tpu.assume_multiple %326, 8 : i32
    %328 = arith.index_cast %327 : i32 to index
    %c0_84 = arith.constant 0 : index
    %329 = vector.load %arg25[%328, %c0_84] : memref<64x256xf32, #tpu.memory_space<vmem>>, vector<8x256xf32>
    %c0_85 = arith.constant 0 : index
    %c0_86 = arith.constant 0 : index
    %330 = vector.load %arg5[%c0_85, %c0_86] : memref<64x256xf32, #tpu.memory_space<vmem>>, vector<64x256xf32>
    %cst_87 = arith.constant dense<0.000000e+00> : vector<8x256xf32>
    %331 = tpu.matmul %292, %330, %cst_87 {dimension_numbers = #tpu.dot_dimension_numbers<[1], [0], [0], [1], [0, 0, 1, 1], [], []>} : vector<8x64xf32>, vector<64x256xf32>, vector<8x256xf32> -> vector<8x256xf32>
    %332 = arith.addf %329, %331 : vector<8x256xf32>
    %c8_i32_88 = arith.constant 8 : i32
    %333 = arith.muli %c5_i32, %c8_i32_88 : i32
    %334 = tpu.assume_multiple %333, 8 : i32
    %335 = arith.index_cast %334 : i32 to index
    %c0_89 = arith.constant 0 : index
    %336 = vector.load %arg26[%335, %c0_89] : memref<64x128xf32, #tpu.memory_space<vmem>>, vector<8x128xf32>
    %cst_90 = arith.constant dense<0.000000e+00> : vector<8x128xf32>
    %337 = tpu.matmul %307, %14, %cst_90 {dimension_numbers = #tpu.dot_dimension_numbers<[1], [0], [0], [1], [0, 0, 1, 1], [], []>} : vector<8x32xf32>, vector<32x128xf32>, vector<8x128xf32> -> vector<8x128xf32>
    %338 = arith.addf %336, %337 : vector<8x128xf32>
    %339 = arith.negf %332 : vector<8x256xf32>
    %340 = math.exp %339 : vector<8x256xf32>
    %cst_91 = arith.constant 1.000000e+00 : f32
    %341 = vector.broadcast %cst_91 : f32 to vector<8x256xf32>
    %342 = arith.addf %341, %340 : vector<8x256xf32>
    %343 = arith.divf %341, %342 : vector<8x256xf32>
    %344 = vector.extract_strided_slice %343 {offsets = [0, 0], sizes = [8, 64], strides = [1, 1]} : vector<8x256xf32> to vector<8x64xf32>
    %345 = vector.extract_strided_slice %343 {offsets = [0, 64], sizes = [8, 64], strides = [1, 1]} : vector<8x256xf32> to vector<8x64xf32>
    %346 = vector.extract_strided_slice %343 {offsets = [0, 192], sizes = [8, 64], strides = [1, 1]} : vector<8x256xf32> to vector<8x64xf32>
    %347 = vector.extract_strided_slice %332 {offsets = [0, 128], sizes = [8, 64], strides = [1, 1]} : vector<8x256xf32> to vector<8x64xf32>
    %348 = math.tanh %347 : vector<8x64xf32>
    %349 = arith.mulf %345, %290 : vector<8x64xf32>
    %350 = arith.mulf %344, %348 : vector<8x64xf32>
    %351 = arith.addf %349, %350 : vector<8x64xf32>
    %352 = math.tanh %351 : vector<8x64xf32>
    %353 = arith.mulf %346, %352 : vector<8x64xf32>
    %354 = arith.negf %338 : vector<8x128xf32>
    %355 = math.exp %354 : vector<8x128xf32>
    %cst_92 = arith.constant 1.000000e+00 : f32
    %356 = vector.broadcast %cst_92 : f32 to vector<8x128xf32>
    %357 = arith.addf %356, %355 : vector<8x128xf32>
    %358 = arith.divf %356, %357 : vector<8x128xf32>
    %359 = vector.extract_strided_slice %358 {offsets = [0, 0], sizes = [8, 32], strides = [1, 1]} : vector<8x128xf32> to vector<8x32xf32>
    %360 = vector.extract_strided_slice %358 {offsets = [0, 32], sizes = [8, 32], strides = [1, 1]} : vector<8x128xf32> to vector<8x32xf32>
    %361 = vector.extract_strided_slice %358 {offsets = [0, 96], sizes = [8, 32], strides = [1, 1]} : vector<8x128xf32> to vector<8x32xf32>
    %362 = vector.extract_strided_slice %338 {offsets = [0, 64], sizes = [8, 32], strides = [1, 1]} : vector<8x128xf32> to vector<8x32xf32>
    %363 = math.tanh %362 : vector<8x32xf32>
    %364 = arith.mulf %360, %305 : vector<8x32xf32>
    %365 = arith.mulf %359, %363 : vector<8x32xf32>
    %366 = arith.addf %364, %365 : vector<8x32xf32>
    %367 = math.tanh %366 : vector<8x32xf32>
    %368 = arith.mulf %361, %367 : vector<8x32xf32>
    %369 = tpu.concatenate %368, %325 in 1 : vector<8x32xf32>, vector<8x32xf32> -> vector<8x64xf32>
    %cst_93 = arith.constant dense<0.000000e+00> : vector<8x128xf32>
    %370 = tpu.matmul %369, %15, %cst_93 {dimension_numbers = #tpu.dot_dimension_numbers<[1], [0], [0], [1], [0, 0, 1, 1], [], []>} : vector<8x64xf32>, vector<64x128xf32>, vector<8x128xf32> -> vector<8x128xf32>
    %371 = arith.addf %370, %18 : vector<8x128xf32>
    %372 = arith.negf %371 : vector<8x128xf32>
    %373 = math.exp %372 : vector<8x128xf32>
    %cst_94 = arith.constant 1.000000e+00 : f32
    %374 = vector.broadcast %cst_94 : f32 to vector<8x128xf32>
    %375 = arith.addf %374, %373 : vector<8x128xf32>
    %376 = arith.divf %374, %375 : vector<8x128xf32>
    %377 = vector.extract_strided_slice %376 {offsets = [0, 0], sizes = [8, 32], strides = [1, 1]} : vector<8x128xf32> to vector<8x32xf32>
    %378 = vector.extract_strided_slice %376 {offsets = [0, 32], sizes = [8, 32], strides = [1, 1]} : vector<8x128xf32> to vector<8x32xf32>
    %379 = vector.extract_strided_slice %376 {offsets = [0, 96], sizes = [8, 32], strides = [1, 1]} : vector<8x128xf32> to vector<8x32xf32>
    %380 = vector.extract_strided_slice %371 {offsets = [0, 64], sizes = [8, 32], strides = [1, 1]} : vector<8x128xf32> to vector<8x32xf32>
    %381 = math.tanh %380 : vector<8x32xf32>
    %382 = arith.mulf %378, %323 : vector<8x32xf32>
    %383 = arith.mulf %377, %381 : vector<8x32xf32>
    %384 = arith.addf %382, %383 : vector<8x32xf32>
    %385 = math.tanh %384 : vector<8x32xf32>
    %386 = arith.mulf %379, %385 : vector<8x32xf32>
    %c6_i32 = arith.constant 6 : i32
    %c8_i32_95 = arith.constant 8 : i32
    %387 = arith.muli %c6_i32, %c8_i32_95 : i32
    %388 = tpu.assume_multiple %387, 8 : i32
    %389 = arith.index_cast %388 : i32 to index
    %c0_96 = arith.constant 0 : index
    %390 = vector.load %arg25[%389, %c0_96] : memref<64x256xf32, #tpu.memory_space<vmem>>, vector<8x256xf32>
    %c0_97 = arith.constant 0 : index
    %c0_98 = arith.constant 0 : index
    %391 = vector.load %arg5[%c0_97, %c0_98] : memref<64x256xf32, #tpu.memory_space<vmem>>, vector<64x256xf32>
    %cst_99 = arith.constant dense<0.000000e+00> : vector<8x256xf32>
    %392 = tpu.matmul %353, %391, %cst_99 {dimension_numbers = #tpu.dot_dimension_numbers<[1], [0], [0], [1], [0, 0, 1, 1], [], []>} : vector<8x64xf32>, vector<64x256xf32>, vector<8x256xf32> -> vector<8x256xf32>
    %393 = arith.addf %390, %392 : vector<8x256xf32>
    %c8_i32_100 = arith.constant 8 : i32
    %394 = arith.muli %c6_i32, %c8_i32_100 : i32
    %395 = tpu.assume_multiple %394, 8 : i32
    %396 = arith.index_cast %395 : i32 to index
    %c0_101 = arith.constant 0 : index
    %397 = vector.load %arg26[%396, %c0_101] : memref<64x128xf32, #tpu.memory_space<vmem>>, vector<8x128xf32>
    %cst_102 = arith.constant dense<0.000000e+00> : vector<8x128xf32>
    %398 = tpu.matmul %368, %14, %cst_102 {dimension_numbers = #tpu.dot_dimension_numbers<[1], [0], [0], [1], [0, 0, 1, 1], [], []>} : vector<8x32xf32>, vector<32x128xf32>, vector<8x128xf32> -> vector<8x128xf32>
    %399 = arith.addf %397, %398 : vector<8x128xf32>
    %400 = arith.negf %393 : vector<8x256xf32>
    %401 = math.exp %400 : vector<8x256xf32>
    %cst_103 = arith.constant 1.000000e+00 : f32
    %402 = vector.broadcast %cst_103 : f32 to vector<8x256xf32>
    %403 = arith.addf %402, %401 : vector<8x256xf32>
    %404 = arith.divf %402, %403 : vector<8x256xf32>
    %405 = vector.extract_strided_slice %404 {offsets = [0, 0], sizes = [8, 64], strides = [1, 1]} : vector<8x256xf32> to vector<8x64xf32>
    %406 = vector.extract_strided_slice %404 {offsets = [0, 64], sizes = [8, 64], strides = [1, 1]} : vector<8x256xf32> to vector<8x64xf32>
    %407 = vector.extract_strided_slice %404 {offsets = [0, 192], sizes = [8, 64], strides = [1, 1]} : vector<8x256xf32> to vector<8x64xf32>
    %408 = vector.extract_strided_slice %393 {offsets = [0, 128], sizes = [8, 64], strides = [1, 1]} : vector<8x256xf32> to vector<8x64xf32>
    %409 = math.tanh %408 : vector<8x64xf32>
    %410 = arith.mulf %406, %351 : vector<8x64xf32>
    %411 = arith.mulf %405, %409 : vector<8x64xf32>
    %412 = arith.addf %410, %411 : vector<8x64xf32>
    %413 = math.tanh %412 : vector<8x64xf32>
    %414 = arith.mulf %407, %413 : vector<8x64xf32>
    %415 = arith.negf %399 : vector<8x128xf32>
    %416 = math.exp %415 : vector<8x128xf32>
    %cst_104 = arith.constant 1.000000e+00 : f32
    %417 = vector.broadcast %cst_104 : f32 to vector<8x128xf32>
    %418 = arith.addf %417, %416 : vector<8x128xf32>
    %419 = arith.divf %417, %418 : vector<8x128xf32>
    %420 = vector.extract_strided_slice %419 {offsets = [0, 0], sizes = [8, 32], strides = [1, 1]} : vector<8x128xf32> to vector<8x32xf32>
    %421 = vector.extract_strided_slice %419 {offsets = [0, 32], sizes = [8, 32], strides = [1, 1]} : vector<8x128xf32> to vector<8x32xf32>
    %422 = vector.extract_strided_slice %419 {offsets = [0, 96], sizes = [8, 32], strides = [1, 1]} : vector<8x128xf32> to vector<8x32xf32>
    %423 = vector.extract_strided_slice %399 {offsets = [0, 64], sizes = [8, 32], strides = [1, 1]} : vector<8x128xf32> to vector<8x32xf32>
    %424 = math.tanh %423 : vector<8x32xf32>
    %425 = arith.mulf %421, %366 : vector<8x32xf32>
    %426 = arith.mulf %420, %424 : vector<8x32xf32>
    %427 = arith.addf %425, %426 : vector<8x32xf32>
    %428 = math.tanh %427 : vector<8x32xf32>
    %429 = arith.mulf %422, %428 : vector<8x32xf32>
    %430 = tpu.concatenate %429, %386 in 1 : vector<8x32xf32>, vector<8x32xf32> -> vector<8x64xf32>
    %cst_105 = arith.constant dense<0.000000e+00> : vector<8x128xf32>
    %431 = tpu.matmul %430, %15, %cst_105 {dimension_numbers = #tpu.dot_dimension_numbers<[1], [0], [0], [1], [0, 0, 1, 1], [], []>} : vector<8x64xf32>, vector<64x128xf32>, vector<8x128xf32> -> vector<8x128xf32>
    %432 = arith.addf %431, %18 : vector<8x128xf32>
    %433 = arith.negf %432 : vector<8x128xf32>
    %434 = math.exp %433 : vector<8x128xf32>
    %cst_106 = arith.constant 1.000000e+00 : f32
    %435 = vector.broadcast %cst_106 : f32 to vector<8x128xf32>
    %436 = arith.addf %435, %434 : vector<8x128xf32>
    %437 = arith.divf %435, %436 : vector<8x128xf32>
    %438 = vector.extract_strided_slice %437 {offsets = [0, 0], sizes = [8, 32], strides = [1, 1]} : vector<8x128xf32> to vector<8x32xf32>
    %439 = vector.extract_strided_slice %437 {offsets = [0, 32], sizes = [8, 32], strides = [1, 1]} : vector<8x128xf32> to vector<8x32xf32>
    %440 = vector.extract_strided_slice %437 {offsets = [0, 96], sizes = [8, 32], strides = [1, 1]} : vector<8x128xf32> to vector<8x32xf32>
    %441 = vector.extract_strided_slice %432 {offsets = [0, 64], sizes = [8, 32], strides = [1, 1]} : vector<8x128xf32> to vector<8x32xf32>
    %442 = math.tanh %441 : vector<8x32xf32>
    %443 = arith.mulf %439, %384 : vector<8x32xf32>
    %444 = arith.mulf %438, %442 : vector<8x32xf32>
    %445 = arith.addf %443, %444 : vector<8x32xf32>
    %446 = math.tanh %445 : vector<8x32xf32>
    %447 = arith.mulf %440, %446 : vector<8x32xf32>
    %c7_i32 = arith.constant 7 : i32
    %c8_i32_107 = arith.constant 8 : i32
    %448 = arith.muli %c7_i32, %c8_i32_107 : i32
    %449 = tpu.assume_multiple %448, 8 : i32
    %450 = arith.index_cast %449 : i32 to index
    %c0_108 = arith.constant 0 : index
    %451 = vector.load %arg25[%450, %c0_108] : memref<64x256xf32, #tpu.memory_space<vmem>>, vector<8x256xf32>
    %c0_109 = arith.constant 0 : index
    %c0_110 = arith.constant 0 : index
    %452 = vector.load %arg5[%c0_109, %c0_110] : memref<64x256xf32, #tpu.memory_space<vmem>>, vector<64x256xf32>
    %cst_111 = arith.constant dense<0.000000e+00> : vector<8x256xf32>
    %453 = tpu.matmul %414, %452, %cst_111 {dimension_numbers = #tpu.dot_dimension_numbers<[1], [0], [0], [1], [0, 0, 1, 1], [], []>} : vector<8x64xf32>, vector<64x256xf32>, vector<8x256xf32> -> vector<8x256xf32>
    %454 = arith.addf %451, %453 : vector<8x256xf32>
    %c8_i32_112 = arith.constant 8 : i32
    %455 = arith.muli %c7_i32, %c8_i32_112 : i32
    %456 = tpu.assume_multiple %455, 8 : i32
    %457 = arith.index_cast %456 : i32 to index
    %c0_113 = arith.constant 0 : index
    %458 = vector.load %arg26[%457, %c0_113] : memref<64x128xf32, #tpu.memory_space<vmem>>, vector<8x128xf32>
    %cst_114 = arith.constant dense<0.000000e+00> : vector<8x128xf32>
    %459 = tpu.matmul %429, %14, %cst_114 {dimension_numbers = #tpu.dot_dimension_numbers<[1], [0], [0], [1], [0, 0, 1, 1], [], []>} : vector<8x32xf32>, vector<32x128xf32>, vector<8x128xf32> -> vector<8x128xf32>
    %460 = arith.addf %458, %459 : vector<8x128xf32>
    %461 = arith.negf %454 : vector<8x256xf32>
    %462 = math.exp %461 : vector<8x256xf32>
    %cst_115 = arith.constant 1.000000e+00 : f32
    %463 = vector.broadcast %cst_115 : f32 to vector<8x256xf32>
    %464 = arith.addf %463, %462 : vector<8x256xf32>
    %465 = arith.divf %463, %464 : vector<8x256xf32>
    %466 = vector.extract_strided_slice %465 {offsets = [0, 0], sizes = [8, 64], strides = [1, 1]} : vector<8x256xf32> to vector<8x64xf32>
    %467 = vector.extract_strided_slice %465 {offsets = [0, 64], sizes = [8, 64], strides = [1, 1]} : vector<8x256xf32> to vector<8x64xf32>
    %468 = vector.extract_strided_slice %465 {offsets = [0, 192], sizes = [8, 64], strides = [1, 1]} : vector<8x256xf32> to vector<8x64xf32>
    %469 = vector.extract_strided_slice %454 {offsets = [0, 128], sizes = [8, 64], strides = [1, 1]} : vector<8x256xf32> to vector<8x64xf32>
    %470 = math.tanh %469 : vector<8x64xf32>
    %471 = arith.mulf %467, %412 : vector<8x64xf32>
    %472 = arith.mulf %466, %470 : vector<8x64xf32>
    %473 = arith.addf %471, %472 : vector<8x64xf32>
    %474 = math.tanh %473 : vector<8x64xf32>
    %475 = arith.mulf %468, %474 : vector<8x64xf32>
    %476 = arith.negf %460 : vector<8x128xf32>
    %477 = math.exp %476 : vector<8x128xf32>
    %cst_116 = arith.constant 1.000000e+00 : f32
    %478 = vector.broadcast %cst_116 : f32 to vector<8x128xf32>
    %479 = arith.addf %478, %477 : vector<8x128xf32>
    %480 = arith.divf %478, %479 : vector<8x128xf32>
    %481 = vector.extract_strided_slice %480 {offsets = [0, 0], sizes = [8, 32], strides = [1, 1]} : vector<8x128xf32> to vector<8x32xf32>
    %482 = vector.extract_strided_slice %480 {offsets = [0, 32], sizes = [8, 32], strides = [1, 1]} : vector<8x128xf32> to vector<8x32xf32>
    %483 = vector.extract_strided_slice %480 {offsets = [0, 96], sizes = [8, 32], strides = [1, 1]} : vector<8x128xf32> to vector<8x32xf32>
    %484 = vector.extract_strided_slice %460 {offsets = [0, 64], sizes = [8, 32], strides = [1, 1]} : vector<8x128xf32> to vector<8x32xf32>
    %485 = math.tanh %484 : vector<8x32xf32>
    %486 = arith.mulf %482, %427 : vector<8x32xf32>
    %487 = arith.mulf %481, %485 : vector<8x32xf32>
    %488 = arith.addf %486, %487 : vector<8x32xf32>
    %489 = math.tanh %488 : vector<8x32xf32>
    %490 = arith.mulf %483, %489 : vector<8x32xf32>
    %491 = tpu.concatenate %490, %447 in 1 : vector<8x32xf32>, vector<8x32xf32> -> vector<8x64xf32>
    %cst_117 = arith.constant dense<0.000000e+00> : vector<8x128xf32>
    %492 = tpu.matmul %491, %15, %cst_117 {dimension_numbers = #tpu.dot_dimension_numbers<[1], [0], [0], [1], [0, 0, 1, 1], [], []>} : vector<8x64xf32>, vector<64x128xf32>, vector<8x128xf32> -> vector<8x128xf32>
    %493 = arith.addf %492, %18 : vector<8x128xf32>
    %494 = arith.negf %493 : vector<8x128xf32>
    %495 = math.exp %494 : vector<8x128xf32>
    %cst_118 = arith.constant 1.000000e+00 : f32
    %496 = vector.broadcast %cst_118 : f32 to vector<8x128xf32>
    %497 = arith.addf %496, %495 : vector<8x128xf32>
    %498 = arith.divf %496, %497 : vector<8x128xf32>
    %499 = vector.extract_strided_slice %498 {offsets = [0, 0], sizes = [8, 32], strides = [1, 1]} : vector<8x128xf32> to vector<8x32xf32>
    %500 = vector.extract_strided_slice %498 {offsets = [0, 32], sizes = [8, 32], strides = [1, 1]} : vector<8x128xf32> to vector<8x32xf32>
    %501 = vector.extract_strided_slice %498 {offsets = [0, 96], sizes = [8, 32], strides = [1, 1]} : vector<8x128xf32> to vector<8x32xf32>
    %502 = vector.extract_strided_slice %493 {offsets = [0, 64], sizes = [8, 32], strides = [1, 1]} : vector<8x128xf32> to vector<8x32xf32>
    %503 = math.tanh %502 : vector<8x32xf32>
    %504 = arith.mulf %500, %445 : vector<8x32xf32>
    %505 = arith.mulf %499, %503 : vector<8x32xf32>
    %506 = arith.addf %504, %505 : vector<8x32xf32>
    %507 = math.tanh %506 : vector<8x32xf32>
    %508 = arith.mulf %501, %507 : vector<8x32xf32>
    %c8_i32_119 = arith.constant 8 : i32
    %c0_120 = arith.constant 0 : index
    %c0_121 = arith.constant 0 : index
    %509 = vector.load %arg2[%c0_120, %c0_121] : memref<8x8xf32, #tpu.memory_space<vmem>>, vector<8x8xf32>
    %c0_122 = arith.constant 0 : index
    %c0_123 = arith.constant 0 : index
    %510 = vector.load %arg3[%c0_122, %c0_123] : memref<8x1xf32, #tpu.memory_space<vmem>>, vector<8x1xf32>
    %c0_124 = arith.constant 0 : index
    %c0_125 = arith.constant 0 : index
    %511 = vector.load %arg12[%c0_124, %c0_125] : memref<2x64xf32, #tpu.memory_space<vmem>>, vector<1x64xf32>
    %512 = vector.broadcast %511 : vector<1x64xf32> to vector<8x64xf32>
    %513 = arith.mulf %475, %512 : vector<8x64xf32>
    %c1 = arith.constant 1 : index
    %c0_126 = arith.constant 0 : index
    %514 = vector.load %arg12[%c1, %c0_126] : memref<2x64xf32, #tpu.memory_space<vmem>>, vector<1x64xf32>
    %515 = vector.broadcast %514 : vector<1x64xf32> to vector<8x64xf32>
    %516 = arith.addf %513, %515 : vector<8x64xf32>
    %cst_127 = arith.constant 0.000000e+00 : f32
    %517 = vector.broadcast %cst_127 : f32 to vector<8x64xf32>
    %518 = arith.maximumf %516, %517 : vector<8x64xf32>
    %c0_128 = arith.constant 0 : index
    %c0_129 = arith.constant 0 : index
    %519 = vector.load %arg16[%c0_128, %c0_129] : memref<64x16xf32, #tpu.memory_space<vmem>>, vector<64x16xf32>
    %cst_130 = arith.constant dense<0.000000e+00> : vector<8x16xf32>
    %520 = tpu.matmul %518, %519, %cst_130 {dimension_numbers = #tpu.dot_dimension_numbers<[1], [0], [0], [1], [0, 0, 1, 1], [], []>} : vector<8x64xf32>, vector<64x16xf32>, vector<8x16xf32> -> vector<8x16xf32>
    %c0_131 = arith.constant 0 : index
    %c0_132 = arith.constant 0 : index
    %521 = vector.load %arg13[%c0_131, %c0_132] : memref<2x32xf32, #tpu.memory_space<vmem>>, vector<1x32xf32>
    %522 = vector.broadcast %521 : vector<1x32xf32> to vector<8x32xf32>
    %523 = arith.mulf %508, %522 : vector<8x32xf32>
    %c1_133 = arith.constant 1 : index
    %c0_134 = arith.constant 0 : index
    %524 = vector.load %arg13[%c1_133, %c0_134] : memref<2x32xf32, #tpu.memory_space<vmem>>, vector<1x32xf32>
    %525 = vector.broadcast %524 : vector<1x32xf32> to vector<8x32xf32>
    %526 = arith.addf %523, %525 : vector<8x32xf32>
    %cst_135 = arith.constant 0.000000e+00 : f32
    %527 = vector.broadcast %cst_135 : f32 to vector<8x32xf32>
    %528 = arith.maximumf %526, %527 : vector<8x32xf32>
    %c0_136 = arith.constant 0 : index
    %c0_137 = arith.constant 0 : index
    %529 = vector.load %arg17[%c0_136, %c0_137] : memref<32x16xf32, #tpu.memory_space<vmem>>, vector<32x16xf32>
    %cst_138 = arith.constant dense<0.000000e+00> : vector<8x16xf32>
    %530 = tpu.matmul %528, %529, %cst_138 {dimension_numbers = #tpu.dot_dimension_numbers<[1], [0], [0], [1], [0, 0, 1, 1], [], []>} : vector<8x32xf32>, vector<32x16xf32>, vector<8x16xf32> -> vector<8x16xf32>
    %531 = arith.addf %520, %530 : vector<8x16xf32>
    %c0_139 = arith.constant 0 : index
    %c0_140 = arith.constant 0 : index
    %532 = vector.load %arg14[%c0_139, %c0_140] : memref<2x8xf32, #tpu.memory_space<vmem>>, vector<1x8xf32>
    %533 = vector.broadcast %532 : vector<1x8xf32> to vector<8x8xf32>
    %534 = arith.mulf %509, %533 : vector<8x8xf32>
    %c1_141 = arith.constant 1 : index
    %c0_142 = arith.constant 0 : index
    %535 = vector.load %arg14[%c1_141, %c0_142] : memref<2x8xf32, #tpu.memory_space<vmem>>, vector<1x8xf32>
    %536 = vector.broadcast %535 : vector<1x8xf32> to vector<8x8xf32>
    %537 = arith.addf %534, %536 : vector<8x8xf32>
    %cst_143 = arith.constant 0.000000e+00 : f32
    %538 = vector.broadcast %cst_143 : f32 to vector<8x8xf32>
    %539 = arith.maximumf %537, %538 : vector<8x8xf32>
    %c0_144 = arith.constant 0 : index
    %c0_145 = arith.constant 0 : index
    %540 = vector.load %arg18[%c0_144, %c0_145] : memref<8x16xf32, #tpu.memory_space<vmem>>, vector<8x16xf32>
    %cst_146 = arith.constant dense<0.000000e+00> : vector<8x16xf32>
    %541 = tpu.matmul %539, %540, %cst_146 {dimension_numbers = #tpu.dot_dimension_numbers<[1], [0], [0], [1], [0, 0, 1, 1], [], []>} : vector<8x8xf32>, vector<8x16xf32>, vector<8x16xf32> -> vector<8x16xf32>
    %542 = arith.addf %531, %541 : vector<8x16xf32>
    %c0_147 = arith.constant 0 : index
    %c0_148 = arith.constant 0 : index
    %543 = vector.load %arg15[%c0_147, %c0_148] : memref<2x1xf32, #tpu.memory_space<vmem>>, vector<1x1xf32>
    %544 = vector.broadcast %543 : vector<1x1xf32> to vector<8x1xf32>
    %545 = arith.mulf %510, %544 : vector<8x1xf32>
    %c1_149 = arith.constant 1 : index
    %c0_150 = arith.constant 0 : index
    %546 = vector.load %arg15[%c1_149, %c0_150] : memref<2x1xf32, #tpu.memory_space<vmem>>, vector<1x1xf32>
    %547 = vector.broadcast %546 : vector<1x1xf32> to vector<8x1xf32>
    %548 = arith.addf %545, %547 : vector<8x1xf32>
    %cst_151 = arith.constant 0.000000e+00 : f32
    %549 = vector.broadcast %cst_151 : f32 to vector<8x1xf32>
    %550 = arith.maximumf %548, %549 : vector<8x1xf32>
    %c0_152 = arith.constant 0 : index
    %c0_153 = arith.constant 0 : index
    %551 = vector.load %arg19[%c0_152, %c0_153] : memref<1x16xf32, #tpu.memory_space<vmem>>, vector<1x16xf32>
    %552 = vector.broadcast %550 : vector<8x1xf32> to vector<8x16xf32>
    %553 = vector.broadcast %551 : vector<1x16xf32> to vector<8x16xf32>
    %554 = arith.mulf %552, %553 : vector<8x16xf32>
    %555 = arith.addf %542, %554 : vector<8x16xf32>
    %c0_154 = arith.constant 0 : index
    %c0_155 = arith.constant 0 : index
    %556 = vector.load %arg20[%c0_154, %c0_155] : memref<1x16xf32, #tpu.memory_space<vmem>>, vector<1x16xf32>
    %557 = vector.broadcast %556 : vector<1x16xf32> to vector<8x16xf32>
    %558 = arith.addf %555, %557 : vector<8x16xf32>
    %c0_156 = arith.constant 0 : index
    %c0_157 = arith.constant 0 : index
    %559 = vector.load %arg21[%c0_156, %c0_157] : memref<2x16xf32, #tpu.memory_space<vmem>>, vector<1x16xf32>
    %560 = vector.broadcast %559 : vector<1x16xf32> to vector<8x16xf32>
    %561 = arith.mulf %558, %560 : vector<8x16xf32>
    %c1_158 = arith.constant 1 : index
    %c0_159 = arith.constant 0 : index
    %562 = vector.load %arg21[%c1_158, %c0_159] : memref<2x16xf32, #tpu.memory_space<vmem>>, vector<1x16xf32>
    %563 = vector.broadcast %562 : vector<1x16xf32> to vector<8x16xf32>
    %564 = arith.addf %561, %563 : vector<8x16xf32>
    %cst_160 = arith.constant 0.000000e+00 : f32
    %565 = vector.broadcast %cst_160 : f32 to vector<8x16xf32>
    %566 = arith.maximumf %564, %565 : vector<8x16xf32>
    %c0_161 = arith.constant 0 : index
    %c0_162 = arith.constant 0 : index
    %567 = vector.load %arg22[%c0_161, %c0_162] : memref<1x16xf32, #tpu.memory_space<vmem>>, vector<1x16xf32>
    %568 = vector.broadcast %567 : vector<1x16xf32> to vector<8x16xf32>
    %569 = arith.mulf %566, %568 : vector<8x16xf32>
    %cst_163 = arith.constant dense<0.000000e+00> : vector<8xf32>
    %570 = vector.multi_reduction <add>, %569, %cst_163 [1] : vector<8x16xf32> to vector<8xf32>
    %571 = vector.shape_cast %570 : vector<8xf32> to vector<8x1xf32>
    %c0_164 = arith.constant 0 : index
    %c0_165 = arith.constant 0 : index
    %572 = vector.load %arg23[%c0_164, %c0_165] : memref<1x1xf32, #tpu.memory_space<vmem>>, vector<1x1xf32>
    %573 = vector.broadcast %572 : vector<1x1xf32> to vector<8x1xf32>
    %574 = arith.addf %571, %573 : vector<8x1xf32>
    %c0_166 = arith.constant 0 : index
    %c0_167 = arith.constant 0 : index
    %575 = vector.load %arg24[%c0_166, %c0_167] : memref<8x1xf32, #tpu.memory_space<vmem>>, vector<8x1xf32>
    tpu.vector_store %arg24[%c0_166, %c0_167], %574 {strides = array<i32>} : memref<8x1xf32, #tpu.memory_space<vmem>>, vector<8x1xf32>,
    return
  }
}

</mosaic_0001>

<llo_original>
// kernel: tpu_custom_call.1
$region0: #{tpu_custom_call.1}
  #allocation0 [shape = 'u32[]', space=smem, size = 0x4, offset = 0x4, fixed_abs, tag = 'smem constant byte address 0x4 - core index']
  #allocation1 [shape = 'u32[144,128]{1,0:T(1,128)}', space=vmem, size = 0x12000, scoped, tag = 'internal scratch']
  #allocation2 [shape = 'f32[64,256]{1,0:T(8,128)}', space=vmem, size = 0x10000, scoped, tag = 'scratch operand']
  #allocation3 [shape = 'f32[64,128]{1,0:T(8,128)}', space=vmem, size = 0x8000, scoped, tag = 'scratch operand']
  #allocation4 [shape = 'f32[1,1]{1,0:T(1,128)S(1)}', space=vmem, size = 0x200, scoped, tag = 'scoped memory for tpu_custom_call.1']
  %s0 = inlined_call_operand.vmem [shape: f32[64,8], index: 0, kind: input, shape index: {}]
  %s1 = inlined_call_operand.vmem [shape: f32[64,8], index: 1, kind: input, shape index: {}]
  %s2 = inlined_call_operand.vmem [shape: f32[8,8], index: 2, kind: input, shape index: {}]
  %s3 = inlined_call_operand.vmem [shape: f32[8,1], index: 3, kind: input, shape index: {}]
  %s4 = inlined_call_operand.vmem [shape: f32[8,256], index: 4, kind: input, shape index: {}]
  %s5 = inlined_call_operand.vmem [shape: f32[64,256], index: 5, kind: input, shape index: {}]
  %s6 = inlined_call_operand.hbm [shape: f32[1,256], index: 6, kind: input, shape index: {}]
  %s7 = inlined_call_operand.vmem [shape: f32[8,128], index: 7, kind: input, shape index: {}]
  %s8 = inlined_call_operand.vmem [shape: f32[32,128], index: 8, kind: input, shape index: {}]
  %s9 = inlined_call_operand.hbm [shape: f32[1,128], index: 9, kind: input, shape index: {}]
  %s10 = inlined_call_operand.vmem [shape: f32[64,128], index: 10, kind: input, shape index: {}]
  %s11 = inlined_call_operand.hbm [shape: f32[1,128], index: 11, kind: input, shape index: {}]
  %s12 = inlined_call_operand.vmem [shape: f32[2,64], index: 12, kind: input, shape index: {}]
  %s13 = inlined_call_operand.hbm [shape: f32[2,32], index: 13, kind: input, shape index: {}]
  %s14 = inlined_call_operand.hbm [shape: f32[2,8], index: 14, kind: input, shape index: {}]
  %s15 = inlined_call_operand.vmem [shape: f32[2,1], index: 15, kind: input, shape index: {}]
  %s16 = inlined_call_operand.vmem [shape: f32[64,16], index: 16, kind: input, shape index: {}]
  %s17 = inlined_call_operand.vmem [shape: f32[32,16], index: 17, kind: input, shape index: {}]
  %s18 = inlined_call_operand.vmem [shape: f32[8,16], index: 18, kind: input, shape index: {}]
  %s19 = inlined_call_operand.vmem [shape: f32[1,16], index: 19, kind: input, shape index: {}]
  %s20 = inlined_call_operand.vmem [shape: f32[1,16], index: 20, kind: input, shape index: {}]
  %s21 = inlined_call_operand.vmem [shape: f32[2,16], index: 21, kind: input, shape index: {}]
  %s22 = inlined_call_operand.vmem [shape: f32[1,16], index: 22, kind: input, shape index: {}]
  %s23 = inlined_call_operand.<no memory space> [shape: f32[1,1], index: 23, kind: input, shape index: {}]
  %s24 = inlined_call_operand.vmem [shape: f32[8,1], index: 24, kind: output, shape index: {}]
  %s25 = sld [smem:[#allocation0]]
  $region126: #{tpu_custom_call.1} parent=0
    _
  %s27 = ssub.s32 1, %s25
  %s28 = scalar_select 0, %s27, %s25
  %v29 = vstv %s23
  %30 = vst [vmem:[#allocation4] sm:$0x1] %v29
  $region1: #{tpu_custom_call.1} parent=0
    #allocation5 [shape = 'u8[1024]{0}', space=vmem, size = 0x400, scoped, tag = 'input window, operand 6, single buffered']
    #allocation6 [shape = 's32[1]{0}', space=sflag, size = 0x4, scoped, tag = 'scoped memory for tpu_custom_call.1']
    #allocation7 [shape = 'u8[512]{0}', space=vmem, size = 0x400, scoped, tag = 'input window, operand 9, single buffered']
    #allocation8 [shape = 's32[1]{0}', space=sflag, size = 0x4, scoped, tag = 'scoped memory for tpu_custom_call.1']
    #allocation9 [shape = 'u8[512]{0}', space=vmem, size = 0x400, scoped, tag = 'input window, operand 11, single buffered']
    #allocation10 [shape = 'u8[1024]{0}', space=vmem, size = 0x400, scoped, tag = 'input window, operand 13, single buffered']
    #allocation11 [shape = 's32[1]{0}', space=sflag, size = 0x4, scoped, tag = 'scoped memory for tpu_custom_call.1']
    #allocation12 [shape = 'u8[1024]{0}', space=vmem, size = 0x400, scoped, tag = 'input window, operand 14, single buffered']
    %31 = vsyncpa [#allocation6], 0
    %32 = vsyncpa [#allocation8], 0
    %33 = vsyncpa [#allocation11], 0
    // Predicated region
    $region2: #{tpu_custom_call.1} parent=1 // pred_check
      _
    $region3: #{tpu_custom_call.1} parent=1 // pred_check_branch
      %35 = sbr.rel (0) target = $region5
    $region4: #{tpu_custom_call.1} parent=1 // pred_region
      _
    $region5: #{tpu_custom_call.1} parent=1 // pred_fallthru
      _
    // Predicated region
    $region6: #{tpu_custom_call.1} parent=1 // pred_check
      _
    $region7: #{tpu_custom_call.1} parent=1 // pred_check_branch
      %37 = sbr.rel (0) target = $region9
    $region8: #{tpu_custom_call.1} parent=1 // pred_region
      _
    $region9: #{tpu_custom_call.1} parent=1 // pred_fallthru
      _
    // Predicated region
    $region10: #{tpu_custom_call.1} parent=1 // pred_check
      _
    $region11: #{tpu_custom_call.1} parent=1 // pred_check_branch
      %39 = sbr.rel (0) target = $region13
    $region12: #{tpu_custom_call.1} parent=1 // pred_region
      _
    $region13: #{tpu_custom_call.1} parent=1 // pred_fallthru
      _
    // Predicated region
    $region14: #{tpu_custom_call.1} parent=1 // pred_check
      _
    $region15: #{tpu_custom_call.1} parent=1 // pred_check_branch
      %41 = sbr.rel (0) target = $region17
    $region16: #{tpu_custom_call.1} parent=1 // pred_region
      _
    $region17: #{tpu_custom_call.1} parent=1 // pred_fallthru
      _
    // Predicated region
    $region18: #{tpu_custom_call.1} parent=1 // pred_check
      _
    $region19: #{tpu_custom_call.1} parent=1 // pred_check_branch
      %43 = sbr.rel (0) target = $region21
    $region20: #{tpu_custom_call.1} parent=1 // pred_region
      _
    $region21: #{tpu_custom_call.1} parent=1 // pred_fallthru
      _
    // Predicated region
    $region22: #{tpu_custom_call.1} parent=1 // pred_check
      _
    $region23: #{tpu_custom_call.1} parent=1 // pred_check_branch
      %45 = sbr.rel (0) target = $region25
    $region24: #{tpu_custom_call.1} parent=1 // pred_region
      _
    $region25: #{tpu_custom_call.1} parent=1 // pred_fallthru
      _
    // Predicated region
    $region26: #{tpu_custom_call.1} parent=1 // pred_check
      _
    $region27: #{tpu_custom_call.1} parent=1 // pred_check_branch
      %47 = sbr.rel (0) target = $region29
    $region28: #{tpu_custom_call.1} parent=1 // pred_region
      %s49 = ssub.s32 32, 32
      %50 = vsyncadd [#allocation6], %s49
      %s52 = sshll.u32 [#allocation5], 4
      %s53 = int_to_ptr.vmem [resolvable:$true] %s52
      %55 = dma.hbm_to_vmem [thread:$0]  %s6, 32, %s53, [#allocation6]
    $region29: #{tpu_custom_call.1} parent=1 // pred_fallthru
      _
    // Predicated region
    $region30: #{tpu_custom_call.1} parent=1 // pred_check
      _
    $region31: #{tpu_custom_call.1} parent=1 // pred_check_branch
      %57 = sbr.rel (0) target = $region33
    $region32: #{tpu_custom_call.1} parent=1 // pred_region
      _
    $region33: #{tpu_custom_call.1} parent=1 // pred_fallthru
      _
    // Predicated region
    $region34: #{tpu_custom_call.1} parent=1 // pred_check
      _
    $region35: #{tpu_custom_call.1} parent=1 // pred_check_branch
      %59 = sbr.rel (0) target = $region37
    $region36: #{tpu_custom_call.1} parent=1 // pred_region
      _
    $region37: #{tpu_custom_call.1} parent=1 // pred_fallthru
      _
    // Predicated region
    $region38: #{tpu_custom_call.1} parent=1 // pred_check
      _
    $region39: #{tpu_custom_call.1} parent=1 // pred_check_branch
      %61 = sbr.rel (0) target = $region41
    $region40: #{tpu_custom_call.1} parent=1 // pred_region
      %s63 = ssub.s32 16, 16
      %64 = vsyncadd [#allocation8], %s63
      %s66 = sshll.u32 [#allocation7], 4
      %s67 = int_to_ptr.vmem [resolvable:$true] %s66
      %69 = dma.hbm_to_vmem [thread:$0]  %s9, 16, %s67, [#allocation8]
    $region41: #{tpu_custom_call.1} parent=1 // pred_fallthru
      _
    // Predicated region
    $region42: #{tpu_custom_call.1} parent=1 // pred_check
      _
    $region43: #{tpu_custom_call.1} parent=1 // pred_check_branch
      %71 = sbr.rel (0) target = $region45
    $region44: #{tpu_custom_call.1} parent=1 // pred_region
      _
    $region45: #{tpu_custom_call.1} parent=1 // pred_fallthru
      _
    // Predicated region
    $region46: #{tpu_custom_call.1} parent=1 // pred_check
      _
    $region47: #{tpu_custom_call.1} parent=1 // pred_check_branch
      %73 = sbr.rel (0) target = $region49
    $region48: #{tpu_custom_call.1} parent=1 // pred_region
      %s75 = ssub.s32 16, 16
      %76 = vsyncadd [#allocation8], %s75
      %s78 = sshll.u32 [#allocation9], 4
      %s79 = int_to_ptr.vmem [resolvable:$true] %s78
      %81 = dma.hbm_to_vmem [thread:$0]  %s11, 16, %s79, [#allocation8]
    $region49: #{tpu_custom_call.1} parent=1 // pred_fallthru
      _
    // Predicated region
    $region50: #{tpu_custom_call.1} parent=1 // pred_check
      _
    $region51: #{tpu_custom_call.1} parent=1 // pred_check_branch
      %83 = sbr.rel (0) target = $region53
    $region52: #{tpu_custom_call.1} parent=1 // pred_region
      _
    $region53: #{tpu_custom_call.1} parent=1 // pred_fallthru
      _
    // Predicated region
    $region54: #{tpu_custom_call.1} parent=1 // pred_check
      _
    $region55: #{tpu_custom_call.1} parent=1 // pred_check_branch
      %85 = sbr.rel (0) target = $region57
    $region56: #{tpu_custom_call.1} parent=1 // pred_region
      %s87 = ssub.s32 32, 32
      %88 = vsyncadd [#allocation11], %s87
      %s90 = sshll.u32 [#allocation10], 4
      %s91 = int_to_ptr.vmem [resolvable:$true] %s90
      %93 = dma.hbm_to_vmem [thread:$0]  %s13, 32, %s91, [#allocation11]
    $region57: #{tpu_custom_call.1} parent=1 // pred_fallthru
      _
    // Predicated region
    $region58: #{tpu_custom_call.1} parent=1 // pred_check
      _
    $region59: #{tpu_custom_call.1} parent=1 // pred_check_branch
      %95 = sbr.rel (0) target = $region61
    $region60: #{tpu_custom_call.1} parent=1 // pred_region
      %s97 = ssub.s32 32, 32
      %98 = vsyncadd [#allocation11], %s97
      %s100 = sshll.u32 [#allocation12], 4
      %s101 = int_to_ptr.vmem [resolvable:$true] %s100
      %103 = dma.hbm_to_vmem [thread:$0]  %s14, 32, %s101, [#allocation11]
    $region61: #{tpu_custom_call.1} parent=1 // pred_fallthru
      _
    // Predicated region
    $region62: #{tpu_custom_call.1} parent=1 // pred_check
      _
    $region63: #{tpu_custom_call.1} parent=1 // pred_check_branch
      %105 = sbr.rel (0) target = $region65
    $region64: #{tpu_custom_call.1} parent=1 // pred_region
      _
    $region65: #{tpu_custom_call.1} parent=1 // pred_fallthru
      _
    // Predicated region
    $region66: #{tpu_custom_call.1} parent=1 // pred_check
      _
    $region67: #{tpu_custom_call.1} parent=1 // pred_check_branch
      %107 = sbr.rel (0) target = $region69
    $region68: #{tpu_custom_call.1} parent=1 // pred_region
      _
    $region69: #{tpu_custom_call.1} parent=1 // pred_fallthru
      _
    // Predicated region
    $region70: #{tpu_custom_call.1} parent=1 // pred_check
      _
    $region71: #{tpu_custom_call.1} parent=1 // pred_check_branch
      %109 = sbr.rel (0) target = $region73
    $region72: #{tpu_custom_call.1} parent=1 // pred_region
      _
    $region73: #{tpu_custom_call.1} parent=1 // pred_fallthru
      _
    // Predicated region
    $region74: #{tpu_custom_call.1} parent=1 // pred_check
      _
    $region75: #{tpu_custom_call.1} parent=1 // pred_check_branch
      %111 = sbr.rel (0) target = $region77
    $region76: #{tpu_custom_call.1} parent=1 // pred_region
      _
    $region77: #{tpu_custom_call.1} parent=1 // pred_fallthru
      _
    // Predicated region
    $region78: #{tpu_custom_call.1} parent=1 // pred_check
      _
    $region79: #{tpu_custom_call.1} parent=1 // pred_check_branch
      %113 = sbr.rel (0) target = $region81
    $region80: #{tpu_custom_call.1} parent=1 // pred_region
      _
    $region81: #{tpu_custom_call.1} parent=1 // pred_fallthru
      _
    // Predicated region
    $region82: #{tpu_custom_call.1} parent=1 // pred_check
      _
    $region83: #{tpu_custom_call.1} parent=1 // pred_check_branch
      %115 = sbr.rel (0) target = $region85
    $region84: #{tpu_custom_call.1} parent=1 // pred_region
      _
    $region85: #{tpu_custom_call.1} parent=1 // pred_fallthru
      _
    // Predicated region
    $region86: #{tpu_custom_call.1} parent=1 // pred_check
      _
    $region87: #{tpu_custom_call.1} parent=1 // pred_check_branch
      %117 = sbr.rel (0) target = $region89
    $region88: #{tpu_custom_call.1} parent=1 // pred_region
      _
    $region89: #{tpu_custom_call.1} parent=1 // pred_fallthru
      _
    // Predicated region
    $region90: #{tpu_custom_call.1} parent=1 // pred_check
      _
    $region91: #{tpu_custom_call.1} parent=1 // pred_check_branch
      %119 = sbr.rel (0) target = $region93
    $region92: #{tpu_custom_call.1} parent=1 // pred_region
      _
    $region93: #{tpu_custom_call.1} parent=1 // pred_fallthru
      _
    // Predicated region
    $region94: #{tpu_custom_call.1} parent=1 // pred_check
      _
    $region95: #{tpu_custom_call.1} parent=1 // pred_check_branch
      %121 = sbr.rel (0) target = $region97
    $region96: #{tpu_custom_call.1} parent=1 // pred_region
      _
    $region97: #{tpu_custom_call.1} parent=1 // pred_fallthru
      _
    // Predicated region
    $region98: #{tpu_custom_call.1} parent=1 // pred_check
      _
    $region99: #{tpu_custom_call.1} parent=1 // pred_check_branch
      %123 = sbr.rel (0) target = $region101
    $region100: #{tpu_custom_call.1} parent=1 // pred_region
      %124 = dma.done [#allocation6], 32
    $region101: #{tpu_custom_call.1} parent=1 // pred_fallthru
      _
    // Predicated region
    $region102: #{tpu_custom_call.1} parent=1 // pred_check
      _
    $region103: #{tpu_custom_call.1} parent=1 // pred_check_branch
      %126 = sbr.rel (0) target = $region105
    $region104: #{tpu_custom_call.1} parent=1 // pred_region
      %127 = dma.done [#allocation8], 16
    $region105: #{tpu_custom_call.1} parent=1 // pred_fallthru
      _
    // Predicated region
    $region106: #{tpu_custom_call.1} parent=1 // pred_check
      _
    $region107: #{tpu_custom_call.1} parent=1 // pred_check_branch
      %129 = sbr.rel (0) target = $region109
    $region108: #{tpu_custom_call.1} parent=1 // pred_region
      %130 = dma.done [#allocation8], 16
    $region109: #{tpu_custom_call.1} parent=1 // pred_fallthru
      _
    // Predicated region
    $region110: #{tpu_custom_call.1} parent=1 // pred_check
      _
    $region111: #{tpu_custom_call.1} parent=1 // pred_check_branch
      %132 = sbr.rel (0) target = $region113
    $region112: #{tpu_custom_call.1} parent=1 // pred_region
      %133 = dma.done [#allocation11], 32
    $region113: #{tpu_custom_call.1} parent=1 // pred_fallthru
      _
    // Predicated region
    $region114: #{tpu_custom_call.1} parent=1 // pred_check
      _
    $region115: #{tpu_custom_call.1} parent=1 // pred_check_branch
      %135 = sbr.rel (0) target = $region117
    $region116: #{tpu_custom_call.1} parent=1 // pred_region
      %136 = dma.done [#allocation11], 32
    $region117: #{tpu_custom_call.1} parent=1 // pred_fallthru
      _
    %v137 = vld [vmem:[%s0] sm:$0xff]
    %v138 = vld [vmem:[%s0 + $0x8] sm:$0xff]
    %v139 = vld [vmem:[%s0 + $0x10] sm:$0xff]
    %v140 = vld [vmem:[%s0 + $0x18] sm:$0xff]
    %v141 = vld [vmem:[%s0 + $0x20] sm:$0xff]
    %v142 = vld [vmem:[%s0 + $0x28] sm:$0xff]
    %v143 = vld [vmem:[%s0 + $0x30] sm:$0xff]
    %v144 = vld [vmem:[%s0 + $0x38] sm:$0xff]
    %v145 = vld [vmem:[%s4] sm:$0xff]
    %v146 = vld [vmem:[%s4 + $0x8] sm:$0xff]
    %v147 = vld [vmem:[#allocation5] sm:$0x3]
    %v149 = vlaneseq
    %v150 = vshrl.u32 %v149, 7
    %v151 = vsub.s32 0, %v150
    %v152 = vrot.slane %v147, %v151
    %v153 = vlaneseq
    %v154 = vshrl.u32 %v153, 7
    %v155 = vsub.s32 1, %v154
    %v156 = vrot.slane %v147, %v155
    %vm159 = vcmask 64512
    %v161 = vsel %vm159, %v137, 0
    %v164 = vsel %vm159, %v138, 0
    %v167 = vsel %vm159, %v139, 0
    %v170 = vsel %vm159, %v140, 0
    %v173 = vsel %vm159, %v141, 0
    %v176 = vsel %vm159, %v142, 0
    %v179 = vsel %vm159, %v143, 0
    %v182 = vsel %vm159, %v144, 0
    %184 = vmatprep.subr.mxu0 0.0
    %185 = vmatpush1.msra.mxu0 0.0
    %186 = vmatprep.subr.mxu0 0.0
    %187 = vmatpush1.msra.mxu0 0.0
    %188 = vmatprep.subr.mxu0 0.0
    %189 = vmatpush1.msra.mxu0 0.0
    %190 = vmatprep.subr.mxu0 0.0
    %191 = vmatpush1.msra.mxu0 0.0
    %192 = vmatprep.subr.mxu0 0.0
    %193 = vmatpush1.msra.mxu0 0.0
    %194 = vmatprep.subr.mxu0 0.0
    %195 = vmatpush1.msra.mxu0 0.0
    %196 = vmatprep.subr.mxu0 0.0
    %197 = vmatpush1.msra.mxu0 0.0
    %198 = vmatprep.subr.mxu0 0.0
    %199 = vmatpush1.msra.mxu0 0.0
    %200 = vmatprep.subr.mxu0 0.0
    %201 = vmatpush1.msra.mxu0 0.0
    %202 = vmatprep.subr.mxu0 0.0
    %203 = vmatpush1.msra.mxu0 0.0
    %204 = vmatprep.subr.mxu0 0.0
    %205 = vmatpush1.msra.mxu0 0.0
    %206 = vmatprep.subr.mxu0 0.0
    %207 = vmatpush1.msra.mxu0 0.0
    %208 = vmatprep.subr.mxu0 0.0
    %209 = vmatpush1.msra.mxu0 0.0
    %210 = vmatprep.subr.mxu0 0.0
    %211 = vmatpush1.msra.mxu0 0.0
    %212 = vmatprep.subr.mxu0 0.0
    %213 = vmatpush1.msra.mxu0 0.0
    %214 = vmatprep.subr.mxu0 %v146
    %215 = vmatpush1.msra.mxu0 %v145
    %216 = vmatprep.subr.mxu0 0.0
    %217 = vmatpush2.msra.mxu0 0.0
    %218 = vmatprep.subr.mxu0 0.0
    %219 = vmatpush2.msra.mxu0 0.0
    %220 = vmatprep.subr.mxu0 0.0
    %221 = vmatpush2.msra.mxu0 0.0
    %222 = vmatprep.subr.mxu0 0.0
    %223 = vmatpush2.msra.mxu0 0.0
    %224 = vmatprep.subr.mxu0 0.0
    %225 = vmatpush2.msra.mxu0 0.0
    %226 = vmatprep.subr.mxu0 0.0
    %227 = vmatpush2.msra.mxu0 0.0
    %228 = vmatprep.subr.mxu0 0.0
    %229 = vmatpush2.msra.mxu0 0.0
    %230 = vmatprep.subr.mxu0 0.0
    %231 = vmatpush2.msra.mxu0 0.0
    %232 = vmatprep.subr.mxu0 0.0
    %233 = vmatpush2.msra.mxu0 0.0
    %234 = vmatprep.subr.mxu0 0.0
    %235 = vmatpush2.msra.mxu0 0.0
    %236 = vmatprep.subr.mxu0 0.0
    %237 = vmatpush2.msra.mxu0 0.0
    %238 = vmatprep.subr.mxu0 0.0
    %239 = vmatpush2.msra.mxu0 0.0
    %240 = vmatprep.subr.mxu0 0.0
    %241 = vmatpush2.msra.mxu0 0.0
    %242 = vmatprep.subr.mxu0 0.0
    %243 = vmatpush2.msra.mxu0 0.0
    %244 = vmatprep.subr.mxu0 0.0
    %245 = vmatpush2.msra.mxu0 0.0
    %246 = vmatprep.subr.mxu0 0.0
    %247 = vmatpush2.msra.mxu0 0.0
    %248 = vmatprep.mubr.f32.mxu0 0.0
    %249 = vmatmul.mubr.f32.gmra.mxu0 %v161
    %v250 = vpop.f32.mrf.mxu0
    %v251 = vadd.f32 %v152, %v250
    %v252 = vpop.f32.mrf.mxu0
    %v253 = vadd.f32 %v156, %v252
    %254 = vmatprep.mubr.f32.mxu0 0.0
    %255 = vmatmul.mubr.f32.gmra.mxu0 %v164
    %v256 = vpop.f32.mrf.mxu0
    %v257 = vadd.f32 %v152, %v256
    %v258 = vpop.f32.mrf.mxu0
    %v259 = vadd.f32 %v156, %v258
    %260 = vmatprep.mubr.f32.mxu0 0.0
    %261 = vmatmul.mubr.f32.gmra.mxu0 %v167
    %v262 = vpop.f32.mrf.mxu0
    %v263 = vadd.f32 %v152, %v262
    %v264 = vpop.f32.mrf.mxu0
    %v265 = vadd.f32 %v156, %v264
    %266 = vmatprep.mubr.f32.mxu0 0.0
    %267 = vmatmul.mubr.f32.gmra.mxu0 %v170
    %v268 = vpop.f32.mrf.mxu0
    %v269 = vadd.f32 %v152, %v268
    %v270 = vpop.f32.mrf.mxu0
    %v271 = vadd.f32 %v156, %v270
    %272 = vmatprep.mubr.f32.mxu0 0.0
    %273 = vmatmul.mubr.f32.gmra.mxu0 %v173
    %v274 = vpop.f32.mrf.mxu0
    %v275 = vadd.f32 %v152, %v274
    %v276 = vpop.f32.mrf.mxu0
    %v277 = vadd.f32 %v156, %v276
    %278 = vmatprep.mubr.f32.mxu0 0.0
    %279 = vmatmul.mubr.f32.gmra.mxu0 %v176
    %v280 = vpop.f32.mrf.mxu0
    %v281 = vadd.f32 %v152, %v280
    %v282 = vpop.f32.mrf.mxu0
    %v283 = vadd.f32 %v156, %v282
    %284 = vmatprep.mubr.f32.mxu0 0.0
    %285 = vmatmul.mubr.f32.gmra.mxu0 %v179
    %v286 = vpop.f32.mrf.mxu0
    %v287 = vadd.f32 %v152, %v286
    %v288 = vpop.f32.mrf.mxu0
    %v289 = vadd.f32 %v156, %v288
    %290 = vmatprep.mubr.f32.mxu0 0.0
    %291 = vmatmul.mubr.f32.gmra.mxu0 %v182
    %v292 = vpop.f32.mrf.mxu0
    %v293 = vadd.f32 %v152, %v292
    %v294 = vpop.f32.mrf.mxu0
    %v295 = vadd.f32 %v156, %v294
    %296 = vdwg.mxu0
    %297 = vst [vmem:[#allocation2] sm:$0xff] %v251
    %298 = vst [vmem:[#allocation2 + $0x8] sm:$0xff] %v253
    %299 = vst [vmem:[#allocation2 + $0x10] sm:$0xff] %v257
    %300 = vst [vmem:[#allocation2 + $0x18] sm:$0xff] %v259
    %301 = vst [vmem:[#allocation2 + $0x20] sm:$0xff] %v263
    %302 = vst [vmem:[#allocation2 + $0x28] sm:$0xff] %v265
    %303 = vst [vmem:[#allocation2 + $0x30] sm:$0xff] %v269
    %304 = vst [vmem:[#allocation2 + $0x38] sm:$0xff] %v271
    %305 = vst [vmem:[#allocation2 + $0x40] sm:$0xff] %v275
    %306 = vst [vmem:[#allocation2 + $0x48] sm:$0xff] %v277
    %307 = vst [vmem:[#allocation2 + $0x50] sm:$0xff] %v281
    %308 = vst [vmem:[#allocation2 + $0x58] sm:$0xff] %v283
    %309 = vst [vmem:[#allocation2 + $0x60] sm:$0xff] %v287
    %310 = vst [vmem:[#allocation2 + $0x68] sm:$0xff] %v289
    %311 = vst [vmem:[#allocation2 + $0x70] sm:$0xff] %v293
    %312 = vst [vmem:[#allocation2 + $0x78] sm:$0xff] %v295
    %v313 = vld [vmem:[%s1] sm:$0xff]
    %v314 = vld [vmem:[%s1 + $0x8] sm:$0xff]
    %v315 = vld [vmem:[%s1 + $0x10] sm:$0xff]
    %v316 = vld [vmem:[%s1 + $0x18] sm:$0xff]
    %v317 = vld [vmem:[%s1 + $0x20] sm:$0xff]
    %v318 = vld [vmem:[%s1 + $0x28] sm:$0xff]
    %v319 = vld [vmem:[%s1 + $0x30] sm:$0xff]
    %v320 = vld [vmem:[%s1 + $0x38] sm:$0xff]
    %v321 = vld [vmem:[%s7] sm:$0xff]
    %v322 = vld [vmem:[#allocation7] sm:$0x1]
    %v324 = vlaneseq
    %v325 = vshrl.u32 %v324, 7
    %v326 = vsub.s32 0, %v325
    %v327 = vrot.slane %v322, %v326
    %v330 = vsel %vm159, %v313, 0
    %v333 = vsel %vm159, %v314, 0
    %v336 = vsel %vm159, %v315, 0
    %v339 = vsel %vm159, %v316, 0
    %v342 = vsel %vm159, %v317, 0
    %v345 = vsel %vm159, %v318, 0
    %v348 = vsel %vm159, %v319, 0
    %v351 = vsel %vm159, %v320, 0
    %353 = vmatprep.subr.mxu0 0.0
    %354 = vmatpush1.msra.mxu0 0.0
    %355 = vmatprep.subr.mxu0 0.0
    %356 = vmatpush1.msra.mxu0 0.0
    %357 = vmatprep.subr.mxu0 0.0
    %358 = vmatpush1.msra.mxu0 0.0
    %359 = vmatprep.subr.mxu0 0.0
    %360 = vmatpush1.msra.mxu0 0.0
    %361 = vmatprep.subr.mxu0 0.0
    %362 = vmatpush1.msra.mxu0 0.0
    %363 = vmatprep.subr.mxu0 0.0
    %364 = vmatpush1.msra.mxu0 0.0
    %365 = vmatprep.subr.mxu0 0.0
    %366 = vmatpush1.msra.mxu0 0.0
    %367 = vmatprep.subr.mxu0 0.0
    %368 = vmatpush1.msra.mxu0 0.0
    %369 = vmatprep.subr.mxu0 0.0
    %370 = vmatpush1.msra.mxu0 0.0
    %371 = vmatprep.subr.mxu0 0.0
    %372 = vmatpush1.msra.mxu0 0.0
    %373 = vmatprep.subr.mxu0 0.0
    %374 = vmatpush1.msra.mxu0 0.0
    %375 = vmatprep.subr.mxu0 0.0
    %376 = vmatpush1.msra.mxu0 0.0
    %377 = vmatprep.subr.mxu0 0.0
    %378 = vmatpush1.msra.mxu0 0.0
    %379 = vmatprep.subr.mxu0 0.0
    %380 = vmatpush1.msra.mxu0 0.0
    %381 = vmatprep.subr.mxu0 0.0
    %382 = vmatpush1.msra.mxu0 0.0
    %383 = vmatprep.subr.mxu0 0.0
    %384 = vmatpush1.msra.mxu0 %v321
    %385 = vmatprep.subr.mxu0 0.0
    %386 = vmatpush2.msra.mxu0 0.0
    %387 = vmatprep.subr.mxu0 0.0
    %388 = vmatpush2.msra.mxu0 0.0
    %389 = vmatprep.subr.mxu0 0.0
    %390 = vmatpush2.msra.mxu0 0.0
    %391 = vmatprep.subr.mxu0 0.0
    %392 = vmatpush2.msra.mxu0 0.0
    %393 = vmatprep.subr.mxu0 0.0
    %394 = vmatpush2.msra.mxu0 0.0
    %395 = vmatprep.subr.mxu0 0.0
    %396 = vmatpush2.msra.mxu0 0.0
    %397 = vmatprep.subr.mxu0 0.0
    %398 = vmatpush2.msra.mxu0 0.0
    %399 = vmatprep.subr.mxu0 0.0
    %400 = vmatpush2.msra.mxu0 0.0
    %401 = vmatprep.subr.mxu0 0.0
    %402 = vmatpush2.msra.mxu0 0.0
    %403 = vmatprep.subr.mxu0 0.0
    %404 = vmatpush2.msra.mxu0 0.0
    %405 = vmatprep.subr.mxu0 0.0
    %406 = vmatpush2.msra.mxu0 0.0
    %407 = vmatprep.subr.mxu0 0.0
    %408 = vmatpush2.msra.mxu0 0.0
    %409 = vmatprep.subr.mxu0 0.0
    %410 = vmatpush2.msra.mxu0 0.0
    %411 = vmatprep.subr.mxu0 0.0
    %412 = vmatpush2.msra.mxu0 0.0
    %413 = vmatprep.subr.mxu0 0.0
    %414 = vmatpush2.msra.mxu0 0.0
    %415 = vmatprep.subr.mxu0 0.0
    %416 = vmatpush2.msra.mxu0 0.0
    %417 = vmatprep.mubr.f32.mxu0 0.0
    %418 = vmatmul.mubr.f32.gmra.mxu0 %v330
    %v419 = vpop.f32.mrf.mxu0
    %v420 = vadd.f32 %v327, %v419
    %v421 = vpop.f32.mrf.mxu0
    %422 = vmatprep.mubr.f32.mxu0 0.0
    %423 = vmatmul.mubr.f32.gmra.mxu0 %v333
    %v424 = vpop.f32.mrf.mxu0
    %v425 = vadd.f32 %v327, %v424
    %v426 = vpop.f32.mrf.mxu0
    %427 = vmatprep.mubr.f32.mxu0 0.0
    %428 = vmatmul.mubr.f32.gmra.mxu0 %v336
    %v429 = vpop.f32.mrf.mxu0
    %v430 = vadd.f32 %v327, %v429
    %v431 = vpop.f32.mrf.mxu0
    %432 = vmatprep.mubr.f32.mxu0 0.0
    %433 = vmatmul.mubr.f32.gmra.mxu0 %v339
    %v434 = vpop.f32.mrf.mxu0
    %v435 = vadd.f32 %v327, %v434
    %v436 = vpop.f32.mrf.mxu0
    %437 = vmatprep.mubr.f32.mxu0 0.0
    %438 = vmatmul.mubr.f32.gmra.mxu0 %v342
    %v439 = vpop.f32.mrf.mxu0
    %v440 = vadd.f32 %v327, %v439
    %v441 = vpop.f32.mrf.mxu0
    %442 = vmatprep.mubr.f32.mxu0 0.0
    %443 = vmatmul.mubr.f32.gmra.mxu0 %v345
    %v444 = vpop.f32.mrf.mxu0
    %v445 = vadd.f32 %v327, %v444
    %v446 = vpop.f32.mrf.mxu0
    %447 = vmatprep.mubr.f32.mxu0 0.0
    %448 = vmatmul.mubr.f32.gmra.mxu0 %v348
    %v449 = vpop.f32.mrf.mxu0
    %v450 = vadd.f32 %v327, %v449
    %v451 = vpop.f32.mrf.mxu0
    %452 = vmatprep.mubr.f32.mxu0 0.0
    %453 = vmatmul.mubr.f32.gmra.mxu0 %v351
    %v454 = vpop.f32.mrf.mxu0
    %v455 = vadd.f32 %v327, %v454
    %v456 = vpop.f32.mrf.mxu0
    %457 = vdwg.mxu0
    %458 = vst [vmem:[#allocation3] sm:$0xff] %v420
    %459 = vst [vmem:[#allocation3 + $0x8] sm:$0xff] %v425
    %460 = vst [vmem:[#allocation3 + $0x10] sm:$0xff] %v430
    %461 = vst [vmem:[#allocation3 + $0x18] sm:$0xff] %v435
    %462 = vst [vmem:[#allocation3 + $0x20] sm:$0xff] %v440
    %463 = vst [vmem:[#allocation3 + $0x28] sm:$0xff] %v445
    %464 = vst [vmem:[#allocation3 + $0x30] sm:$0xff] %v450
    %465 = vst [vmem:[#allocation3 + $0x38] sm:$0xff] %v455
    %v466 = vld [vmem:[%s8] sm:$0xff]
    %v467 = vld [vmem:[%s8 + $0x8] sm:$0xff]
    %v468 = vld [vmem:[%s8 + $0x10] sm:$0xff]
    %v469 = vld [vmem:[%s8 + $0x18] sm:$0xff]
    %v470 = vld [vmem:[%s10] sm:$0xff]
    %v471 = vld [vmem:[%s10 + $0x8] sm:$0xff]
    %v472 = vld [vmem:[%s10 + $0x10] sm:$0xff]
    %v473 = vld [vmem:[%s10 + $0x18] sm:$0xff]
    %v474 = vld [vmem:[%s10 + $0x20] sm:$0xff]
    %v475 = vld [vmem:[%s10 + $0x28] sm:$0xff]
    %v476 = vld [vmem:[%s10 + $0x30] sm:$0xff]
    %v477 = vld [vmem:[%s10 + $0x38] sm:$0xff]
    %v478 = vld [vmem:[#allocation9] sm:$0x1]
    %v480 = vlaneseq
    %v481 = vshrl.u32 %v480, 7
    %v482 = vsub.s32 0, %v481
    %v483 = vrot.slane %v478, %v482
    %s485 = smul.u32 0, 2
    %s486 = smul.addr %s485, 8
    %s487 = scalar_lea.vmem [#allocation2], %s486
    %v488 = vld [vmem:[%s487] sm:$0xff]
    %v489 = vld [vmem:[%s487 + $0x8] sm:$0xff]
    %v490 = vld [vmem:[%s5] sm:$0xff]
    %v491 = vld [vmem:[%s5 + $0x8] sm:$0xff]
    %v492 = vld [vmem:[%s5 + $0x10] sm:$0xff]
    %v493 = vld [vmem:[%s5 + $0x18] sm:$0xff]
    %v494 = vld [vmem:[%s5 + $0x20] sm:$0xff]
    %v495 = vld [vmem:[%s5 + $0x28] sm:$0xff]
    %v496 = vld [vmem:[%s5 + $0x30] sm:$0xff]
    %v497 = vld [vmem:[%s5 + $0x38] sm:$0xff]
    %v498 = vld [vmem:[%s5 + $0x40] sm:$0xff]
    %v499 = vld [vmem:[%s5 + $0x48] sm:$0xff]
    %v500 = vld [vmem:[%s5 + $0x50] sm:$0xff]
    %v501 = vld [vmem:[%s5 + $0x58] sm:$0xff]
    %v502 = vld [vmem:[%s5 + $0x60] sm:$0xff]
    %v503 = vld [vmem:[%s5 + $0x68] sm:$0xff]
    %v504 = vld [vmem:[%s5 + $0x70] sm:$0xff]
    %v505 = vld [vmem:[%s5 + $0x78] sm:$0xff]
    %vm506 = vcmask 523264
    %v508 = vsel %vm506, 0.0, 0
    %510 = vmatprep.subr.mxu0 0.0
    %511 = vmatpush1.msra.mxu0 0.0
    %512 = vmatprep.subr.mxu0 0.0
    %513 = vmatpush1.msra.mxu0 0.0
    %514 = vmatprep.subr.mxu0 0.0
    %515 = vmatpush1.msra.mxu0 0.0
    %516 = vmatprep.subr.mxu0 0.0
    %517 = vmatpush1.msra.mxu0 0.0
    %518 = vmatprep.subr.mxu0 0.0
    %519 = vmatpush1.msra.mxu0 0.0
    %520 = vmatprep.subr.mxu0 0.0
    %521 = vmatpush1.msra.mxu0 0.0
    %522 = vmatprep.subr.mxu0 0.0
    %523 = vmatpush1.msra.mxu0 0.0
    %524 = vmatprep.subr.mxu0 0.0
    %525 = vmatpush1.msra.mxu0 0.0
    %526 = vmatprep.subr.mxu0 %v505
    %527 = vmatpush1.msra.mxu0 %v504
    %528 = vmatprep.subr.mxu0 %v503
    %529 = vmatpush1.msra.mxu0 %v502
    %530 = vmatprep.subr.mxu0 %v501
    %531 = vmatpush1.msra.mxu0 %v500
    %532 = vmatprep.subr.mxu0 %v499
    %533 = vmatpush1.msra.mxu0 %v498
    %534 = vmatprep.subr.mxu0 %v497
    %535 = vmatpush1.msra.mxu0 %v496
    %536 = vmatprep.subr.mxu0 %v495
    %537 = vmatpush1.msra.mxu0 %v494
    %538 = vmatprep.subr.mxu0 %v493
    %539 = vmatpush1.msra.mxu0 %v492
    %540 = vmatprep.subr.mxu0 %v491
    %541 = vmatpush1.msra.mxu0 %v490
    %542 = vmatprep.subr.mxu0 0.0
    %543 = vmatpush2.msra.mxu0 0.0
    %544 = vmatprep.subr.mxu0 0.0
    %545 = vmatpush2.msra.mxu0 0.0
    %546 = vmatprep.subr.mxu0 0.0
    %547 = vmatpush2.msra.mxu0 0.0
    %548 = vmatprep.subr.mxu0 0.0
    %549 = vmatpush2.msra.mxu0 0.0
    %550 = vmatprep.subr.mxu0 0.0
    %551 = vmatpush2.msra.mxu0 0.0
    %552 = vmatprep.subr.mxu0 0.0
    %553 = vmatpush2.msra.mxu0 0.0
    %554 = vmatprep.subr.mxu0 0.0
    %555 = vmatpush2.msra.mxu0 0.0
    %556 = vmatprep.subr.mxu0 0.0
    %557 = vmatpush2.msra.mxu0 0.0
    %558 = vmatprep.subr.mxu0 0.0
    %559 = vmatpush2.msra.mxu0 0.0
    %560 = vmatprep.subr.mxu0 0.0
    %561 = vmatpush2.msra.mxu0 0.0
    %562 = vmatprep.subr.mxu0 0.0
    %563 = vmatpush2.msra.mxu0 0.0
    %564 = vmatprep.subr.mxu0 0.0
    %565 = vmatpush2.msra.mxu0 0.0
    %566 = vmatprep.subr.mxu0 0.0
    %567 = vmatpush2.msra.mxu0 0.0
    %568 = vmatprep.subr.mxu0 0.0
    %569 = vmatpush2.msra.mxu0 0.0
    %570 = vmatprep.subr.mxu0 0.0
    %571 = vmatpush2.msra.mxu0 0.0
    %572 = vmatprep.subr.mxu0 0.0
    %573 = vmatpush2.msra.mxu0 0.0
    %574 = vmatprep.mubr.f32.mxu0 0.0
    %575 = vmatmul.mubr.f32.gmra.mxu0 %v508
    %v576 = vpop.f32.mrf.mxu0
    %v577 = vadd.f32 0.0, %v576
    %v578 = vpop.f32.mrf.mxu0
    %v579 = vadd.f32 0.0, %v578
    %580 = vdwg.mxu0
    %v581 = vadd.f32 %v488, %v577
    %v582 = vadd.f32 %v489, %v579
    %v583 = vld [vmem:[#allocation3] sm:$0xff]
    %vm584 = vcmask 261120
    %v585 = vsel %vm584, 0.0, 0
    %587 = vmatprep.subr.mxu0 0.0
    %588 = vmatpush1.msra.mxu0 0.0
    %589 = vmatprep.subr.mxu0 0.0
    %590 = vmatpush1.msra.mxu0 0.0
    %591 = vmatprep.subr.mxu0 0.0
    %592 = vmatpush1.msra.mxu0 0.0
    %593 = vmatprep.subr.mxu0 0.0
    %594 = vmatpush1.msra.mxu0 0.0
    %595 = vmatprep.subr.mxu0 0.0
    %596 = vmatpush1.msra.mxu0 0.0
    %597 = vmatprep.subr.mxu0 0.0
    %598 = vmatpush1.msra.mxu0 0.0
    %599 = vmatprep.subr.mxu0 0.0
    %600 = vmatpush1.msra.mxu0 0.0
    %601 = vmatprep.subr.mxu0 0.0
    %602 = vmatpush1.msra.mxu0 0.0
    %603 = vmatprep.subr.mxu0 0.0
    %604 = vmatpush1.msra.mxu0 0.0
    %605 = vmatprep.subr.mxu0 0.0
    %606 = vmatpush1.msra.mxu0 0.0
    %607 = vmatprep.subr.mxu0 0.0
    %608 = vmatpush1.msra.mxu0 0.0
    %609 = vmatprep.subr.mxu0 0.0
    %610 = vmatpush1.msra.mxu0 0.0
    %611 = vmatprep.subr.mxu0 0.0
    %612 = vmatpush1.msra.mxu0 %v469
    %613 = vmatprep.subr.mxu0 0.0
    %614 = vmatpush1.msra.mxu0 %v468
    %615 = vmatprep.subr.mxu0 0.0
    %616 = vmatpush1.msra.mxu0 %v467
    %617 = vmatprep.subr.mxu0 0.0
    %618 = vmatpush1.msra.mxu0 %v466
    %619 = vmatprep.subr.mxu0 0.0
    %620 = vmatpush2.msra.mxu0 0.0
    %621 = vmatprep.subr.mxu0 0.0
    %622 = vmatpush2.msra.mxu0 0.0
    %623 = vmatprep.subr.mxu0 0.0
    %624 = vmatpush2.msra.mxu0 0.0
    %625 = vmatprep.subr.mxu0 0.0
    %626 = vmatpush2.msra.mxu0 0.0
    %627 = vmatprep.subr.mxu0 0.0
    %628 = vmatpush2.msra.mxu0 0.0
    %629 = vmatprep.subr.mxu0 0.0
    %630 = vmatpush2.msra.mxu0 0.0
    %631 = vmatprep.subr.mxu0 0.0
    %632 = vmatpush2.msra.mxu0 0.0
    %633 = vmatprep.subr.mxu0 0.0
    %634 = vmatpush2.msra.mxu0 0.0
    %635 = vmatprep.subr.mxu0 0.0
    %636 = vmatpush2.msra.mxu0 0.0
    %637 = vmatprep.subr.mxu0 0.0
    %638 = vmatpush2.msra.mxu0 0.0
    %639 = vmatprep.subr.mxu0 0.0
    %640 = vmatpush2.msra.mxu0 0.0
    %641 = vmatprep.subr.mxu0 0.0
    %642 = vmatpush2.msra.mxu0 0.0
    %643 = vmatprep.subr.mxu0 0.0
    %644 = vmatpush2.msra.mxu0 0.0
    %645 = vmatprep.subr.mxu0 0.0
    %646 = vmatpush2.msra.mxu0 0.0
    %647 = vmatprep.subr.mxu0 0.0
    %648 = vmatpush2.msra.mxu0 0.0
    %649 = vmatprep.subr.mxu0 0.0
    %650 = vmatpush2.msra.mxu0 0.0
    %651 = vmatprep.mubr.f32.mxu0 0.0
    %652 = vmatmul.mubr.f32.gmra.mxu0 %v585
    %v653 = vpop.f32.mrf.mxu0
    %v654 = vadd.f32 0.0, %v653
    %v655 = vpop.f32.mrf.mxu0
    %656 = vdwg.mxu0
    %v657 = vadd.f32 %v583, %v654
    %v658 = vxor.u32 %v581, 2147483648
    %v659 = vxor.u32 %v582, 2147483648
    %v660 = vmul.f32 %v658, 1.442695
    %v661 = vpow.pop %v660
    %v662 = vmul.f32 %v659, 1.442695
    %v663 = vpow.pop %v662
    %v664 = vadd.f32 %v661, 1.0
    %v665 = vadd.f32 %v663, 1.0
    %v666 = vrcp.pop %v664
    %v667 = vmul.f32 1.0, %v666
    %v668 = vrcp.pop %v665
    %v669 = vmul.f32 1.0, %v668
    %v670 = vtanh.pop %v582
    %v671 = vmul.f32 %v667, 0.0
    %v672 = vmul.f32 %v667, %v670
    %674 = vrot.lane.b32.xlu0 %v672, 64
    %v675 = vpop.permute.xlu0 %674
    %v677 = vadd.f32 %v671, %v675
    %v678 = vtanh.pop %v677
    %v679 = vmul.f32 %v669, %v678
    %v680 = vxor.u32 %v657, 2147483648
    %v681 = vmul.f32 %v680, 1.442695
    %v682 = vpow.pop %v681
    %v683 = vadd.f32 %v682, 1.0
    %v684 = vrcp.pop %v683
    %v685 = vmul.f32 1.0, %v684
    %v686 = vtanh.pop %v657
    %v687 = vmul.f32 %v685, 0.0
    %689 = vrot.lane.b32.xlu0 %v686, 64
    %v690 = vpop.permute.xlu0 %689
    %v692 = vmul.f32 %v685, %v690
    %694 = vrot.lane.b32.xlu0 %v692, 32
    %v695 = vpop.permute.xlu0 %694
    %v697 = vadd.f32 %v687, %v695
    %v698 = vtanh.pop %v697
    %700 = vrot.lane.b32.xlu0 %v698, 64
    %v701 = vpop.permute.xlu0 %700
    %v703 = vmul.f32 %v685, %v701
    %705 = vrot.lane.b32.xlu0 %v703, 32
    %v706 = vpop.permute.xlu0 %705
    %v708 = vsel %vm584, %v706, 0.0
    %v710 = vsel %vm506, %v708, 0
    %712 = vmatprep.subr.mxu0 0.0
    %713 = vmatpush1.msra.mxu0 0.0
    %714 = vmatprep.subr.mxu0 0.0
    %715 = vmatpush1.msra.mxu0 0.0
    %716 = vmatprep.subr.mxu0 0.0
    %717 = vmatpush1.msra.mxu0 0.0
    %718 = vmatprep.subr.mxu0 0.0
    %719 = vmatpush1.msra.mxu0 0.0
    %720 = vmatprep.subr.mxu0 0.0
    %721 = vmatpush1.msra.mxu0 0.0
    %722 = vmatprep.subr.mxu0 0.0
    %723 = vmatpush1.msra.mxu0 0.0
    %724 = vmatprep.subr.mxu0 0.0
    %725 = vmatpush1.msra.mxu0 0.0
    %726 = vmatprep.subr.mxu0 0.0
    %727 = vmatpush1.msra.mxu0 0.0
    %728 = vmatprep.subr.mxu0 0.0
    %729 = vmatpush1.msra.mxu0 %v477
    %730 = vmatprep.subr.mxu0 0.0
    %731 = vmatpush1.msra.mxu0 %v476
    %732 = vmatprep.subr.mxu0 0.0
    %733 = vmatpush1.msra.mxu0 %v475
    %734 = vmatprep.subr.mxu0 0.0
    %735 = vmatpush1.msra.mxu0 %v474
    %736 = vmatprep.subr.mxu0 0.0
    %737 = vmatpush1.msra.mxu0 %v473
    %738 = vmatprep.subr.mxu0 0.0
    %739 = vmatpush1.msra.mxu0 %v472
    %740 = vmatprep.subr.mxu0 0.0
    %741 = vmatpush1.msra.mxu0 %v471
    %742 = vmatprep.subr.mxu0 0.0
    %743 = vmatpush1.msra.mxu0 %v470
    %744 = vmatprep.subr.mxu0 0.0
    %745 = vmatpush2.msra.mxu0 0.0
    %746 = vmatprep.subr.mxu0 0.0
    %747 = vmatpush2.msra.mxu0 0.0
    %748 = vmatprep.subr.mxu0 0.0
    %749 = vmatpush2.msra.mxu0 0.0
    %750 = vmatprep.subr.mxu0 0.0
    %751 = vmatpush2.msra.mxu0 0.0
    %752 = vmatprep.subr.mxu0 0.0
    %753 = vmatpush2.msra.mxu0 0.0
    %754 = vmatprep.subr.mxu0 0.0
    %755 = vmatpush2.msra.mxu0 0.0
    %756 = vmatprep.subr.mxu0 0.0
    %757 = vmatpush2.msra.mxu0 0.0
    %758 = vmatprep.subr.mxu0 0.0
    %759 = vmatpush2.msra.mxu0 0.0
    %760 = vmatprep.subr.mxu0 0.0
    %761 = vmatpush2.msra.mxu0 0.0
    %762 = vmatprep.subr.mxu0 0.0
    %763 = vmatpush2.msra.mxu0 0.0
    %764 = vmatprep.subr.mxu0 0.0
    %765 = vmatpush2.msra.mxu0 0.0
    %766 = vmatprep.subr.mxu0 0.0
    %767 = vmatpush2.msra.mxu0 0.0
    %768 = vmatprep.subr.mxu0 0.0
    %769 = vmatpush2.msra.mxu0 0.0
    %770 = vmatprep.subr.mxu0 0.0
    %771 = vmatpush2.msra.mxu0 0.0
    %772 = vmatprep.subr.mxu0 0.0
    %773 = vmatpush2.msra.mxu0 0.0
    %774 = vmatprep.subr.mxu0 0.0
    %775 = vmatpush2.msra.mxu0 0.0
    %776 = vmatprep.mubr.f32.mxu0 0.0
    %777 = vmatmul.mubr.f32.gmra.mxu0 %v710
    %v778 = vpop.f32.mrf.mxu0
    %v779 = vadd.f32 %v483, %v778
    %v780 = vpop.f32.mrf.mxu0
    %781 = vdwg.mxu0
    %v782 = vxor.u32 %v779, 2147483648
    %v783 = vmul.f32 %v782, 1.442695
    %v784 = vpow.pop %v783
    %v785 = vadd.f32 %v784, 1.0
    %v786 = vrcp.pop %v785
    %v787 = vmul.f32 1.0, %v786
    %v788 = vtanh.pop %v779
    %v789 = vmul.f32 %v787, 0.0
    %791 = vrot.lane.b32.xlu0 %v788, 64
    %v792 = vpop.permute.xlu0 %791
    %v794 = vmul.f32 %v787, %v792
    %796 = vrot.lane.b32.xlu0 %v794, 32
    %v797 = vpop.permute.xlu0 %796
    %v799 = vadd.f32 %v789, %v797
    %v800 = vtanh.pop %v799
    %802 = vrot.lane.b32.xlu0 %v800, 64
    %v803 = vpop.permute.xlu0 %802
    %v805 = vmul.f32 %v787, %v803
    %s806 = smul.u32 1, 2
    %s807 = smul.addr %s806, 8
    %s808 = scalar_lea.vmem [#allocation2], %s807
    %v809 = vld [vmem:[%s808] sm:$0xff]
    %v810 = vld [vmem:[%s808 + $0x8] sm:$0xff]
    %812 = vrot.lane.b32.xlu0 %v679, 64
    %v813 = vpop.permute.xlu0 %812
    %v814 = vsel %vm506, %v813, 0
    %816 = vmatprep.subr.mxu0 0.0
    %817 = vmatpush1.msra.mxu0 0.0
    %818 = vmatprep.subr.mxu0 0.0
    %819 = vmatpush1.msra.mxu0 0.0
    %820 = vmatprep.subr.mxu0 0.0
    %821 = vmatpush1.msra.mxu0 0.0
    %822 = vmatprep.subr.mxu0 0.0
    %823 = vmatpush1.msra.mxu0 0.0
    %824 = vmatprep.subr.mxu0 0.0
    %825 = vmatpush1.msra.mxu0 0.0
    %826 = vmatprep.subr.mxu0 0.0
    %827 = vmatpush1.msra.mxu0 0.0
    %828 = vmatprep.subr.mxu0 0.0
    %829 = vmatpush1.msra.mxu0 0.0
    %830 = vmatprep.subr.mxu0 0.0
    %831 = vmatpush1.msra.mxu0 0.0
    %832 = vmatprep.subr.mxu0 %v505
    %833 = vmatpush1.msra.mxu0 %v504
    %834 = vmatprep.subr.mxu0 %v503
    %835 = vmatpush1.msra.mxu0 %v502
    %836 = vmatprep.subr.mxu0 %v501
    %837 = vmatpush1.msra.mxu0 %v500
    %838 = vmatprep.subr.mxu0 %v499
    %839 = vmatpush1.msra.mxu0 %v498
    %840 = vmatprep.subr.mxu0 %v497
    %841 = vmatpush1.msra.mxu0 %v496
    %842 = vmatprep.subr.mxu0 %v495
    %843 = vmatpush1.msra.mxu0 %v494
    %844 = vmatprep.subr.mxu0 %v493
    %845 = vmatpush1.msra.mxu0 %v492
    %846 = vmatprep.subr.mxu0 %v491
    %847 = vmatpush1.msra.mxu0 %v490
    %848 = vmatprep.subr.mxu0 0.0
    %849 = vmatpush2.msra.mxu0 0.0
    %850 = vmatprep.subr.mxu0 0.0
    %851 = vmatpush2.msra.mxu0 0.0
    %852 = vmatprep.subr.mxu0 0.0
    %853 = vmatpush2.msra.mxu0 0.0
    %854 = vmatprep.subr.mxu0 0.0
    %855 = vmatpush2.msra.mxu0 0.0
    %856 = vmatprep.subr.mxu0 0.0
    %857 = vmatpush2.msra.mxu0 0.0
    %858 = vmatprep.subr.mxu0 0.0
    %859 = vmatpush2.msra.mxu0 0.0
    %860 = vmatprep.subr.mxu0 0.0
    %861 = vmatpush2.msra.mxu0 0.0
    %862 = vmatprep.subr.mxu0 0.0
    %863 = vmatpush2.msra.mxu0 0.0
    %864 = vmatprep.subr.mxu0 0.0
    %865 = vmatpush2.msra.mxu0 0.0
    %866 = vmatprep.subr.mxu0 0.0
    %867 = vmatpush2.msra.mxu0 0.0
    %868 = vmatprep.subr.mxu0 0.0
    %869 = vmatpush2.msra.mxu0 0.0
    %870 = vmatprep.subr.mxu0 0.0
    %871 = vmatpush2.msra.mxu0 0.0
    %872 = vmatprep.subr.mxu0 0.0
    %873 = vmatpush2.msra.mxu0 0.0
    %874 = vmatprep.subr.mxu0 0.0
    %875 = vmatpush2.msra.mxu0 0.0
    %876 = vmatprep.subr.mxu0 0.0
    %877 = vmatpush2.msra.mxu0 0.0
    %878 = vmatprep.subr.mxu0 0.0
    %879 = vmatpush2.msra.mxu0 0.0
    %880 = vmatprep.mubr.f32.mxu0 0.0
    %881 = vmatmul.mubr.f32.gmra.mxu0 %v814
    %v882 = vpop.f32.mrf.mxu0
    %v883 = vadd.f32 0.0, %v882
    %v884 = vpop.f32.mrf.mxu0
    %v885 = vadd.f32 0.0, %v884
    %886 = vdwg.mxu0
    %v887 = vadd.f32 %v809, %v883
    %v888 = vadd.f32 %v810, %v885
    %s889 = scalar_lea.vmem [#allocation3], 8
    %v890 = vld [vmem:[%s889] sm:$0xff]
    %v891 = vsel %vm584, %v706, 0
    %893 = vmatprep.subr.mxu0 0.0
    %894 = vmatpush1.msra.mxu0 0.0
    %895 = vmatprep.subr.mxu0 0.0
    %896 = vmatpush1.msra.mxu0 0.0
    %897 = vmatprep.subr.mxu0 0.0
    %898 = vmatpush1.msra.mxu0 0.0
    %899 = vmatprep.subr.mxu0 0.0
    %900 = vmatpush1.msra.mxu0 0.0
    %901 = vmatprep.subr.mxu0 0.0
    %902 = vmatpush1.msra.mxu0 0.0
    %903 = vmatprep.subr.mxu0 0.0
    %904 = vmatpush1.msra.mxu0 0.0
    %905 = vmatprep.subr.mxu0 0.0
    %906 = vmatpush1.msra.mxu0 0.0
    %907 = vmatprep.subr.mxu0 0.0
    %908 = vmatpush1.msra.mxu0 0.0
    %909 = vmatprep.subr.mxu0 0.0
    %910 = vmatpush1.msra.mxu0 0.0
    %911 = vmatprep.subr.mxu0 0.0
    %912 = vmatpush1.msra.mxu0 0.0
    %913 = vmatprep.subr.mxu0 0.0
    %914 = vmatpush1.msra.mxu0 0.0
    %915 = vmatprep.subr.mxu0 0.0
    %916 = vmatpush1.msra.mxu0 0.0
    %917 = vmatprep.subr.mxu0 0.0
    %918 = vmatpush1.msra.mxu0 %v469
    %919 = vmatprep.subr.mxu0 0.0
    %920 = vmatpush1.msra.mxu0 %v468
    %921 = vmatprep.subr.mxu0 0.0
    %922 = vmatpush1.msra.mxu0 %v467
    %923 = vmatprep.subr.mxu0 0.0
    %924 = vmatpush1.msra.mxu0 %v466
    %925 = vmatprep.subr.mxu0 0.0
    %926 = vmatpush2.msra.mxu0 0.0
    %927 = vmatprep.subr.mxu0 0.0
    %928 = vmatpush2.msra.mxu0 0.0
    %929 = vmatprep.subr.mxu0 0.0
    %930 = vmatpush2.msra.mxu0 0.0
    %931 = vmatprep.subr.mxu0 0.0
    %932 = vmatpush2.msra.mxu0 0.0
    %933 = vmatprep.subr.mxu0 0.0
    %934 = vmatpush2.msra.mxu0 0.0
    %935 = vmatprep.subr.mxu0 0.0
    %936 = vmatpush2.msra.mxu0 0.0
    %937 = vmatprep.subr.mxu0 0.0
    %938 = vmatpush2.msra.mxu0 0.0
    %939 = vmatprep.subr.mxu0 0.0
    %940 = vmatpush2.msra.mxu0 0.0
    %941 = vmatprep.subr.mxu0 0.0
    %942 = vmatpush2.msra.mxu0 0.0
    %943 = vmatprep.subr.mxu0 0.0
    %944 = vmatpush2.msra.mxu0 0.0
    %945 = vmatprep.subr.mxu0 0.0
    %946 = vmatpush2.msra.mxu0 0.0
    %947 = vmatprep.subr.mxu0 0.0
    %948 = vmatpush2.msra.mxu0 0.0
    %949 = vmatprep.subr.mxu0 0.0
    %950 = vmatpush2.msra.mxu0 0.0
    %951 = vmatprep.subr.mxu0 0.0
    %952 = vmatpush2.msra.mxu0 0.0
    %953 = vmatprep.subr.mxu0 0.0
    %954 = vmatpush2.msra.mxu0 0.0
    %955 = vmatprep.subr.mxu0 0.0
    %956 = vmatpush2.msra.mxu0 0.0
    %957 = vmatprep.mubr.f32.mxu0 0.0
    %958 = vmatmul.mubr.f32.gmra.mxu0 %v891
    %v959 = vpop.f32.mrf.mxu0
    %v960 = vadd.f32 0.0, %v959
    %v961 = vpop.f32.mrf.mxu0
    %962 = vdwg.mxu0
    %v963 = vadd.f32 %v890, %v960
    %v964 = vxor.u32 %v887, 2147483648
    %v965 = vxor.u32 %v888, 2147483648
    %v966 = vmul.f32 %v964, 1.442695
    %v967 = vpow.pop %v966
    %v968 = vmul.f32 %v965, 1.442695
    %v969 = vpow.pop %v968
    %v970 = vadd.f32 %v967, 1.0
    %v971 = vadd.f32 %v969, 1.0
    %v972 = vrcp.pop %v970
    %v973 = vmul.f32 1.0, %v972
    %v974 = vrcp.pop %v971
    %v975 = vmul.f32 1.0, %v974
    %v976 = vtanh.pop %v888
    %v977 = vmul.f32 %v973, %v677
    %v978 = vmul.f32 %v973, %v976
    %980 = vrot.lane.b32.xlu0 %v978, 64
    %v981 = vpop.permute.xlu0 %980
    %v983 = vadd.f32 %v977, %v981
    %v984 = vtanh.pop %v983
    %v985 = vmul.f32 %v975, %v984
    %v986 = vxor.u32 %v963, 2147483648
    %v987 = vmul.f32 %v986, 1.442695
    %v988 = vpow.pop %v987
    %v989 = vadd.f32 %v988, 1.0
    %v990 = vrcp.pop %v989
    %v991 = vmul.f32 1.0, %v990
    %v992 = vtanh.pop %v963
    %v993 = vmul.f32 %v991, %v697
    %995 = vrot.lane.b32.xlu0 %v992, 64
    %v996 = vpop.permute.xlu0 %995
    %v998 = vmul.f32 %v991, %v996
    %1000 = vrot.lane.b32.xlu0 %v998, 32
    %v1001 = vpop.permute.xlu0 %1000
    %v1003 = vadd.f32 %v993, %v1001
    %v1004 = vtanh.pop %v1003
    %1006 = vrot.lane.b32.xlu0 %v1004, 64
    %v1007 = vpop.permute.xlu0 %1006
    %v1009 = vmul.f32 %v991, %v1007
    %1011 = vrot.lane.b32.xlu0 %v1009, 32
    %v1012 = vpop.permute.xlu0 %1011
    %1015 = vrot.lane.b32.xlu0 %v805, 64
    %v1016 = vpop.permute.xlu0 %1015
    %v1018 = vsel %vm584, %v1012, %v1016
    %v1020 = vsel %vm506, %v1018, 0
    %1022 = vmatprep.subr.mxu0 0.0
    %1023 = vmatpush1.msra.mxu0 0.0
    %1024 = vmatprep.subr.mxu0 0.0
    %1025 = vmatpush1.msra.mxu0 0.0
    %1026 = vmatprep.subr.mxu0 0.0
    %1027 = vmatpush1.msra.mxu0 0.0
    %1028 = vmatprep.subr.mxu0 0.0
    %1029 = vmatpush1.msra.mxu0 0.0
    %1030 = vmatprep.subr.mxu0 0.0
    %1031 = vmatpush1.msra.mxu0 0.0
    %1032 = vmatprep.subr.mxu0 0.0
    %1033 = vmatpush1.msra.mxu0 0.0
    %1034 = vmatprep.subr.mxu0 0.0
    %1035 = vmatpush1.msra.mxu0 0.0
    %1036 = vmatprep.subr.mxu0 0.0
    %1037 = vmatpush1.msra.mxu0 0.0
    %1038 = vmatprep.subr.mxu0 0.0
    %1039 = vmatpush1.msra.mxu0 %v477
    %1040 = vmatprep.subr.mxu0 0.0
    %1041 = vmatpush1.msra.mxu0 %v476
    %1042 = vmatprep.subr.mxu0 0.0
    %1043 = vmatpush1.msra.mxu0 %v475
    %1044 = vmatprep.subr.mxu0 0.0
    %1045 = vmatpush1.msra.mxu0 %v474
    %1046 = vmatprep.subr.mxu0 0.0
    %1047 = vmatpush1.msra.mxu0 %v473
    %1048 = vmatprep.subr.mxu0 0.0
    %1049 = vmatpush1.msra.mxu0 %v472
    %1050 = vmatprep.subr.mxu0 0.0
    %1051 = vmatpush1.msra.mxu0 %v471
    %1052 = vmatprep.subr.mxu0 0.0
    %1053 = vmatpush1.msra.mxu0 %v470
    %1054 = vmatprep.subr.mxu0 0.0
    %1055 = vmatpush2.msra.mxu0 0.0
    %1056 = vmatprep.subr.mxu0 0.0
    %1057 = vmatpush2.msra.mxu0 0.0
    %1058 = vmatprep.subr.mxu0 0.0
    %1059 = vmatpush2.msra.mxu0 0.0
    %1060 = vmatprep.subr.mxu0 0.0
    %1061 = vmatpush2.msra.mxu0 0.0
    %1062 = vmatprep.subr.mxu0 0.0
    %1063 = vmatpush2.msra.mxu0 0.0
    %1064 = vmatprep.subr.mxu0 0.0
    %1065 = vmatpush2.msra.mxu0 0.0
    %1066 = vmatprep.subr.mxu0 0.0
    %1067 = vmatpush2.msra.mxu0 0.0
    %1068 = vmatprep.subr.mxu0 0.0
    %1069 = vmatpush2.msra.mxu0 0.0
    %1070 = vmatprep.subr.mxu0 0.0
    %1071 = vmatpush2.msra.mxu0 0.0
    %1072 = vmatprep.subr.mxu0 0.0
    %1073 = vmatpush2.msra.mxu0 0.0
    %1074 = vmatprep.subr.mxu0 0.0
    %1075 = vmatpush2.msra.mxu0 0.0
    %1076 = vmatprep.subr.mxu0 0.0
    %1077 = vmatpush2.msra.mxu0 0.0
    %1078 = vmatprep.subr.mxu0 0.0
    %1079 = vmatpush2.msra.mxu0 0.0
    %1080 = vmatprep.subr.mxu0 0.0
    %1081 = vmatpush2.msra.mxu0 0.0
    %1082 = vmatprep.subr.mxu0 0.0
    %1083 = vmatpush2.msra.mxu0 0.0
    %1084 = vmatprep.subr.mxu0 0.0
    %1085 = vmatpush2.msra.mxu0 0.0
    %1086 = vmatprep.mubr.f32.mxu0 0.0
    %1087 = vmatmul.mubr.f32.gmra.mxu0 %v1020
    %v1088 = vpop.f32.mrf.mxu0
    %v1089 = vadd.f32 %v483, %v1088
    %v1090 = vpop.f32.mrf.mxu0
    %1091 = vdwg.mxu0
    %v1092 = vxor.u32 %v1089, 2147483648
    %v1093 = vmul.f32 %v1092, 1.442695
    %v1094 = vpow.pop %v1093
    %v1095 = vadd.f32 %v1094, 1.0
    %v1096 = vrcp.pop %v1095
    %v1097 = vmul.f32 1.0, %v1096
    %v1098 = vtanh.pop %v1089
    %v1099 = vmul.f32 %v1097, %v799
    %1101 = vrot.lane.b32.xlu0 %v1098, 64
    %v1102 = vpop.permute.xlu0 %1101
    %v1104 = vmul.f32 %v1097, %v1102
    %1106 = vrot.lane.b32.xlu0 %v1104, 32
    %v1107 = vpop.permute.xlu0 %1106
    %v1109 = vadd.f32 %v1099, %v1107
    %v1110 = vtanh.pop %v1109
    %1112 = vrot.lane.b32.xlu0 %v1110, 64
    %v1113 = vpop.permute.xlu0 %1112
    %v1115 = vmul.f32 %v1097, %v1113
    %s1116 = smul.u32 2, 2
    %s1117 = smul.addr %s1116, 8
    %s1118 = scalar_lea.vmem [#allocation2], %s1117
    %v1119 = vld [vmem:[%s1118] sm:$0xff]
    %v1120 = vld [vmem:[%s1118 + $0x8] sm:$0xff]
    %1122 = vrot.lane.b32.xlu0 %v985, 64
    %v1123 = vpop.permute.xlu0 %1122
    %v1124 = vsel %vm506, %v1123, 0
    %1126 = vmatprep.subr.mxu0 0.0
    %1127 = vmatpush1.msra.mxu0 0.0
    %1128 = vmatprep.subr.mxu0 0.0
    %1129 = vmatpush1.msra.mxu0 0.0
    %1130 = vmatprep.subr.mxu0 0.0
    %1131 = vmatpush1.msra.mxu0 0.0
    %1132 = vmatprep.subr.mxu0 0.0
    %1133 = vmatpush1.msra.mxu0 0.0
    %1134 = vmatprep.subr.mxu0 0.0
    %1135 = vmatpush1.msra.mxu0 0.0
    %1136 = vmatprep.subr.mxu0 0.0
    %1137 = vmatpush1.msra.mxu0 0.0
    %1138 = vmatprep.subr.mxu0 0.0
    %1139 = vmatpush1.msra.mxu0 0.0
    %1140 = vmatprep.subr.mxu0 0.0
    %1141 = vmatpush1.msra.mxu0 0.0
    %1142 = vmatprep.subr.mxu0 %v505
    %1143 = vmatpush1.msra.mxu0 %v504
    %1144 = vmatprep.subr.mxu0 %v503
    %1145 = vmatpush1.msra.mxu0 %v502
    %1146 = vmatprep.subr.mxu0 %v501
    %1147 = vmatpush1.msra.mxu0 %v500
    %1148 = vmatprep.subr.mxu0 %v499
    %1149 = vmatpush1.msra.mxu0 %v498
    %1150 = vmatprep.subr.mxu0 %v497
    %1151 = vmatpush1.msra.mxu0 %v496
    %1152 = vmatprep.subr.mxu0 %v495
    %1153 = vmatpush1.msra.mxu0 %v494
    %1154 = vmatprep.subr.mxu0 %v493
    %1155 = vmatpush1.msra.mxu0 %v492
    %1156 = vmatprep.subr.mxu0 %v491
    %1157 = vmatpush1.msra.mxu0 %v490
    %1158 = vmatprep.subr.mxu0 0.0
    %1159 = vmatpush2.msra.mxu0 0.0
    %1160 = vmatprep.subr.mxu0 0.0
    %1161 = vmatpush2.msra.mxu0 0.0
    %1162 = vmatprep.subr.mxu0 0.0
    %1163 = vmatpush2.msra.mxu0 0.0
    %1164 = vmatprep.subr.mxu0 0.0
    %1165 = vmatpush2.msra.mxu0 0.0
    %1166 = vmatprep.subr.mxu0 0.0
    %1167 = vmatpush2.msra.mxu0 0.0
    %1168 = vmatprep.subr.mxu0 0.0
    %1169 = vmatpush2.msra.mxu0 0.0
    %1170 = vmatprep.subr.mxu0 0.0
    %1171 = vmatpush2.msra.mxu0 0.0
    %1172 = vmatprep.subr.mxu0 0.0
    %1173 = vmatpush2.msra.mxu0 0.0
    %1174 = vmatprep.subr.mxu0 0.0
    %1175 = vmatpush2.msra.mxu0 0.0
    %1176 = vmatprep.subr.mxu0 0.0
    %1177 = vmatpush2.msra.mxu0 0.0
    %1178 = vmatprep.subr.mxu0 0.0
    %1179 = vmatpush2.msra.mxu0 0.0
    %1180 = vmatprep.subr.mxu0 0.0
    %1181 = vmatpush2.msra.mxu0 0.0
    %1182 = vmatprep.subr.mxu0 0.0
    %1183 = vmatpush2.msra.mxu0 0.0
    %1184 = vmatprep.subr.mxu0 0.0
    %1185 = vmatpush2.msra.mxu0 0.0
    %1186 = vmatprep.subr.mxu0 0.0
    %1187 = vmatpush2.msra.mxu0 0.0
    %1188 = vmatprep.subr.mxu0 0.0
    %1189 = vmatpush2.msra.mxu0 0.0
    %1190 = vmatprep.mubr.f32.mxu0 0.0
    %1191 = vmatmul.mubr.f32.gmra.mxu0 %v1124
    %v1192 = vpop.f32.mrf.mxu0
    %v1193 = vadd.f32 0.0, %v1192
    %v1194 = vpop.f32.mrf.mxu0
    %v1195 = vadd.f32 0.0, %v1194
    %1196 = vdwg.mxu0
    %v1197 = vadd.f32 %v1119, %v1193
    %v1198 = vadd.f32 %v1120, %v1195
    %s1199 = scalar_lea.vmem [#allocation3], 16
    %v1200 = vld [vmem:[%s1199] sm:$0xff]
    %v1201 = vsel %vm584, %v1012, 0
    %1203 = vmatprep.subr.mxu0 0.0
    %1204 = vmatpush1.msra.mxu0 0.0
    %1205 = vmatprep.subr.mxu0 0.0
    %1206 = vmatpush1.msra.mxu0 0.0
    %1207 = vmatprep.subr.mxu0 0.0
    %1208 = vmatpush1.msra.mxu0 0.0
    %1209 = vmatprep.subr.mxu0 0.0
    %1210 = vmatpush1.msra.mxu0 0.0
    %1211 = vmatprep.subr.mxu0 0.0
    %1212 = vmatpush1.msra.mxu0 0.0
    %1213 = vmatprep.subr.mxu0 0.0
    %1214 = vmatpush1.msra.mxu0 0.0
    %1215 = vmatprep.subr.mxu0 0.0
    %1216 = vmatpush1.msra.mxu0 0.0
    %1217 = vmatprep.subr.mxu0 0.0
    %1218 = vmatpush1.msra.mxu0 0.0
    %1219 = vmatprep.subr.mxu0 0.0
    %1220 = vmatpush1.msra.mxu0 0.0
    %1221 = vmatprep.subr.mxu0 0.0
    %1222 = vmatpush1.msra.mxu0 0.0
    %1223 = vmatprep.subr.mxu0 0.0
    %1224 = vmatpush1.msra.mxu0 0.0
    %1225 = vmatprep.subr.mxu0 0.0
    %1226 = vmatpush1.msra.mxu0 0.0
    %1227 = vmatprep.subr.mxu0 0.0
    %1228 = vmatpush1.msra.mxu0 %v469
    %1229 = vmatprep.subr.mxu0 0.0
    %1230 = vmatpush1.msra.mxu0 %v468
    %1231 = vmatprep.subr.mxu0 0.0
    %1232 = vmatpush1.msra.mxu0 %v467
    %1233 = vmatprep.subr.mxu0 0.0
    %1234 = vmatpush1.msra.mxu0 %v466
    %1235 = vmatprep.subr.mxu0 0.0
    %1236 = vmatpush2.msra.mxu0 0.0
    %1237 = vmatprep.subr.mxu0 0.0
    %1238 = vmatpush2.msra.mxu0 0.0
    %1239 = vmatprep.subr.mxu0 0.0
    %1240 = vmatpush2.msra.mxu0 0.0
    %1241 = vmatprep.subr.mxu0 0.0
    %1242 = vmatpush2.msra.mxu0 0.0
    %1243 = vmatprep.subr.mxu0 0.0
    %1244 = vmatpush2.msra.mxu0 0.0
    %1245 = vmatprep.subr.mxu0 0.0
    %1246 = vmatpush2.msra.mxu0 0.0
    %1247 = vmatprep.subr.mxu0 0.0
    %1248 = vmatpush2.msra.mxu0 0.0
    %1249 = vmatprep.subr.mxu0 0.0
    %1250 = vmatpush2.msra.mxu0 0.0
    %1251 = vmatprep.subr.mxu0 0.0
    %1252 = vmatpush2.msra.mxu0 0.0
    %1253 = vmatprep.subr.mxu0 0.0
    %1254 = vmatpush2.msra.mxu0 0.0
    %1255 = vmatprep.subr.mxu0 0.0
    %1256 = vmatpush2.msra.mxu0 0.0
    %1257 = vmatprep.subr.mxu0 0.0
    %1258 = vmatpush2.msra.mxu0 0.0
    %1259 = vmatprep.subr.mxu0 0.0
    %1260 = vmatpush2.msra.mxu0 0.0
    %1261 = vmatprep.subr.mxu0 0.0
    %1262 = vmatpush2.msra.mxu0 0.0
    %1263 = vmatprep.subr.mxu0 0.0
    %1264 = vmatpush2.msra.mxu0 0.0
    %1265 = vmatprep.subr.mxu0 0.0
    %1266 = vmatpush2.msra.mxu0 0.0
    %1267 = vmatprep.mubr.f32.mxu0 0.0
    %1268 = vmatmul.mubr.f32.gmra.mxu0 %v1201
    %v1269 = vpop.f32.mrf.mxu0
    %v1270 = vadd.f32 0.0, %v1269
    %v1271 = vpop.f32.mrf.mxu0
    %1272 = vdwg.mxu0
    %v1273 = vadd.f32 %v1200, %v1270
    %v1274 = vxor.u32 %v1197, 2147483648
    %v1275 = vxor.u32 %v1198, 2147483648
    %v1276 = vmul.f32 %v1274, 1.442695
    %v1277 = vpow.pop %v1276
    %v1278 = vmul.f32 %v1275, 1.442695
    %v1279 = vpow.pop %v1278
    %v1280 = vadd.f32 %v1277, 1.0
    %v1281 = vadd.f32 %v1279, 1.0
    %v1282 = vrcp.pop %v1280
    %v1283 = vmul.f32 1.0, %v1282
    %v1284 = vrcp.pop %v1281
    %v1285 = vmul.f32 1.0, %v1284
    %v1286 = vtanh.pop %v1198
    %v1287 = vmul.f32 %v1283, %v983
    %v1288 = vmul.f32 %v1283, %v1286
    %1290 = vrot.lane.b32.xlu0 %v1288, 64
    %v1291 = vpop.permute.xlu0 %1290
    %v1293 = vadd.f32 %v1287, %v1291
    %v1294 = vtanh.pop %v1293
    %v1295 = vmul.f32 %v1285, %v1294
    %v1296 = vxor.u32 %v1273, 2147483648
    %v1297 = vmul.f32 %v1296, 1.442695
    %v1298 = vpow.pop %v1297
    %v1299 = vadd.f32 %v1298, 1.0
    %v1300 = vrcp.pop %v1299
    %v1301 = vmul.f32 1.0, %v1300
    %v1302 = vtanh.pop %v1273
    %v1303 = vmul.f32 %v1301, %v1003
    %1305 = vrot.lane.b32.xlu0 %v1302, 64
    %v1306 = vpop.permute.xlu0 %1305
    %v1308 = vmul.f32 %v1301, %v1306
    %1310 = vrot.lane.b32.xlu0 %v1308, 32
    %v1311 = vpop.permute.xlu0 %1310
    %v1313 = vadd.f32 %v1303, %v1311
    %v1314 = vtanh.pop %v1313
    %1316 = vrot.lane.b32.xlu0 %v1314, 64
    %v1317 = vpop.permute.xlu0 %1316
    %v1319 = vmul.f32 %v1301, %v1317
    %1321 = vrot.lane.b32.xlu0 %v1319, 32
    %v1322 = vpop.permute.xlu0 %1321
    %1325 = vrot.lane.b32.xlu0 %v1115, 64
    %v1326 = vpop.permute.xlu0 %1325
    %v1328 = vsel %vm584, %v1322, %v1326
    %v1330 = vsel %vm506, %v1328, 0
    %1332 = vmatprep.subr.mxu0 0.0
    %1333 = vmatpush1.msra.mxu0 0.0
    %1334 = vmatprep.subr.mxu0 0.0
    %1335 = vmatpush1.msra.mxu0 0.0
    %1336 = vmatprep.subr.mxu0 0.0
    %1337 = vmatpush1.msra.mxu0 0.0
    %1338 = vmatprep.subr.mxu0 0.0
    %1339 = vmatpush1.msra.mxu0 0.0
    %1340 = vmatprep.subr.mxu0 0.0
    %1341 = vmatpush1.msra.mxu0 0.0
    %1342 = vmatprep.subr.mxu0 0.0
    %1343 = vmatpush1.msra.mxu0 0.0
    %1344 = vmatprep.subr.mxu0 0.0
    %1345 = vmatpush1.msra.mxu0 0.0
    %1346 = vmatprep.subr.mxu0 0.0
    %1347 = vmatpush1.msra.mxu0 0.0
    %1348 = vmatprep.subr.mxu0 0.0
    %1349 = vmatpush1.msra.mxu0 %v477
    %1350 = vmatprep.subr.mxu0 0.0
    %1351 = vmatpush1.msra.mxu0 %v476
    %1352 = vmatprep.subr.mxu0 0.0
    %1353 = vmatpush1.msra.mxu0 %v475
    %1354 = vmatprep.subr.mxu0 0.0
    %1355 = vmatpush1.msra.mxu0 %v474
    %1356 = vmatprep.subr.mxu0 0.0
    %1357 = vmatpush1.msra.mxu0 %v473
    %1358 = vmatprep.subr.mxu0 0.0
    %1359 = vmatpush1.msra.mxu0 %v472
    %1360 = vmatprep.subr.mxu0 0.0
    %1361 = vmatpush1.msra.mxu0 %v471
    %1362 = vmatprep.subr.mxu0 0.0
    %1363 = vmatpush1.msra.mxu0 %v470
    %1364 = vmatprep.subr.mxu0 0.0
    %1365 = vmatpush2.msra.mxu0 0.0
    %1366 = vmatprep.subr.mxu0 0.0
    %1367 = vmatpush2.msra.mxu0 0.0
    %1368 = vmatprep.subr.mxu0 0.0
    %1369 = vmatpush2.msra.mxu0 0.0
    %1370 = vmatprep.subr.mxu0 0.0
    %1371 = vmatpush2.msra.mxu0 0.0
    %1372 = vmatprep.subr.mxu0 0.0
    %1373 = vmatpush2.msra.mxu0 0.0
    %1374 = vmatprep.subr.mxu0 0.0
    %1375 = vmatpush2.msra.mxu0 0.0
    %1376 = vmatprep.subr.mxu0 0.0
    %1377 = vmatpush2.msra.mxu0 0.0
    %1378 = vmatprep.subr.mxu0 0.0
    %1379 = vmatpush2.msra.mxu0 0.0
    %1380 = vmatprep.subr.mxu0 0.0
    %1381 = vmatpush2.msra.mxu0 0.0
    %1382 = vmatprep.subr.mxu0 0.0
    %1383 = vmatpush2.msra.mxu0 0.0
    %1384 = vmatprep.subr.mxu0 0.0
    %1385 = vmatpush2.msra.mxu0 0.0
    %1386 = vmatprep.subr.mxu0 0.0
    %1387 = vmatpush2.msra.mxu0 0.0
    %1388 = vmatprep.subr.mxu0 0.0
    %1389 = vmatpush2.msra.mxu0 0.0
    %1390 = vmatprep.subr.mxu0 0.0
    %1391 = vmatpush2.msra.mxu0 0.0
    %1392 = vmatprep.subr.mxu0 0.0
    %1393 = vmatpush2.msra.mxu0 0.0
    %1394 = vmatprep.subr.mxu0 0.0
    %1395 = vmatpush2.msra.mxu0 0.0
    %1396 = vmatprep.mubr.f32.mxu0 0.0
    %1397 = vmatmul.mubr.f32.gmra.mxu0 %v1330
    %v1398 = vpop.f32.mrf.mxu0
    %v1399 = vadd.f32 %v483, %v1398
    %v1400 = vpop.f32.mrf.mxu0
    %1401 = vdwg.mxu0
    %v1402 = vxor.u32 %v1399, 2147483648
    %v1403 = vmul.f32 %v1402, 1.442695
    %v1404 = vpow.pop %v1403
    %v1405 = vadd.f32 %v1404, 1.0
    %v1406 = vrcp.pop %v1405
    %v1407 = vmul.f32 1.0, %v1406
    %v1408 = vtanh.pop %v1399
    %v1409 = vmul.f32 %v1407, %v1109
    %1411 = vrot.lane.b32.xlu0 %v1408, 64
    %v1412 = vpop.permute.xlu0 %1411
    %v1414 = vmul.f32 %v1407, %v1412
    %1416 = vrot.lane.b32.xlu0 %v1414, 32
    %v1417 = vpop.permute.xlu0 %1416
    %v1419 = vadd.f32 %v1409, %v1417
    %v1420 = vtanh.pop %v1419
    %1422 = vrot.lane.b32.xlu0 %v1420, 64
    %v1423 = vpop.permute.xlu0 %1422
    %v1425 = vmul.f32 %v1407, %v1423
    %s1426 = smul.u32 3, 2
    %s1427 = smul.addr %s1426, 8
    %s1428 = scalar_lea.vmem [#allocation2], %s1427
    %v1429 = vld [vmem:[%s1428] sm:$0xff]
    %v1430 = vld [vmem:[%s1428 + $0x8] sm:$0xff]
    %1432 = vrot.lane.b32.xlu0 %v1295, 64
    %v1433 = vpop.permute.xlu0 %1432
    %v1434 = vsel %vm506, %v1433, 0
    %1436 = vmatprep.subr.mxu0 0.0
    %1437 = vmatpush1.msra.mxu0 0.0
    %1438 = vmatprep.subr.mxu0 0.0
    %1439 = vmatpush1.msra.mxu0 0.0
    %1440 = vmatprep.subr.mxu0 0.0
    %1441 = vmatpush1.msra.mxu0 0.0
    %1442 = vmatprep.subr.mxu0 0.0
    %1443 = vmatpush1.msra.mxu0 0.0
    %1444 = vmatprep.subr.mxu0 0.0
    %1445 = vmatpush1.msra.mxu0 0.0
    %1446 = vmatprep.subr.mxu0 0.0
    %1447 = vmatpush1.msra.mxu0 0.0
    %1448 = vmatprep.subr.mxu0 0.0
    %1449 = vmatpush1.msra.mxu0 0.0
    %1450 = vmatprep.subr.mxu0 0.0
    %1451 = vmatpush1.msra.mxu0 0.0
    %1452 = vmatprep.subr.mxu0 %v505
    %1453 = vmatpush1.msra.mxu0 %v504
    %1454 = vmatprep.subr.mxu0 %v503
    %1455 = vmatpush1.msra.mxu0 %v502
    %1456 = vmatprep.subr.mxu0 %v501
    %1457 = vmatpush1.msra.mxu0 %v500
    %1458 = vmatprep.subr.mxu0 %v499
    %1459 = vmatpush1.msra.mxu0 %v498
    %1460 = vmatprep.subr.mxu0 %v497
    %1461 = vmatpush1.msra.mxu0 %v496
    %1462 = vmatprep.subr.mxu0 %v495
    %1463 = vmatpush1.msra.mxu0 %v494
    %1464 = vmatprep.subr.mxu0 %v493
    %1465 = vmatpush1.msra.mxu0 %v492
    %1466 = vmatprep.subr.mxu0 %v491
    %1467 = vmatpush1.msra.mxu0 %v490
    %1468 = vmatprep.subr.mxu0 0.0
    %1469 = vmatpush2.msra.mxu0 0.0
    %1470 = vmatprep.subr.mxu0 0.0
    %1471 = vmatpush2.msra.mxu0 0.0
    %1472 = vmatprep.subr.mxu0 0.0
    %1473 = vmatpush2.msra.mxu0 0.0
    %1474 = vmatprep.subr.mxu0 0.0
    %1475 = vmatpush2.msra.mxu0 0.0
    %1476 = vmatprep.subr.mxu0 0.0
    %1477 = vmatpush2.msra.mxu0 0.0
    %1478 = vmatprep.subr.mxu0 0.0
    %1479 = vmatpush2.msra.mxu0 0.0
    %1480 = vmatprep.subr.mxu0 0.0
    %1481 = vmatpush2.msra.mxu0 0.0
    %1482 = vmatprep.subr.mxu0 0.0
    %1483 = vmatpush2.msra.mxu0 0.0
    %1484 = vmatprep.subr.mxu0 0.0
    %1485 = vmatpush2.msra.mxu0 0.0
    %1486 = vmatprep.subr.mxu0 0.0
    %1487 = vmatpush2.msra.mxu0 0.0
    %1488 = vmatprep.subr.mxu0 0.0
    %1489 = vmatpush2.msra.mxu0 0.0
    %1490 = vmatprep.subr.mxu0 0.0
    %1491 = vmatpush2.msra.mxu0 0.0
    %1492 = vmatprep.subr.mxu0 0.0
    %1493 = vmatpush2.msra.mxu0 0.0
    %1494 = vmatprep.subr.mxu0 0.0
    %1495 = vmatpush2.msra.mxu0 0.0
    %1496 = vmatprep.subr.mxu0 0.0
    %1497 = vmatpush2.msra.mxu0 0.0
    %1498 = vmatprep.subr.mxu0 0.0
    %1499 = vmatpush2.msra.mxu0 0.0
    %1500 = vmatprep.mubr.f32.mxu0 0.0
    %1501 = vmatmul.mubr.f32.gmra.mxu0 %v1434
    %v1502 = vpop.f32.mrf.mxu0
    %v1503 = vadd.f32 0.0, %v1502
    %v1504 = vpop.f32.mrf.mxu0
    %v1505 = vadd.f32 0.0, %v1504
    %1506 = vdwg.mxu0
    %v1507 = vadd.f32 %v1429, %v1503
    %v1508 = vadd.f32 %v1430, %v1505
    %s1509 = scalar_lea.vmem [#allocation3], 24
    %v1510 = vld [vmem:[%s1509] sm:$0xff]
    %v1511 = vsel %vm584, %v1322, 0
    %1513 = vmatprep.subr.mxu0 0.0
    %1514 = vmatpush1.msra.mxu0 0.0
    %1515 = vmatprep.subr.mxu0 0.0
    %1516 = vmatpush1.msra.mxu0 0.0
    %1517 = vmatprep.subr.mxu0 0.0
    %1518 = vmatpush1.msra.mxu0 0.0
    %1519 = vmatprep.subr.mxu0 0.0
    %1520 = vmatpush1.msra.mxu0 0.0
    %1521 = vmatprep.subr.mxu0 0.0
    %1522 = vmatpush1.msra.mxu0 0.0
    %1523 = vmatprep.subr.mxu0 0.0
    %1524 = vmatpush1.msra.mxu0 0.0
    %1525 = vmatprep.subr.mxu0 0.0
    %1526 = vmatpush1.msra.mxu0 0.0
    %1527 = vmatprep.subr.mxu0 0.0
    %1528 = vmatpush1.msra.mxu0 0.0
    %1529 = vmatprep.subr.mxu0 0.0
    %1530 = vmatpush1.msra.mxu0 0.0
    %1531 = vmatprep.subr.mxu0 0.0
    %1532 = vmatpush1.msra.mxu0 0.0
    %1533 = vmatprep.subr.mxu0 0.0
    %1534 = vmatpush1.msra.mxu0 0.0
    %1535 = vmatprep.subr.mxu0 0.0
    %1536 = vmatpush1.msra.mxu0 0.0
    %1537 = vmatprep.subr.mxu0 0.0
    %1538 = vmatpush1.msra.mxu0 %v469
    %1539 = vmatprep.subr.mxu0 0.0
    %1540 = vmatpush1.msra.mxu0 %v468
    %1541 = vmatprep.subr.mxu0 0.0
    %1542 = vmatpush1.msra.mxu0 %v467
    %1543 = vmatprep.subr.mxu0 0.0
    %1544 = vmatpush1.msra.mxu0 %v466
    %1545 = vmatprep.subr.mxu0 0.0
    %1546 = vmatpush2.msra.mxu0 0.0
    %1547 = vmatprep.subr.mxu0 0.0
    %1548 = vmatpush2.msra.mxu0 0.0
    %1549 = vmatprep.subr.mxu0 0.0
    %1550 = vmatpush2.msra.mxu0 0.0
    %1551 = vmatprep.subr.mxu0 0.0
    %1552 = vmatpush2.msra.mxu0 0.0
    %1553 = vmatprep.subr.mxu0 0.0
    %1554 = vmatpush2.msra.mxu0 0.0
    %1555 = vmatprep.subr.mxu0 0.0
    %1556 = vmatpush2.msra.mxu0 0.0
    %1557 = vmatprep.subr.mxu0 0.0
    %1558 = vmatpush2.msra.mxu0 0.0
    %1559 = vmatprep.subr.mxu0 0.0
    %1560 = vmatpush2.msra.mxu0 0.0
    %1561 = vmatprep.subr.mxu0 0.0
    %1562 = vmatpush2.msra.mxu0 0.0
    %1563 = vmatprep.subr.mxu0 0.0
    %1564 = vmatpush2.msra.mxu0 0.0
    %1565 = vmatprep.subr.mxu0 0.0
    %1566 = vmatpush2.msra.mxu0 0.0
    %1567 = vmatprep.subr.mxu0 0.0
    %1568 = vmatpush2.msra.mxu0 0.0
    %1569 = vmatprep.subr.mxu0 0.0
    %1570 = vmatpush2.msra.mxu0 0.0
    %1571 = vmatprep.subr.mxu0 0.0
    %1572 = vmatpush2.msra.mxu0 0.0
    %1573 = vmatprep.subr.mxu0 0.0
    %1574 = vmatpush2.msra.mxu0 0.0
    %1575 = vmatprep.subr.mxu0 0.0
    %1576 = vmatpush2.msra.mxu0 0.0
    %1577 = vmatprep.mubr.f32.mxu0 0.0
    %1578 = vmatmul.mubr.f32.gmra.mxu0 %v1511
    %v1579 = vpop.f32.mrf.mxu0
    %v1580 = vadd.f32 0.0, %v1579
    %v1581 = vpop.f32.mrf.mxu0
    %1582 = vdwg.mxu0
    %v1583 = vadd.f32 %v1510, %v1580
    %v1584 = vxor.u32 %v1507, 2147483648
    %v1585 = vxor.u32 %v1508, 2147483648
    %v1586 = vmul.f32 %v1584, 1.442695
    %v1587 = vpow.pop %v1586
    %v1588 = vmul.f32 %v1585, 1.442695
    %v1589 = vpow.pop %v1588
    %v1590 = vadd.f32 %v1587, 1.0
    %v1591 = vadd.f32 %v1589, 1.0
    %v1592 = vrcp.pop %v1590
    %v1593 = vmul.f32 1.0, %v1592
    %v1594 = vrcp.pop %v1591
    %v1595 = vmul.f32 1.0, %v1594
    %v1596 = vtanh.pop %v1508
    %v1597 = vmul.f32 %v1593, %v1293
    %v1598 = vmul.f32 %v1593, %v1596
    %1600 = vrot.lane.b32.xlu0 %v1598, 64
    %v1601 = vpop.permute.xlu0 %1600
    %v1603 = vadd.f32 %v1597, %v1601
    %v1604 = vtanh.pop %v1603
    %v1605 = vmul.f32 %v1595, %v1604
    %v1606 = vxor.u32 %v1583, 2147483648
    %v1607 = vmul.f32 %v1606, 1.442695
    %v1608 = vpow.pop %v1607
    %v1609 = vadd.f32 %v1608, 1.0
    %v1610 = vrcp.pop %v1609
    %v1611 = vmul.f32 1.0, %v1610
    %v1612 = vtanh.pop %v1583
    %v1613 = vmul.f32 %v1611, %v1313
    %1615 = vrot.lane.b32.xlu0 %v1612, 64
    %v1616 = vpop.permute.xlu0 %1615
    %v1618 = vmul.f32 %v1611, %v1616
    %1620 = vrot.lane.b32.xlu0 %v1618, 32
    %v1621 = vpop.permute.xlu0 %1620
    %v1623 = vadd.f32 %v1613, %v1621
    %v1624 = vtanh.pop %v1623
    %1626 = vrot.lane.b32.xlu0 %v1624, 64
    %v1627 = vpop.permute.xlu0 %1626
    %v1629 = vmul.f32 %v1611, %v1627
    %1631 = vrot.lane.b32.xlu0 %v1629, 32
    %v1632 = vpop.permute.xlu0 %1631
    %1635 = vrot.lane.b32.xlu0 %v1425, 64
    %v1636 = vpop.permute.xlu0 %1635
    %v1638 = vsel %vm584, %v1632, %v1636
    %v1640 = vsel %vm506, %v1638, 0
    %1642 = vmatprep.subr.mxu0 0.0
    %1643 = vmatpush1.msra.mxu0 0.0
    %1644 = vmatprep.subr.mxu0 0.0
    %1645 = vmatpush1.msra.mxu0 0.0
    %1646 = vmatprep.subr.mxu0 0.0
    %1647 = vmatpush1.msra.mxu0 0.0
    %1648 = vmatprep.subr.mxu0 0.0
    %1649 = vmatpush1.msra.mxu0 0.0
    %1650 = vmatprep.subr.mxu0 0.0
    %1651 = vmatpush1.msra.mxu0 0.0
    %1652 = vmatprep.subr.mxu0 0.0
    %1653 = vmatpush1.msra.mxu0 0.0
    %1654 = vmatprep.subr.mxu0 0.0
    %1655 = vmatpush1.msra.mxu0 0.0
    %1656 = vmatprep.subr.mxu0 0.0
    %1657 = vmatpush1.msra.mxu0 0.0
    %1658 = vmatprep.subr.mxu0 0.0
    %1659 = vmatpush1.msra.mxu0 %v477
    %1660 = vmatprep.subr.mxu0 0.0
    %1661 = vmatpush1.msra.mxu0 %v476
    %1662 = vmatprep.subr.mxu0 0.0
    %1663 = vmatpush1.msra.mxu0 %v475
    %1664 = vmatprep.subr.mxu0 0.0
    %1665 = vmatpush1.msra.mxu0 %v474
    %1666 = vmatprep.subr.mxu0 0.0
    %1667 = vmatpush1.msra.mxu0 %v473
    %1668 = vmatprep.subr.mxu0 0.0
    %1669 = vmatpush1.msra.mxu0 %v472
    %1670 = vmatprep.subr.mxu0 0.0
    %1671 = vmatpush1.msra.mxu0 %v471
    %1672 = vmatprep.subr.mxu0 0.0
    %1673 = vmatpush1.msra.mxu0 %v470
    %1674 = vmatprep.subr.mxu0 0.0
    %1675 = vmatpush2.msra.mxu0 0.0
    %1676 = vmatprep.subr.mxu0 0.0
    %1677 = vmatpush2.msra.mxu0 0.0
    %1678 = vmatprep.subr.mxu0 0.0
    %1679 = vmatpush2.msra.mxu0 0.0
    %1680 = vmatprep.subr.mxu0 0.0
    %1681 = vmatpush2.msra.mxu0 0.0
    %1682 = vmatprep.subr.mxu0 0.0
    %1683 = vmatpush2.msra.mxu0 0.0
    %1684 = vmatprep.subr.mxu0 0.0
    %1685 = vmatpush2.msra.mxu0 0.0
    %1686 = vmatprep.subr.mxu0 0.0
    %1687 = vmatpush2.msra.mxu0 0.0
    %1688 = vmatprep.subr.mxu0 0.0
    %1689 = vmatpush2.msra.mxu0 0.0
    %1690 = vmatprep.subr.mxu0 0.0
    %1691 = vmatpush2.msra.mxu0 0.0
    %1692 = vmatprep.subr.mxu0 0.0
    %1693 = vmatpush2.msra.mxu0 0.0
    %1694 = vmatprep.subr.mxu0 0.0
    %1695 = vmatpush2.msra.mxu0 0.0
    %1696 = vmatprep.subr.mxu0 0.0
    %1697 = vmatpush2.msra.mxu0 0.0
    %1698 = vmatprep.subr.mxu0 0.0
    %1699 = vmatpush2.msra.mxu0 0.0
    %1700 = vmatprep.subr.mxu0 0.0
    %1701 = vmatpush2.msra.mxu0 0.0
    %1702 = vmatprep.subr.mxu0 0.0
    %1703 = vmatpush2.msra.mxu0 0.0
    %1704 = vmatprep.subr.mxu0 0.0
    %1705 = vmatpush2.msra.mxu0 0.0
    %1706 = vmatprep.mubr.f32.mxu0 0.0
    %1707 = vmatmul.mubr.f32.gmra.mxu0 %v1640
    %v1708 = vpop.f32.mrf.mxu0
    %v1709 = vadd.f32 %v483, %v1708
    %v1710 = vpop.f32.mrf.mxu0
    %1711 = vdwg.mxu0
    %v1712 = vxor.u32 %v1709, 2147483648
    %v1713 = vmul.f32 %v1712, 1.442695
    %v1714 = vpow.pop %v1713
    %v1715 = vadd.f32 %v1714, 1.0
    %v1716 = vrcp.pop %v1715
    %v1717 = vmul.f32 1.0, %v1716
    %v1718 = vtanh.pop %v1709
    %v1719 = vmul.f32 %v1717, %v1419
    %1721 = vrot.lane.b32.xlu0 %v1718, 64
    %v1722 = vpop.permute.xlu0 %1721
    %v1724 = vmul.f32 %v1717, %v1722
    %1726 = vrot.lane.b32.xlu0 %v1724, 32
    %v1727 = vpop.permute.xlu0 %1726
    %v1729 = vadd.f32 %v1719, %v1727
    %v1730 = vtanh.pop %v1729
    %1732 = vrot.lane.b32.xlu0 %v1730, 64
    %v1733 = vpop.permute.xlu0 %1732
    %v1735 = vmul.f32 %v1717, %v1733
    %s1736 = smul.u32 4, 2
    %s1737 = smul.addr %s1736, 8
    %s1738 = scalar_lea.vmem [#allocation2], %s1737
    %v1739 = vld [vmem:[%s1738] sm:$0xff]
    %v1740 = vld [vmem:[%s1738 + $0x8] sm:$0xff]
    %1742 = vrot.lane.b32.xlu0 %v1605, 64
    %v1743 = vpop.permute.xlu0 %1742
    %v1744 = vsel %vm506, %v1743, 0
    %1746 = vmatprep.subr.mxu0 0.0
    %1747 = vmatpush1.msra.mxu0 0.0
    %1748 = vmatprep.subr.mxu0 0.0
    %1749 = vmatpush1.msra.mxu0 0.0
    %1750 = vmatprep.subr.mxu0 0.0
    %1751 = vmatpush1.msra.mxu0 0.0
    %1752 = vmatprep.subr.mxu0 0.0
    %1753 = vmatpush1.msra.mxu0 0.0
    %1754 = vmatprep.subr.mxu0 0.0
    %1755 = vmatpush1.msra.mxu0 0.0
    %1756 = vmatprep.subr.mxu0 0.0
    %1757 = vmatpush1.msra.mxu0 0.0
    %1758 = vmatprep.subr.mxu0 0.0
    %1759 = vmatpush1.msra.mxu0 0.0
    %1760 = vmatprep.subr.mxu0 0.0
    %1761 = vmatpush1.msra.mxu0 0.0
    %1762 = vmatprep.subr.mxu0 %v505
    %1763 = vmatpush1.msra.mxu0 %v504
    %1764 = vmatprep.subr.mxu0 %v503
    %1765 = vmatpush1.msra.mxu0 %v502
    %1766 = vmatprep.subr.mxu0 %v501
    %1767 = vmatpush1.msra.mxu0 %v500
    %1768 = vmatprep.subr.mxu0 %v499
    %1769 = vmatpush1.msra.mxu0 %v498
    %1770 = vmatprep.subr.mxu0 %v497
    %1771 = vmatpush1.msra.mxu0 %v496
    %1772 = vmatprep.subr.mxu0 %v495
    %1773 = vmatpush1.msra.mxu0 %v494
    %1774 = vmatprep.subr.mxu0 %v493
    %1775 = vmatpush1.msra.mxu0 %v492
    %1776 = vmatprep.subr.mxu0 %v491
    %1777 = vmatpush1.msra.mxu0 %v490
    %1778 = vmatprep.subr.mxu0 0.0
    %1779 = vmatpush2.msra.mxu0 0.0
    %1780 = vmatprep.subr.mxu0 0.0
    %1781 = vmatpush2.msra.mxu0 0.0
    %1782 = vmatprep.subr.mxu0 0.0
    %1783 = vmatpush2.msra.mxu0 0.0
    %1784 = vmatprep.subr.mxu0 0.0
    %1785 = vmatpush2.msra.mxu0 0.0
    %1786 = vmatprep.subr.mxu0 0.0
    %1787 = vmatpush2.msra.mxu0 0.0
    %1788 = vmatprep.subr.mxu0 0.0
    %1789 = vmatpush2.msra.mxu0 0.0
    %1790 = vmatprep.subr.mxu0 0.0
    %1791 = vmatpush2.msra.mxu0 0.0
    %1792 = vmatprep.subr.mxu0 0.0
    %1793 = vmatpush2.msra.mxu0 0.0
    %1794 = vmatprep.subr.mxu0 0.0
    %1795 = vmatpush2.msra.mxu0 0.0
    %1796 = vmatprep.subr.mxu0 0.0
    %1797 = vmatpush2.msra.mxu0 0.0
    %1798 = vmatprep.subr.mxu0 0.0
    %1799 = vmatpush2.msra.mxu0 0.0
    %1800 = vmatprep.subr.mxu0 0.0
    %1801 = vmatpush2.msra.mxu0 0.0
    %1802 = vmatprep.subr.mxu0 0.0
    %1803 = vmatpush2.msra.mxu0 0.0
    %1804 = vmatprep.subr.mxu0 0.0
    %1805 = vmatpush2.msra.mxu0 0.0
    %1806 = vmatprep.subr.mxu0 0.0
    %1807 = vmatpush2.msra.mxu0 0.0
    %1808 = vmatprep.subr.mxu0 0.0
    %1809 = vmatpush2.msra.mxu0 0.0
    %1810 = vmatprep.mubr.f32.mxu0 0.0
    %1811 = vmatmul.mubr.f32.gmra.mxu0 %v1744
    %v1812 = vpop.f32.mrf.mxu0
    %v1813 = vadd.f32 0.0, %v1812
    %v1814 = vpop.f32.mrf.mxu0
    %v1815 = vadd.f32 0.0, %v1814
    %1816 = vdwg.mxu0
    %v1817 = vadd.f32 %v1739, %v1813
    %v1818 = vadd.f32 %v1740, %v1815
    %s1819 = scalar_lea.vmem [#allocation3], 32
    %v1820 = vld [vmem:[%s1819] sm:$0xff]
    %v1821 = vsel %vm584, %v1632, 0
    %1823 = vmatprep.subr.mxu0 0.0
    %1824 = vmatpush1.msra.mxu0 0.0
    %1825 = vmatprep.subr.mxu0 0.0
    %1826 = vmatpush1.msra.mxu0 0.0
    %1827 = vmatprep.subr.mxu0 0.0
    %1828 = vmatpush1.msra.mxu0 0.0
    %1829 = vmatprep.subr.mxu0 0.0
    %1830 = vmatpush1.msra.mxu0 0.0
    %1831 = vmatprep.subr.mxu0 0.0
    %1832 = vmatpush1.msra.mxu0 0.0
    %1833 = vmatprep.subr.mxu0 0.0
    %1834 = vmatpush1.msra.mxu0 0.0
    %1835 = vmatprep.subr.mxu0 0.0
    %1836 = vmatpush1.msra.mxu0 0.0
    %1837 = vmatprep.subr.mxu0 0.0
    %1838 = vmatpush1.msra.mxu0 0.0
    %1839 = vmatprep.subr.mxu0 0.0
    %1840 = vmatpush1.msra.mxu0 0.0
    %1841 = vmatprep.subr.mxu0 0.0
    %1842 = vmatpush1.msra.mxu0 0.0
    %1843 = vmatprep.subr.mxu0 0.0
    %1844 = vmatpush1.msra.mxu0 0.0
    %1845 = vmatprep.subr.mxu0 0.0
    %1846 = vmatpush1.msra.mxu0 0.0
    %1847 = vmatprep.subr.mxu0 0.0
    %1848 = vmatpush1.msra.mxu0 %v469
    %1849 = vmatprep.subr.mxu0 0.0
    %1850 = vmatpush1.msra.mxu0 %v468
    %1851 = vmatprep.subr.mxu0 0.0
    %1852 = vmatpush1.msra.mxu0 %v467
    %1853 = vmatprep.subr.mxu0 0.0
    %1854 = vmatpush1.msra.mxu0 %v466
    %1855 = vmatprep.subr.mxu0 0.0
    %1856 = vmatpush2.msra.mxu0 0.0
    %1857 = vmatprep.subr.mxu0 0.0
    %1858 = vmatpush2.msra.mxu0 0.0
    %1859 = vmatprep.subr.mxu0 0.0
    %1860 = vmatpush2.msra.mxu0 0.0
    %1861 = vmatprep.subr.mxu0 0.0
    %1862 = vmatpush2.msra.mxu0 0.0
    %1863 = vmatprep.subr.mxu0 0.0
    %1864 = vmatpush2.msra.mxu0 0.0
    %1865 = vmatprep.subr.mxu0 0.0
    %1866 = vmatpush2.msra.mxu0 0.0
    %1867 = vmatprep.subr.mxu0 0.0
    %1868 = vmatpush2.msra.mxu0 0.0
    %1869 = vmatprep.subr.mxu0 0.0
    %1870 = vmatpush2.msra.mxu0 0.0
    %1871 = vmatprep.subr.mxu0 0.0
    %1872 = vmatpush2.msra.mxu0 0.0
    %1873 = vmatprep.subr.mxu0 0.0
    %1874 = vmatpush2.msra.mxu0 0.0
    %1875 = vmatprep.subr.mxu0 0.0
    %1876 = vmatpush2.msra.mxu0 0.0
    %1877 = vmatprep.subr.mxu0 0.0
    %1878 = vmatpush2.msra.mxu0 0.0
    %1879 = vmatprep.subr.mxu0 0.0
    %1880 = vmatpush2.msra.mxu0 0.0
    %1881 = vmatprep.subr.mxu0 0.0
    %1882 = vmatpush2.msra.mxu0 0.0
    %1883 = vmatprep.subr.mxu0 0.0
    %1884 = vmatpush2.msra.mxu0 0.0
    %1885 = vmatprep.subr.mxu0 0.0
    %1886 = vmatpush2.msra.mxu0 0.0
    %1887 = vmatprep.mubr.f32.mxu0 0.0
    %1888 = vmatmul.mubr.f32.gmra.mxu0 %v1821
    %v1889 = vpop.f32.mrf.mxu0
    %v1890 = vadd.f32 0.0, %v1889
    %v1891 = vpop.f32.mrf.mxu0
    %1892 = vdwg.mxu0
    %v1893 = vadd.f32 %v1820, %v1890
    %v1894 = vxor.u32 %v1817, 2147483648
    %v1895 = vxor.u32 %v1818, 2147483648
    %v1896 = vmul.f32 %v1894, 1.442695
    %v1897 = vpow.pop %v1896
    %v1898 = vmul.f32 %v1895, 1.442695
    %v1899 = vpow.pop %v1898
    %v1900 = vadd.f32 %v1897, 1.0
    %v1901 = vadd.f32 %v1899, 1.0
    %v1902 = vrcp.pop %v1900
    %v1903 = vmul.f32 1.0, %v1902
    %v1904 = vrcp.pop %v1901
    %v1905 = vmul.f32 1.0, %v1904
    %v1906 = vtanh.pop %v1818
    %v1907 = vmul.f32 %v1903, %v1603
    %v1908 = vmul.f32 %v1903, %v1906
    %1910 = vrot.lane.b32.xlu0 %v1908, 64
    %v1911 = vpop.permute.xlu0 %1910
    %v1913 = vadd.f32 %v1907, %v1911
    %v1914 = vtanh.pop %v1913
    %v1915 = vmul.f32 %v1905, %v1914
    %v1916 = vxor.u32 %v1893, 2147483648
    %v1917 = vmul.f32 %v1916, 1.442695
    %v1918 = vpow.pop %v1917
    %v1919 = vadd.f32 %v1918, 1.0
    %v1920 = vrcp.pop %v1919
    %v1921 = vmul.f32 1.0, %v1920
    %v1922 = vtanh.pop %v1893
    %v1923 = vmul.f32 %v1921, %v1623
    %1925 = vrot.lane.b32.xlu0 %v1922, 64
    %v1926 = vpop.permute.xlu0 %1925
    %v1928 = vmul.f32 %v1921, %v1926
    %1930 = vrot.lane.b32.xlu0 %v1928, 32
    %v1931 = vpop.permute.xlu0 %1930
    %v1933 = vadd.f32 %v1923, %v1931
    %v1934 = vtanh.pop %v1933
    %1936 = vrot.lane.b32.xlu0 %v1934, 64
    %v1937 = vpop.permute.xlu0 %1936
    %v1939 = vmul.f32 %v1921, %v1937
    %1941 = vrot.lane.b32.xlu0 %v1939, 32
    %v1942 = vpop.permute.xlu0 %1941
    %1945 = vrot.lane.b32.xlu0 %v1735, 64
    %v1946 = vpop.permute.xlu0 %1945
    %v1948 = vsel %vm584, %v1942, %v1946
    %v1950 = vsel %vm506, %v1948, 0
    %1952 = vmatprep.subr.mxu0 0.0
    %1953 = vmatpush1.msra.mxu0 0.0
    %1954 = vmatprep.subr.mxu0 0.0
    %1955 = vmatpush1.msra.mxu0 0.0
    %1956 = vmatprep.subr.mxu0 0.0
    %1957 = vmatpush1.msra.mxu0 0.0
    %1958 = vmatprep.subr.mxu0 0.0
    %1959 = vmatpush1.msra.mxu0 0.0
    %1960 = vmatprep.subr.mxu0 0.0
    %1961 = vmatpush1.msra.mxu0 0.0
    %1962 = vmatprep.subr.mxu0 0.0
    %1963 = vmatpush1.msra.mxu0 0.0
    %1964 = vmatprep.subr.mxu0 0.0
    %1965 = vmatpush1.msra.mxu0 0.0
    %1966 = vmatprep.subr.mxu0 0.0
    %1967 = vmatpush1.msra.mxu0 0.0
    %1968 = vmatprep.subr.mxu0 0.0
    %1969 = vmatpush1.msra.mxu0 %v477
    %1970 = vmatprep.subr.mxu0 0.0
    %1971 = vmatpush1.msra.mxu0 %v476
    %1972 = vmatprep.subr.mxu0 0.0
    %1973 = vmatpush1.msra.mxu0 %v475
    %1974 = vmatprep.subr.mxu0 0.0
    %1975 = vmatpush1.msra.mxu0 %v474
    %1976 = vmatprep.subr.mxu0 0.0
    %1977 = vmatpush1.msra.mxu0 %v473
    %1978 = vmatprep.subr.mxu0 0.0
    %1979 = vmatpush1.msra.mxu0 %v472
    %1980 = vmatprep.subr.mxu0 0.0
    %1981 = vmatpush1.msra.mxu0 %v471
    %1982 = vmatprep.subr.mxu0 0.0
    %1983 = vmatpush1.msra.mxu0 %v470
    %1984 = vmatprep.subr.mxu0 0.0
    %1985 = vmatpush2.msra.mxu0 0.0
    %1986 = vmatprep.subr.mxu0 0.0
    %1987 = vmatpush2.msra.mxu0 0.0
    %1988 = vmatprep.subr.mxu0 0.0
    %1989 = vmatpush2.msra.mxu0 0.0
    %1990 = vmatprep.subr.mxu0 0.0
    %1991 = vmatpush2.msra.mxu0 0.0
    %1992 = vmatprep.subr.mxu0 0.0
    %1993 = vmatpush2.msra.mxu0 0.0
    %1994 = vmatprep.subr.mxu0 0.0
    %1995 = vmatpush2.msra.mxu0 0.0
    %1996 = vmatprep.subr.mxu0 0.0
    %1997 = vmatpush2.msra.mxu0 0.0
    %1998 = vmatprep.subr.mxu0 0.0
    %1999 = vmatpush2.msra.mxu0 0.0
    %2000 = vmatprep.subr.mxu0 0.0
    %2001 = vmatpush2.msra.mxu0 0.0
    %2002 = vmatprep.subr.mxu0 0.0
    %2003 = vmatpush2.msra.mxu0 0.0
    %2004 = vmatprep.subr.mxu0 0.0
    %2005 = vmatpush2.msra.mxu0 0.0
    %2006 = vmatprep.subr.mxu0 0.0
    %2007 = vmatpush2.msra.mxu0 0.0
    %2008 = vmatprep.subr.mxu0 0.0
    %2009 = vmatpush2.msra.mxu0 0.0
    %2010 = vmatprep.subr.mxu0 0.0
    %2011 = vmatpush2.msra.mxu0 0.0
    %2012 = vmatprep.subr.mxu0 0.0
    %2013 = vmatpush2.msra.mxu0 0.0
    %2014 = vmatprep.subr.mxu0 0.0
    %2015 = vmatpush2.msra.mxu0 0.0
    %2016 = vmatprep.mubr.f32.mxu0 0.0
    %2017 = vmatmul.mubr.f32.gmra.mxu0 %v1950
    %v2018 = vpop.f32.mrf.mxu0
    %v2019 = vadd.f32 %v483, %v2018
    %v2020 = vpop.f32.mrf.mxu0
    %2021 = vdwg.mxu0
    %v2022 = vxor.u32 %v2019, 2147483648
    %v2023 = vmul.f32 %v2022, 1.442695
    %v2024 = vpow.pop %v2023
    %v2025 = vadd.f32 %v2024, 1.0
    %v2026 = vrcp.pop %v2025
    %v2027 = vmul.f32 1.0, %v2026
    %v2028 = vtanh.pop %v2019
    %v2029 = vmul.f32 %v2027, %v1729
    %2031 = vrot.lane.b32.xlu0 %v2028, 64
    %v2032 = vpop.permute.xlu0 %2031
    %v2034 = vmul.f32 %v2027, %v2032
    %2036 = vrot.lane.b32.xlu0 %v2034, 32
    %v2037 = vpop.permute.xlu0 %2036
    %v2039 = vadd.f32 %v2029, %v2037
    %v2040 = vtanh.pop %v2039
    %2042 = vrot.lane.b32.xlu0 %v2040, 64
    %v2043 = vpop.permute.xlu0 %2042
    %v2045 = vmul.f32 %v2027, %v2043
    %s2046 = smul.u32 5, 2
    %s2047 = smul.addr %s2046, 8
    %s2048 = scalar_lea.vmem [#allocation2], %s2047
    %v2049 = vld [vmem:[%s2048] sm:$0xff]
    %v2050 = vld [vmem:[%s2048 + $0x8] sm:$0xff]
    %2052 = vrot.lane.b32.xlu0 %v1915, 64
    %v2053 = vpop.permute.xlu0 %2052
    %v2054 = vsel %vm506, %v2053, 0
    %2056 = vmatprep.subr.mxu0 0.0
    %2057 = vmatpush1.msra.mxu0 0.0
    %2058 = vmatprep.subr.mxu0 0.0
    %2059 = vmatpush1.msra.mxu0 0.0
    %2060 = vmatprep.subr.mxu0 0.0
    %2061 = vmatpush1.msra.mxu0 0.0
    %2062 = vmatprep.subr.mxu0 0.0
    %2063 = vmatpush1.msra.mxu0 0.0
    %2064 = vmatprep.subr.mxu0 0.0
    %2065 = vmatpush1.msra.mxu0 0.0
    %2066 = vmatprep.subr.mxu0 0.0
    %2067 = vmatpush1.msra.mxu0 0.0
    %2068 = vmatprep.subr.mxu0 0.0
    %2069 = vmatpush1.msra.mxu0 0.0
    %2070 = vmatprep.subr.mxu0 0.0
    %2071 = vmatpush1.msra.mxu0 0.0
    %2072 = vmatprep.subr.mxu0 %v505
    %2073 = vmatpush1.msra.mxu0 %v504
    %2074 = vmatprep.subr.mxu0 %v503
    %2075 = vmatpush1.msra.mxu0 %v502
    %2076 = vmatprep.subr.mxu0 %v501
    %2077 = vmatpush1.msra.mxu0 %v500
    %2078 = vmatprep.subr.mxu0 %v499
    %2079 = vmatpush1.msra.mxu0 %v498
    %2080 = vmatprep.subr.mxu0 %v497
    %2081 = vmatpush1.msra.mxu0 %v496
    %2082 = vmatprep.subr.mxu0 %v495
    %2083 = vmatpush1.msra.mxu0 %v494
    %2084 = vmatprep.subr.mxu0 %v493
    %2085 = vmatpush1.msra.mxu0 %v492
    %2086 = vmatprep.subr.mxu0 %v491
    %2087 = vmatpush1.msra.mxu0 %v490
    %2088 = vmatprep.subr.mxu0 0.0
    %2089 = vmatpush2.msra.mxu0 0.0
    %2090 = vmatprep.subr.mxu0 0.0
    %2091 = vmatpush2.msra.mxu0 0.0
    %2092 = vmatprep.subr.mxu0 0.0
    %2093 = vmatpush2.msra.mxu0 0.0
    %2094 = vmatprep.subr.mxu0 0.0
    %2095 = vmatpush2.msra.mxu0 0.0
    %2096 = vmatprep.subr.mxu0 0.0
    %2097 = vmatpush2.msra.mxu0 0.0
    %2098 = vmatprep.subr.mxu0 0.0
    %2099 = vmatpush2.msra.mxu0 0.0
    %2100 = vmatprep.subr.mxu0 0.0
    %2101 = vmatpush2.msra.mxu0 0.0
    %2102 = vmatprep.subr.mxu0 0.0
    %2103 = vmatpush2.msra.mxu0 0.0
    %2104 = vmatprep.subr.mxu0 0.0
    %2105 = vmatpush2.msra.mxu0 0.0
    %2106 = vmatprep.subr.mxu0 0.0
    %2107 = vmatpush2.msra.mxu0 0.0
    %2108 = vmatprep.subr.mxu0 0.0
    %2109 = vmatpush2.msra.mxu0 0.0
    %2110 = vmatprep.subr.mxu0 0.0
    %2111 = vmatpush2.msra.mxu0 0.0
    %2112 = vmatprep.subr.mxu0 0.0
    %2113 = vmatpush2.msra.mxu0 0.0
    %2114 = vmatprep.subr.mxu0 0.0
    %2115 = vmatpush2.msra.mxu0 0.0
    %2116 = vmatprep.subr.mxu0 0.0
    %2117 = vmatpush2.msra.mxu0 0.0
    %2118 = vmatprep.subr.mxu0 0.0
    %2119 = vmatpush2.msra.mxu0 0.0
    %2120 = vmatprep.mubr.f32.mxu0 0.0
    %2121 = vmatmul.mubr.f32.gmra.mxu0 %v2054
    %v2122 = vpop.f32.mrf.mxu0
    %v2123 = vadd.f32 0.0, %v2122
    %v2124 = vpop.f32.mrf.mxu0
    %v2125 = vadd.f32 0.0, %v2124
    %2126 = vdwg.mxu0
    %v2127 = vadd.f32 %v2049, %v2123
    %v2128 = vadd.f32 %v2050, %v2125
    %s2129 = scalar_lea.vmem [#allocation3], 40
    %v2130 = vld [vmem:[%s2129] sm:$0xff]
    %v2131 = vsel %vm584, %v1942, 0
    %2133 = vmatprep.subr.mxu0 0.0
    %2134 = vmatpush1.msra.mxu0 0.0
    %2135 = vmatprep.subr.mxu0 0.0
    %2136 = vmatpush1.msra.mxu0 0.0
    %2137 = vmatprep.subr.mxu0 0.0
    %2138 = vmatpush1.msra.mxu0 0.0
    %2139 = vmatprep.subr.mxu0 0.0
    %2140 = vmatpush1.msra.mxu0 0.0
    %2141 = vmatprep.subr.mxu0 0.0
    %2142 = vmatpush1.msra.mxu0 0.0
    %2143 = vmatprep.subr.mxu0 0.0
    %2144 = vmatpush1.msra.mxu0 0.0
    %2145 = vmatprep.subr.mxu0 0.0
    %2146 = vmatpush1.msra.mxu0 0.0
    %2147 = vmatprep.subr.mxu0 0.0
    %2148 = vmatpush1.msra.mxu0 0.0
    %2149 = vmatprep.subr.mxu0 0.0
    %2150 = vmatpush1.msra.mxu0 0.0
    %2151 = vmatprep.subr.mxu0 0.0
    %2152 = vmatpush1.msra.mxu0 0.0
    %2153 = vmatprep.subr.mxu0 0.0
    %2154 = vmatpush1.msra.mxu0 0.0
    %2155 = vmatprep.subr.mxu0 0.0
    %2156 = vmatpush1.msra.mxu0 0.0
    %2157 = vmatprep.subr.mxu0 0.0
    %2158 = vmatpush1.msra.mxu0 %v469
    %2159 = vmatprep.subr.mxu0 0.0
    %2160 = vmatpush1.msra.mxu0 %v468
    %2161 = vmatprep.subr.mxu0 0.0
    %2162 = vmatpush1.msra.mxu0 %v467
    %2163 = vmatprep.subr.mxu0 0.0
    %2164 = vmatpush1.msra.mxu0 %v466
    %2165 = vmatprep.subr.mxu0 0.0
    %2166 = vmatpush2.msra.mxu0 0.0
    %2167 = vmatprep.subr.mxu0 0.0
    %2168 = vmatpush2.msra.mxu0 0.0
    %2169 = vmatprep.subr.mxu0 0.0
    %2170 = vmatpush2.msra.mxu0 0.0
    %2171 = vmatprep.subr.mxu0 0.0
    %2172 = vmatpush2.msra.mxu0 0.0
    %2173 = vmatprep.subr.mxu0 0.0
    %2174 = vmatpush2.msra.mxu0 0.0
    %2175 = vmatprep.subr.mxu0 0.0
    %2176 = vmatpush2.msra.mxu0 0.0
    %2177 = vmatprep.subr.mxu0 0.0
    %2178 = vmatpush2.msra.mxu0 0.0
    %2179 = vmatprep.subr.mxu0 0.0
    %2180 = vmatpush2.msra.mxu0 0.0
    %2181 = vmatprep.subr.mxu0 0.0
    %2182 = vmatpush2.msra.mxu0 0.0
    %2183 = vmatprep.subr.mxu0 0.0
    %2184 = vmatpush2.msra.mxu0 0.0
    %2185 = vmatprep.subr.mxu0 0.0
    %2186 = vmatpush2.msra.mxu0 0.0
    %2187 = vmatprep.subr.mxu0 0.0
    %2188 = vmatpush2.msra.mxu0 0.0
    %2189 = vmatprep.subr.mxu0 0.0
    %2190 = vmatpush2.msra.mxu0 0.0
    %2191 = vmatprep.subr.mxu0 0.0
    %2192 = vmatpush2.msra.mxu0 0.0
    %2193 = vmatprep.subr.mxu0 0.0
    %2194 = vmatpush2.msra.mxu0 0.0
    %2195 = vmatprep.subr.mxu0 0.0
    %2196 = vmatpush2.msra.mxu0 0.0
    %2197 = vmatprep.mubr.f32.mxu0 0.0
    %2198 = vmatmul.mubr.f32.gmra.mxu0 %v2131
    %v2199 = vpop.f32.mrf.mxu0
    %v2200 = vadd.f32 0.0, %v2199
    %v2201 = vpop.f32.mrf.mxu0
    %2202 = vdwg.mxu0
    %v2203 = vadd.f32 %v2130, %v2200
    %v2204 = vxor.u32 %v2127, 2147483648
    %v2205 = vxor.u32 %v2128, 2147483648
    %v2206 = vmul.f32 %v2204, 1.442695
    %v2207 = vpow.pop %v2206
    %v2208 = vmul.f32 %v2205, 1.442695
    %v2209 = vpow.pop %v2208
    %v2210 = vadd.f32 %v2207, 1.0
    %v2211 = vadd.f32 %v2209, 1.0
    %v2212 = vrcp.pop %v2210
    %v2213 = vmul.f32 1.0, %v2212
    %v2214 = vrcp.pop %v2211
    %v2215 = vmul.f32 1.0, %v2214
    %v2216 = vtanh.pop %v2128
    %v2217 = vmul.f32 %v2213, %v1913
    %v2218 = vmul.f32 %v2213, %v2216
    %2220 = vrot.lane.b32.xlu0 %v2218, 64
    %v2221 = vpop.permute.xlu0 %2220
    %v2223 = vadd.f32 %v2217, %v2221
    %v2224 = vtanh.pop %v2223
    %v2225 = vmul.f32 %v2215, %v2224
    %v2226 = vxor.u32 %v2203, 2147483648
    %v2227 = vmul.f32 %v2226, 1.442695
    %v2228 = vpow.pop %v2227
    %v2229 = vadd.f32 %v2228, 1.0
    %v2230 = vrcp.pop %v2229
    %v2231 = vmul.f32 1.0, %v2230
    %v2232 = vtanh.pop %v2203
    %v2233 = vmul.f32 %v2231, %v1933
    %2235 = vrot.lane.b32.xlu0 %v2232, 64
    %v2236 = vpop.permute.xlu0 %2235
    %v2238 = vmul.f32 %v2231, %v2236
    %2240 = vrot.lane.b32.xlu0 %v2238, 32
    %v2241 = vpop.permute.xlu0 %2240
    %v2243 = vadd.f32 %v2233, %v2241
    %v2244 = vtanh.pop %v2243
    %2246 = vrot.lane.b32.xlu0 %v2244, 64
    %v2247 = vpop.permute.xlu0 %2246
    %v2249 = vmul.f32 %v2231, %v2247
    %2251 = vrot.lane.b32.xlu0 %v2249, 32
    %v2252 = vpop.permute.xlu0 %2251
    %2255 = vrot.lane.b32.xlu0 %v2045, 64
    %v2256 = vpop.permute.xlu0 %2255
    %v2258 = vsel %vm584, %v2252, %v2256
    %v2260 = vsel %vm506, %v2258, 0
    %2262 = vmatprep.subr.mxu0 0.0
    %2263 = vmatpush1.msra.mxu0 0.0
    %2264 = vmatprep.subr.mxu0 0.0
    %2265 = vmatpush1.msra.mxu0 0.0
    %2266 = vmatprep.subr.mxu0 0.0
    %2267 = vmatpush1.msra.mxu0 0.0
    %2268 = vmatprep.subr.mxu0 0.0
    %2269 = vmatpush1.msra.mxu0 0.0
    %2270 = vmatprep.subr.mxu0 0.0
    %2271 = vmatpush1.msra.mxu0 0.0
    %2272 = vmatprep.subr.mxu0 0.0
    %2273 = vmatpush1.msra.mxu0 0.0
    %2274 = vmatprep.subr.mxu0 0.0
    %2275 = vmatpush1.msra.mxu0 0.0
    %2276 = vmatprep.subr.mxu0 0.0
    %2277 = vmatpush1.msra.mxu0 0.0
    %2278 = vmatprep.subr.mxu0 0.0
    %2279 = vmatpush1.msra.mxu0 %v477
    %2280 = vmatprep.subr.mxu0 0.0
    %2281 = vmatpush1.msra.mxu0 %v476
    %2282 = vmatprep.subr.mxu0 0.0
    %2283 = vmatpush1.msra.mxu0 %v475
    %2284 = vmatprep.subr.mxu0 0.0
    %2285 = vmatpush1.msra.mxu0 %v474
    %2286 = vmatprep.subr.mxu0 0.0
    %2287 = vmatpush1.msra.mxu0 %v473
    %2288 = vmatprep.subr.mxu0 0.0
    %2289 = vmatpush1.msra.mxu0 %v472
    %2290 = vmatprep.subr.mxu0 0.0
    %2291 = vmatpush1.msra.mxu0 %v471
    %2292 = vmatprep.subr.mxu0 0.0
    %2293 = vmatpush1.msra.mxu0 %v470
    %2294 = vmatprep.subr.mxu0 0.0
    %2295 = vmatpush2.msra.mxu0 0.0
    %2296 = vmatprep.subr.mxu0 0.0
    %2297 = vmatpush2.msra.mxu0 0.0
    %2298 = vmatprep.subr.mxu0 0.0
    %2299 = vmatpush2.msra.mxu0 0.0
    %2300 = vmatprep.subr.mxu0 0.0
    %2301 = vmatpush2.msra.mxu0 0.0
    %2302 = vmatprep.subr.mxu0 0.0
    %2303 = vmatpush2.msra.mxu0 0.0
    %2304 = vmatprep.subr.mxu0 0.0
    %2305 = vmatpush2.msra.mxu0 0.0
    %2306 = vmatprep.subr.mxu0 0.0
    %2307 = vmatpush2.msra.mxu0 0.0
    %2308 = vmatprep.subr.mxu0 0.0
    %2309 = vmatpush2.msra.mxu0 0.0
    %2310 = vmatprep.subr.mxu0 0.0
    %2311 = vmatpush2.msra.mxu0 0.0
    %2312 = vmatprep.subr.mxu0 0.0
    %2313 = vmatpush2.msra.mxu0 0.0
    %2314 = vmatprep.subr.mxu0 0.0
    %2315 = vmatpush2.msra.mxu0 0.0
    %2316 = vmatprep.subr.mxu0 0.0
    %2317 = vmatpush2.msra.mxu0 0.0
    %2318 = vmatprep.subr.mxu0 0.0
    %2319 = vmatpush2.msra.mxu0 0.0
    %2320 = vmatprep.subr.mxu0 0.0
    %2321 = vmatpush2.msra.mxu0 0.0
    %2322 = vmatprep.subr.mxu0 0.0
    %2323 = vmatpush2.msra.mxu0 0.0
    %2324 = vmatprep.subr.mxu0 0.0
    %2325 = vmatpush2.msra.mxu0 0.0
    %2326 = vmatprep.mubr.f32.mxu0 0.0
    %2327 = vmatmul.mubr.f32.gmra.mxu0 %v2260
    %v2328 = vpop.f32.mrf.mxu0
    %v2329 = vadd.f32 %v483, %v2328
    %v2330 = vpop.f32.mrf.mxu0
    %2331 = vdwg.mxu0
    %v2332 = vxor.u32 %v2329, 2147483648
    %v2333 = vmul.f32 %v2332, 1.442695
    %v2334 = vpow.pop %v2333
    %v2335 = vadd.f32 %v2334, 1.0
    %v2336 = vrcp.pop %v2335
    %v2337 = vmul.f32 1.0, %v2336
    %v2338 = vtanh.pop %v2329
    %v2339 = vmul.f32 %v2337, %v2039
    %2341 = vrot.lane.b32.xlu0 %v2338, 64
    %v2342 = vpop.permute.xlu0 %2341
    %v2344 = vmul.f32 %v2337, %v2342
    %2346 = vrot.lane.b32.xlu0 %v2344, 32
    %v2347 = vpop.permute.xlu0 %2346
    %v2349 = vadd.f32 %v2339, %v2347
    %v2350 = vtanh.pop %v2349
    %2352 = vrot.lane.b32.xlu0 %v2350, 64
    %v2353 = vpop.permute.xlu0 %2352
    %v2355 = vmul.f32 %v2337, %v2353
    %s2356 = smul.u32 6, 2
    %s2357 = smul.addr %s2356, 8
    %s2358 = scalar_lea.vmem [#allocation2], %s2357
    %v2359 = vld [vmem:[%s2358] sm:$0xff]
    %v2360 = vld [vmem:[%s2358 + $0x8] sm:$0xff]
    %2362 = vrot.lane.b32.xlu0 %v2225, 64
    %v2363 = vpop.permute.xlu0 %2362
    %v2364 = vsel %vm506, %v2363, 0
    %2366 = vmatprep.subr.mxu0 0.0
    %2367 = vmatpush1.msra.mxu0 0.0
    %2368 = vmatprep.subr.mxu0 0.0
    %2369 = vmatpush1.msra.mxu0 0.0
    %2370 = vmatprep.subr.mxu0 0.0
    %2371 = vmatpush1.msra.mxu0 0.0
    %2372 = vmatprep.subr.mxu0 0.0
    %2373 = vmatpush1.msra.mxu0 0.0
    %2374 = vmatprep.subr.mxu0 0.0
    %2375 = vmatpush1.msra.mxu0 0.0
    %2376 = vmatprep.subr.mxu0 0.0
    %2377 = vmatpush1.msra.mxu0 0.0
    %2378 = vmatprep.subr.mxu0 0.0
    %2379 = vmatpush1.msra.mxu0 0.0
    %2380 = vmatprep.subr.mxu0 0.0
    %2381 = vmatpush1.msra.mxu0 0.0
    %2382 = vmatprep.subr.mxu0 %v505
    %2383 = vmatpush1.msra.mxu0 %v504
    %2384 = vmatprep.subr.mxu0 %v503
    %2385 = vmatpush1.msra.mxu0 %v502
    %2386 = vmatprep.subr.mxu0 %v501
    %2387 = vmatpush1.msra.mxu0 %v500
    %2388 = vmatprep.subr.mxu0 %v499
    %2389 = vmatpush1.msra.mxu0 %v498
    %2390 = vmatprep.subr.mxu0 %v497
    %2391 = vmatpush1.msra.mxu0 %v496
    %2392 = vmatprep.subr.mxu0 %v495
    %2393 = vmatpush1.msra.mxu0 %v494
    %2394 = vmatprep.subr.mxu0 %v493
    %2395 = vmatpush1.msra.mxu0 %v492
    %2396 = vmatprep.subr.mxu0 %v491
    %2397 = vmatpush1.msra.mxu0 %v490
    %2398 = vmatprep.subr.mxu0 0.0
    %2399 = vmatpush2.msra.mxu0 0.0
    %2400 = vmatprep.subr.mxu0 0.0
    %2401 = vmatpush2.msra.mxu0 0.0
    %2402 = vmatprep.subr.mxu0 0.0
    %2403 = vmatpush2.msra.mxu0 0.0
    %2404 = vmatprep.subr.mxu0 0.0
    %2405 = vmatpush2.msra.mxu0 0.0
    %2406 = vmatprep.subr.mxu0 0.0
    %2407 = vmatpush2.msra.mxu0 0.0
    %2408 = vmatprep.subr.mxu0 0.0
    %2409 = vmatpush2.msra.mxu0 0.0
    %2410 = vmatprep.subr.mxu0 0.0
    %2411 = vmatpush2.msra.mxu0 0.0
    %2412 = vmatprep.subr.mxu0 0.0
    %2413 = vmatpush2.msra.mxu0 0.0
    %2414 = vmatprep.subr.mxu0 0.0
    %2415 = vmatpush2.msra.mxu0 0.0
    %2416 = vmatprep.subr.mxu0 0.0
    %2417 = vmatpush2.msra.mxu0 0.0
    %2418 = vmatprep.subr.mxu0 0.0
    %2419 = vmatpush2.msra.mxu0 0.0
    %2420 = vmatprep.subr.mxu0 0.0
    %2421 = vmatpush2.msra.mxu0 0.0
    %2422 = vmatprep.subr.mxu0 0.0
    %2423 = vmatpush2.msra.mxu0 0.0
    %2424 = vmatprep.subr.mxu0 0.0
    %2425 = vmatpush2.msra.mxu0 0.0
    %2426 = vmatprep.subr.mxu0 0.0
    %2427 = vmatpush2.msra.mxu0 0.0
    %2428 = vmatprep.subr.mxu0 0.0
    %2429 = vmatpush2.msra.mxu0 0.0
    %2430 = vmatprep.mubr.f32.mxu0 0.0
    %2431 = vmatmul.mubr.f32.gmra.mxu0 %v2364
    %v2432 = vpop.f32.mrf.mxu0
    %v2433 = vadd.f32 0.0, %v2432
    %v2434 = vpop.f32.mrf.mxu0
    %v2435 = vadd.f32 0.0, %v2434
    %2436 = vdwg.mxu0
    %v2437 = vadd.f32 %v2359, %v2433
    %v2438 = vadd.f32 %v2360, %v2435
    %s2439 = scalar_lea.vmem [#allocation3], 48
    %v2440 = vld [vmem:[%s2439] sm:$0xff]
    %v2441 = vsel %vm584, %v2252, 0
    %2443 = vmatprep.subr.mxu0 0.0
    %2444 = vmatpush1.msra.mxu0 0.0
    %2445 = vmatprep.subr.mxu0 0.0
    %2446 = vmatpush1.msra.mxu0 0.0
    %2447 = vmatprep.subr.mxu0 0.0
    %2448 = vmatpush1.msra.mxu0 0.0
    %2449 = vmatprep.subr.mxu0 0.0
    %2450 = vmatpush1.msra.mxu0 0.0
    %2451 = vmatprep.subr.mxu0 0.0
    %2452 = vmatpush1.msra.mxu0 0.0
    %2453 = vmatprep.subr.mxu0 0.0
    %2454 = vmatpush1.msra.mxu0 0.0
    %2455 = vmatprep.subr.mxu0 0.0
    %2456 = vmatpush1.msra.mxu0 0.0
    %2457 = vmatprep.subr.mxu0 0.0
    %2458 = vmatpush1.msra.mxu0 0.0
    %2459 = vmatprep.subr.mxu0 0.0
    %2460 = vmatpush1.msra.mxu0 0.0
    %2461 = vmatprep.subr.mxu0 0.0
    %2462 = vmatpush1.msra.mxu0 0.0
    %2463 = vmatprep.subr.mxu0 0.0
    %2464 = vmatpush1.msra.mxu0 0.0
    %2465 = vmatprep.subr.mxu0 0.0
    %2466 = vmatpush1.msra.mxu0 0.0
    %2467 = vmatprep.subr.mxu0 0.0
    %2468 = vmatpush1.msra.mxu0 %v469
    %2469 = vmatprep.subr.mxu0 0.0
    %2470 = vmatpush1.msra.mxu0 %v468
    %2471 = vmatprep.subr.mxu0 0.0
    %2472 = vmatpush1.msra.mxu0 %v467
    %2473 = vmatprep.subr.mxu0 0.0
    %2474 = vmatpush1.msra.mxu0 %v466
    %2475 = vmatprep.subr.mxu0 0.0
    %2476 = vmatpush2.msra.mxu0 0.0
    %2477 = vmatprep.subr.mxu0 0.0
    %2478 = vmatpush2.msra.mxu0 0.0
    %2479 = vmatprep.subr.mxu0 0.0
    %2480 = vmatpush2.msra.mxu0 0.0
    %2481 = vmatprep.subr.mxu0 0.0
    %2482 = vmatpush2.msra.mxu0 0.0
    %2483 = vmatprep.subr.mxu0 0.0
    %2484 = vmatpush2.msra.mxu0 0.0
    %2485 = vmatprep.subr.mxu0 0.0
    %2486 = vmatpush2.msra.mxu0 0.0
    %2487 = vmatprep.subr.mxu0 0.0
    %2488 = vmatpush2.msra.mxu0 0.0
    %2489 = vmatprep.subr.mxu0 0.0
    %2490 = vmatpush2.msra.mxu0 0.0
    %2491 = vmatprep.subr.mxu0 0.0
    %2492 = vmatpush2.msra.mxu0 0.0
    %2493 = vmatprep.subr.mxu0 0.0
    %2494 = vmatpush2.msra.mxu0 0.0
    %2495 = vmatprep.subr.mxu0 0.0
    %2496 = vmatpush2.msra.mxu0 0.0
    %2497 = vmatprep.subr.mxu0 0.0
    %2498 = vmatpush2.msra.mxu0 0.0
    %2499 = vmatprep.subr.mxu0 0.0
    %2500 = vmatpush2.msra.mxu0 0.0
    %2501 = vmatprep.subr.mxu0 0.0
    %2502 = vmatpush2.msra.mxu0 0.0
    %2503 = vmatprep.subr.mxu0 0.0
    %2504 = vmatpush2.msra.mxu0 0.0
    %2505 = vmatprep.subr.mxu0 0.0
    %2506 = vmatpush2.msra.mxu0 0.0
    %2507 = vmatprep.mubr.f32.mxu0 0.0
    %2508 = vmatmul.mubr.f32.gmra.mxu0 %v2441
    %v2509 = vpop.f32.mrf.mxu0
    %v2510 = vadd.f32 0.0, %v2509
    %v2511 = vpop.f32.mrf.mxu0
    %2512 = vdwg.mxu0
    %v2513 = vadd.f32 %v2440, %v2510
    %v2514 = vxor.u32 %v2437, 2147483648
    %v2515 = vxor.u32 %v2438, 2147483648
    %v2516 = vmul.f32 %v2514, 1.442695
    %v2517 = vpow.pop %v2516
    %v2518 = vmul.f32 %v2515, 1.442695
    %v2519 = vpow.pop %v2518
    %v2520 = vadd.f32 %v2517, 1.0
    %v2521 = vadd.f32 %v2519, 1.0
    %v2522 = vrcp.pop %v2520
    %v2523 = vmul.f32 1.0, %v2522
    %v2524 = vrcp.pop %v2521
    %v2525 = vmul.f32 1.0, %v2524
    %v2526 = vtanh.pop %v2438
    %v2527 = vmul.f32 %v2523, %v2223
    %v2528 = vmul.f32 %v2523, %v2526
    %2530 = vrot.lane.b32.xlu0 %v2528, 64
    %v2531 = vpop.permute.xlu0 %2530
    %v2533 = vadd.f32 %v2527, %v2531
    %v2534 = vtanh.pop %v2533
    %v2535 = vmul.f32 %v2525, %v2534
    %v2536 = vxor.u32 %v2513, 2147483648
    %v2537 = vmul.f32 %v2536, 1.442695
    %v2538 = vpow.pop %v2537
    %v2539 = vadd.f32 %v2538, 1.0
    %v2540 = vrcp.pop %v2539
    %v2541 = vmul.f32 1.0, %v2540
    %v2542 = vtanh.pop %v2513
    %v2543 = vmul.f32 %v2541, %v2243
    %2545 = vrot.lane.b32.xlu0 %v2542, 64
    %v2546 = vpop.permute.xlu0 %2545
    %v2548 = vmul.f32 %v2541, %v2546
    %2550 = vrot.lane.b32.xlu0 %v2548, 32
    %v2551 = vpop.permute.xlu0 %2550
    %v2553 = vadd.f32 %v2543, %v2551
    %v2554 = vtanh.pop %v2553
    %2556 = vrot.lane.b32.xlu0 %v2554, 64
    %v2557 = vpop.permute.xlu0 %2556
    %v2559 = vmul.f32 %v2541, %v2557
    %2561 = vrot.lane.b32.xlu0 %v2559, 32
    %v2562 = vpop.permute.xlu0 %2561
    %2565 = vrot.lane.b32.xlu0 %v2355, 64
    %v2566 = vpop.permute.xlu0 %2565
    %v2568 = vsel %vm584, %v2562, %v2566
    %v2570 = vsel %vm506, %v2568, 0
    %2572 = vmatprep.subr.mxu0 0.0
    %2573 = vmatpush1.msra.mxu0 0.0
    %2574 = vmatprep.subr.mxu0 0.0
    %2575 = vmatpush1.msra.mxu0 0.0
    %2576 = vmatprep.subr.mxu0 0.0
    %2577 = vmatpush1.msra.mxu0 0.0
    %2578 = vmatprep.subr.mxu0 0.0
    %2579 = vmatpush1.msra.mxu0 0.0
    %2580 = vmatprep.subr.mxu0 0.0
    %2581 = vmatpush1.msra.mxu0 0.0
    %2582 = vmatprep.subr.mxu0 0.0
    %2583 = vmatpush1.msra.mxu0 0.0
    %2584 = vmatprep.subr.mxu0 0.0
    %2585 = vmatpush1.msra.mxu0 0.0
    %2586 = vmatprep.subr.mxu0 0.0
    %2587 = vmatpush1.msra.mxu0 0.0
    %2588 = vmatprep.subr.mxu0 0.0
    %2589 = vmatpush1.msra.mxu0 %v477
    %2590 = vmatprep.subr.mxu0 0.0
    %2591 = vmatpush1.msra.mxu0 %v476
    %2592 = vmatprep.subr.mxu0 0.0
    %2593 = vmatpush1.msra.mxu0 %v475
    %2594 = vmatprep.subr.mxu0 0.0
    %2595 = vmatpush1.msra.mxu0 %v474
    %2596 = vmatprep.subr.mxu0 0.0
    %2597 = vmatpush1.msra.mxu0 %v473
    %2598 = vmatprep.subr.mxu0 0.0
    %2599 = vmatpush1.msra.mxu0 %v472
    %2600 = vmatprep.subr.mxu0 0.0
    %2601 = vmatpush1.msra.mxu0 %v471
    %2602 = vmatprep.subr.mxu0 0.0
    %2603 = vmatpush1.msra.mxu0 %v470
    %2604 = vmatprep.subr.mxu0 0.0
    %2605 = vmatpush2.msra.mxu0 0.0
    %2606 = vmatprep.subr.mxu0 0.0
    %2607 = vmatpush2.msra.mxu0 0.0
    %2608 = vmatprep.subr.mxu0 0.0
    %2609 = vmatpush2.msra.mxu0 0.0
    %2610 = vmatprep.subr.mxu0 0.0
    %2611 = vmatpush2.msra.mxu0 0.0
    %2612 = vmatprep.subr.mxu0 0.0
    %2613 = vmatpush2.msra.mxu0 0.0
    %2614 = vmatprep.subr.mxu0 0.0
    %2615 = vmatpush2.msra.mxu0 0.0
    %2616 = vmatprep.subr.mxu0 0.0
    %2617 = vmatpush2.msra.mxu0 0.0
    %2618 = vmatprep.subr.mxu0 0.0
    %2619 = vmatpush2.msra.mxu0 0.0
    %2620 = vmatprep.subr.mxu0 0.0
    %2621 = vmatpush2.msra.mxu0 0.0
    %2622 = vmatprep.subr.mxu0 0.0
    %2623 = vmatpush2.msra.mxu0 0.0
    %2624 = vmatprep.subr.mxu0 0.0
    %2625 = vmatpush2.msra.mxu0 0.0
    %2626 = vmatprep.subr.mxu0 0.0
    %2627 = vmatpush2.msra.mxu0 0.0
    %2628 = vmatprep.subr.mxu0 0.0
    %2629 = vmatpush2.msra.mxu0 0.0
    %2630 = vmatprep.subr.mxu0 0.0
    %2631 = vmatpush2.msra.mxu0 0.0
    %2632 = vmatprep.subr.mxu0 0.0
    %2633 = vmatpush2.msra.mxu0 0.0
    %2634 = vmatprep.subr.mxu0 0.0
    %2635 = vmatpush2.msra.mxu0 0.0
    %2636 = vmatprep.mubr.f32.mxu0 0.0
    %2637 = vmatmul.mubr.f32.gmra.mxu0 %v2570
    %v2638 = vpop.f32.mrf.mxu0
    %v2639 = vadd.f32 %v483, %v2638
    %v2640 = vpop.f32.mrf.mxu0
    %2641 = vdwg.mxu0
    %v2642 = vxor.u32 %v2639, 2147483648
    %v2643 = vmul.f32 %v2642, 1.442695
    %v2644 = vpow.pop %v2643
    %v2645 = vadd.f32 %v2644, 1.0
    %v2646 = vrcp.pop %v2645
    %v2647 = vmul.f32 1.0, %v2646
    %v2648 = vtanh.pop %v2639
    %v2649 = vmul.f32 %v2647, %v2349
    %2651 = vrot.lane.b32.xlu0 %v2648, 64
    %v2652 = vpop.permute.xlu0 %2651
    %v2654 = vmul.f32 %v2647, %v2652
    %2656 = vrot.lane.b32.xlu0 %v2654, 32
    %v2657 = vpop.permute.xlu0 %2656
    %v2659 = vadd.f32 %v2649, %v2657
    %v2660 = vtanh.pop %v2659
    %2662 = vrot.lane.b32.xlu0 %v2660, 64
    %v2663 = vpop.permute.xlu0 %2662
    %v2665 = vmul.f32 %v2647, %v2663
    %s2666 = smul.u32 7, 2
    %s2667 = smul.addr %s2666, 8
    %s2668 = scalar_lea.vmem [#allocation2], %s2667
    %v2669 = vld [vmem:[%s2668] sm:$0xff]
    %v2670 = vld [vmem:[%s2668 + $0x8] sm:$0xff]
    %2672 = vrot.lane.b32.xlu0 %v2535, 64
    %v2673 = vpop.permute.xlu0 %2672
    %v2674 = vsel %vm506, %v2673, 0
    %2676 = vmatprep.subr.mxu0 0.0
    %2677 = vmatpush1.msra.mxu0 0.0
    %2678 = vmatprep.subr.mxu0 0.0
    %2679 = vmatpush1.msra.mxu0 0.0
    %2680 = vmatprep.subr.mxu0 0.0
    %2681 = vmatpush1.msra.mxu0 0.0
    %2682 = vmatprep.subr.mxu0 0.0
    %2683 = vmatpush1.msra.mxu0 0.0
    %2684 = vmatprep.subr.mxu0 0.0
    %2685 = vmatpush1.msra.mxu0 0.0
    %2686 = vmatprep.subr.mxu0 0.0
    %2687 = vmatpush1.msra.mxu0 0.0
    %2688 = vmatprep.subr.mxu0 0.0
    %2689 = vmatpush1.msra.mxu0 0.0
    %2690 = vmatprep.subr.mxu0 0.0
    %2691 = vmatpush1.msra.mxu0 0.0
    %2692 = vmatprep.subr.mxu0 %v505
    %2693 = vmatpush1.msra.mxu0 %v504
    %2694 = vmatprep.subr.mxu0 %v503
    %2695 = vmatpush1.msra.mxu0 %v502
    %2696 = vmatprep.subr.mxu0 %v501
    %2697 = vmatpush1.msra.mxu0 %v500
    %2698 = vmatprep.subr.mxu0 %v499
    %2699 = vmatpush1.msra.mxu0 %v498
    %2700 = vmatprep.subr.mxu0 %v497
    %2701 = vmatpush1.msra.mxu0 %v496
    %2702 = vmatprep.subr.mxu0 %v495
    %2703 = vmatpush1.msra.mxu0 %v494
    %2704 = vmatprep.subr.mxu0 %v493
    %2705 = vmatpush1.msra.mxu0 %v492
    %2706 = vmatprep.subr.mxu0 %v491
    %2707 = vmatpush1.msra.mxu0 %v490
    %2708 = vmatprep.subr.mxu0 0.0
    %2709 = vmatpush2.msra.mxu0 0.0
    %2710 = vmatprep.subr.mxu0 0.0
    %2711 = vmatpush2.msra.mxu0 0.0
    %2712 = vmatprep.subr.mxu0 0.0
    %2713 = vmatpush2.msra.mxu0 0.0
    %2714 = vmatprep.subr.mxu0 0.0
    %2715 = vmatpush2.msra.mxu0 0.0
    %2716 = vmatprep.subr.mxu0 0.0
    %2717 = vmatpush2.msra.mxu0 0.0
    %2718 = vmatprep.subr.mxu0 0.0
    %2719 = vmatpush2.msra.mxu0 0.0
    %2720 = vmatprep.subr.mxu0 0.0
    %2721 = vmatpush2.msra.mxu0 0.0
    %2722 = vmatprep.subr.mxu0 0.0
    %2723 = vmatpush2.msra.mxu0 0.0
    %2724 = vmatprep.subr.mxu0 0.0
    %2725 = vmatpush2.msra.mxu0 0.0
    %2726 = vmatprep.subr.mxu0 0.0
    %2727 = vmatpush2.msra.mxu0 0.0
    %2728 = vmatprep.subr.mxu0 0.0
    %2729 = vmatpush2.msra.mxu0 0.0
    %2730 = vmatprep.subr.mxu0 0.0
    %2731 = vmatpush2.msra.mxu0 0.0
    %2732 = vmatprep.subr.mxu0 0.0
    %2733 = vmatpush2.msra.mxu0 0.0
    %2734 = vmatprep.subr.mxu0 0.0
    %2735 = vmatpush2.msra.mxu0 0.0
    %2736 = vmatprep.subr.mxu0 0.0
    %2737 = vmatpush2.msra.mxu0 0.0
    %2738 = vmatprep.subr.mxu0 0.0
    %2739 = vmatpush2.msra.mxu0 0.0
    %2740 = vmatprep.mubr.f32.mxu0 0.0
    %2741 = vmatmul.mubr.f32.gmra.mxu0 %v2674
    %v2742 = vpop.f32.mrf.mxu0
    %v2743 = vadd.f32 0.0, %v2742
    %v2744 = vpop.f32.mrf.mxu0
    %v2745 = vadd.f32 0.0, %v2744
    %2746 = vdwg.mxu0
    %v2747 = vadd.f32 %v2669, %v2743
    %v2748 = vadd.f32 %v2670, %v2745
    %s2749 = scalar_lea.vmem [#allocation3], 56
    %v2750 = vld [vmem:[%s2749] sm:$0xff]
    %v2751 = vsel %vm584, %v2562, 0
    %2753 = vmatprep.subr.mxu0 0.0
    %2754 = vmatpush1.msra.mxu0 0.0
    %2755 = vmatprep.subr.mxu0 0.0
    %2756 = vmatpush1.msra.mxu0 0.0
    %2757 = vmatprep.subr.mxu0 0.0
    %2758 = vmatpush1.msra.mxu0 0.0
    %2759 = vmatprep.subr.mxu0 0.0
    %2760 = vmatpush1.msra.mxu0 0.0
    %2761 = vmatprep.subr.mxu0 0.0
    %2762 = vmatpush1.msra.mxu0 0.0
    %2763 = vmatprep.subr.mxu0 0.0
    %2764 = vmatpush1.msra.mxu0 0.0
    %2765 = vmatprep.subr.mxu0 0.0
    %2766 = vmatpush1.msra.mxu0 0.0
    %2767 = vmatprep.subr.mxu0 0.0
    %2768 = vmatpush1.msra.mxu0 0.0
    %2769 = vmatprep.subr.mxu0 0.0
    %2770 = vmatpush1.msra.mxu0 0.0
    %2771 = vmatprep.subr.mxu0 0.0
    %2772 = vmatpush1.msra.mxu0 0.0
    %2773 = vmatprep.subr.mxu0 0.0
    %2774 = vmatpush1.msra.mxu0 0.0
    %2775 = vmatprep.subr.mxu0 0.0
    %2776 = vmatpush1.msra.mxu0 0.0
    %2777 = vmatprep.subr.mxu0 0.0
    %2778 = vmatpush1.msra.mxu0 %v469
    %2779 = vmatprep.subr.mxu0 0.0
    %2780 = vmatpush1.msra.mxu0 %v468
    %2781 = vmatprep.subr.mxu0 0.0
    %2782 = vmatpush1.msra.mxu0 %v467
    %2783 = vmatprep.subr.mxu0 0.0
    %2784 = vmatpush1.msra.mxu0 %v466
    %2785 = vmatprep.subr.mxu0 0.0
    %2786 = vmatpush2.msra.mxu0 0.0
    %2787 = vmatprep.subr.mxu0 0.0
    %2788 = vmatpush2.msra.mxu0 0.0
    %2789 = vmatprep.subr.mxu0 0.0
    %2790 = vmatpush2.msra.mxu0 0.0
    %2791 = vmatprep.subr.mxu0 0.0
    %2792 = vmatpush2.msra.mxu0 0.0
    %2793 = vmatprep.subr.mxu0 0.0
    %2794 = vmatpush2.msra.mxu0 0.0
    %2795 = vmatprep.subr.mxu0 0.0
    %2796 = vmatpush2.msra.mxu0 0.0
    %2797 = vmatprep.subr.mxu0 0.0
    %2798 = vmatpush2.msra.mxu0 0.0
    %2799 = vmatprep.subr.mxu0 0.0
    %2800 = vmatpush2.msra.mxu0 0.0
    %2801 = vmatprep.subr.mxu0 0.0
    %2802 = vmatpush2.msra.mxu0 0.0
    %2803 = vmatprep.subr.mxu0 0.0
    %2804 = vmatpush2.msra.mxu0 0.0
    %2805 = vmatprep.subr.mxu0 0.0
    %2806 = vmatpush2.msra.mxu0 0.0
    %2807 = vmatprep.subr.mxu0 0.0
    %2808 = vmatpush2.msra.mxu0 0.0
    %2809 = vmatprep.subr.mxu0 0.0
    %2810 = vmatpush2.msra.mxu0 0.0
    %2811 = vmatprep.subr.mxu0 0.0
    %2812 = vmatpush2.msra.mxu0 0.0
    %2813 = vmatprep.subr.mxu0 0.0
    %2814 = vmatpush2.msra.mxu0 0.0
    %2815 = vmatprep.subr.mxu0 0.0
    %2816 = vmatpush2.msra.mxu0 0.0
    %2817 = vmatprep.mubr.f32.mxu0 0.0
    %2818 = vmatmul.mubr.f32.gmra.mxu0 %v2751
    %v2819 = vpop.f32.mrf.mxu0
    %v2820 = vadd.f32 0.0, %v2819
    %v2821 = vpop.f32.mrf.mxu0
    %2822 = vdwg.mxu0
    %v2823 = vadd.f32 %v2750, %v2820
    %v2824 = vxor.u32 %v2747, 2147483648
    %v2825 = vxor.u32 %v2748, 2147483648
    %v2826 = vmul.f32 %v2824, 1.442695
    %v2827 = vpow.pop %v2826
    %v2828 = vmul.f32 %v2825, 1.442695
    %v2829 = vpow.pop %v2828
    %v2830 = vadd.f32 %v2827, 1.0
    %v2831 = vadd.f32 %v2829, 1.0
    %v2832 = vrcp.pop %v2830
    %v2833 = vmul.f32 1.0, %v2832
    %v2834 = vrcp.pop %v2831
    %v2835 = vmul.f32 1.0, %v2834
    %v2836 = vtanh.pop %v2748
    %v2837 = vmul.f32 %v2833, %v2533
    %v2838 = vmul.f32 %v2833, %v2836
    %2840 = vrot.lane.b32.xlu0 %v2838, 64
    %v2841 = vpop.permute.xlu0 %2840
    %v2843 = vadd.f32 %v2837, %v2841
    %v2844 = vtanh.pop %v2843
    %v2845 = vmul.f32 %v2835, %v2844
    %v2846 = vxor.u32 %v2823, 2147483648
    %v2847 = vmul.f32 %v2846, 1.442695
    %v2848 = vpow.pop %v2847
    %v2849 = vadd.f32 %v2848, 1.0
    %v2850 = vrcp.pop %v2849
    %v2851 = vmul.f32 1.0, %v2850
    %v2852 = vtanh.pop %v2823
    %v2853 = vmul.f32 %v2851, %v2553
    %2855 = vrot.lane.b32.xlu0 %v2852, 64
    %v2856 = vpop.permute.xlu0 %2855
    %v2858 = vmul.f32 %v2851, %v2856
    %2860 = vrot.lane.b32.xlu0 %v2858, 32
    %v2861 = vpop.permute.xlu0 %2860
    %v2863 = vadd.f32 %v2853, %v2861
    %v2864 = vtanh.pop %v2863
    %2866 = vrot.lane.b32.xlu0 %v2864, 64
    %v2867 = vpop.permute.xlu0 %2866
    %v2869 = vmul.f32 %v2851, %v2867
    %2871 = vrot.lane.b32.xlu0 %v2869, 32
    %v2872 = vpop.permute.xlu0 %2871
    %2875 = vrot.lane.b32.xlu0 %v2665, 64
    %v2876 = vpop.permute.xlu0 %2875
    %v2878 = vsel %vm584, %v2872, %v2876
    %v2880 = vsel %vm506, %v2878, 0
    %2882 = vmatprep.subr.mxu0 0.0
    %2883 = vmatpush1.msra.mxu0 0.0
    %2884 = vmatprep.subr.mxu0 0.0
    %2885 = vmatpush1.msra.mxu0 0.0
    %2886 = vmatprep.subr.mxu0 0.0
    %2887 = vmatpush1.msra.mxu0 0.0
    %2888 = vmatprep.subr.mxu0 0.0
    %2889 = vmatpush1.msra.mxu0 0.0
    %2890 = vmatprep.subr.mxu0 0.0
    %2891 = vmatpush1.msra.mxu0 0.0
    %2892 = vmatprep.subr.mxu0 0.0
    %2893 = vmatpush1.msra.mxu0 0.0
    %2894 = vmatprep.subr.mxu0 0.0
    %2895 = vmatpush1.msra.mxu0 0.0
    %2896 = vmatprep.subr.mxu0 0.0
    %2897 = vmatpush1.msra.mxu0 0.0
    %2898 = vmatprep.subr.mxu0 0.0
    %2899 = vmatpush1.msra.mxu0 %v477
    %2900 = vmatprep.subr.mxu0 0.0
    %2901 = vmatpush1.msra.mxu0 %v476
    %2902 = vmatprep.subr.mxu0 0.0
    %2903 = vmatpush1.msra.mxu0 %v475
    %2904 = vmatprep.subr.mxu0 0.0
    %2905 = vmatpush1.msra.mxu0 %v474
    %2906 = vmatprep.subr.mxu0 0.0
    %2907 = vmatpush1.msra.mxu0 %v473
    %2908 = vmatprep.subr.mxu0 0.0
    %2909 = vmatpush1.msra.mxu0 %v472
    %2910 = vmatprep.subr.mxu0 0.0
    %2911 = vmatpush1.msra.mxu0 %v471
    %2912 = vmatprep.subr.mxu0 0.0
    %2913 = vmatpush1.msra.mxu0 %v470
    %2914 = vmatprep.subr.mxu0 0.0
    %2915 = vmatpush2.msra.mxu0 0.0
    %2916 = vmatprep.subr.mxu0 0.0
    %2917 = vmatpush2.msra.mxu0 0.0
    %2918 = vmatprep.subr.mxu0 0.0
    %2919 = vmatpush2.msra.mxu0 0.0
    %2920 = vmatprep.subr.mxu0 0.0
    %2921 = vmatpush2.msra.mxu0 0.0
    %2922 = vmatprep.subr.mxu0 0.0
    %2923 = vmatpush2.msra.mxu0 0.0
    %2924 = vmatprep.subr.mxu0 0.0
    %2925 = vmatpush2.msra.mxu0 0.0
    %2926 = vmatprep.subr.mxu0 0.0
    %2927 = vmatpush2.msra.mxu0 0.0
    %2928 = vmatprep.subr.mxu0 0.0
    %2929 = vmatpush2.msra.mxu0 0.0
    %2930 = vmatprep.subr.mxu0 0.0
    %2931 = vmatpush2.msra.mxu0 0.0
    %2932 = vmatprep.subr.mxu0 0.0
    %2933 = vmatpush2.msra.mxu0 0.0
    %2934 = vmatprep.subr.mxu0 0.0
    %2935 = vmatpush2.msra.mxu0 0.0
    %2936 = vmatprep.subr.mxu0 0.0
    %2937 = vmatpush2.msra.mxu0 0.0
    %2938 = vmatprep.subr.mxu0 0.0
    %2939 = vmatpush2.msra.mxu0 0.0
    %2940 = vmatprep.subr.mxu0 0.0
    %2941 = vmatpush2.msra.mxu0 0.0
    %2942 = vmatprep.subr.mxu0 0.0
    %2943 = vmatpush2.msra.mxu0 0.0
    %2944 = vmatprep.subr.mxu0 0.0
    %2945 = vmatpush2.msra.mxu0 0.0
    %2946 = vmatprep.mubr.f32.mxu0 0.0
    %2947 = vmatmul.mubr.f32.gmra.mxu0 %v2880
    %v2948 = vpop.f32.mrf.mxu0
    %v2949 = vadd.f32 %v483, %v2948
    %v2950 = vpop.f32.mrf.mxu0
    %2951 = vdwg.mxu0
    %v2952 = vxor.u32 %v2949, 2147483648
    %v2953 = vmul.f32 %v2952, 1.442695
    %v2954 = vpow.pop %v2953
    %v2955 = vadd.f32 %v2954, 1.0
    %v2956 = vrcp.pop %v2955
    %v2957 = vmul.f32 1.0, %v2956
    %v2958 = vtanh.pop %v2949
    %v2959 = vmul.f32 %v2957, %v2659
    %2961 = vrot.lane.b32.xlu0 %v2958, 64
    %v2962 = vpop.permute.xlu0 %2961
    %v2964 = vmul.f32 %v2957, %v2962
    %2966 = vrot.lane.b32.xlu0 %v2964, 32
    %v2967 = vpop.permute.xlu0 %2966
    %v2969 = vadd.f32 %v2959, %v2967
    %v2970 = vtanh.pop %v2969
    %2972 = vrot.lane.b32.xlu0 %v2970, 64
    %v2973 = vpop.permute.xlu0 %2972
    %v2975 = vmul.f32 %v2957, %v2973
    %v2976 = vld [vmem:[%s2] sm:$0xff]
    %v2977 = vld [vmem:[%s3] sm:$0xff]
    %v2978 = vld [vmem:[%s12] sm:$0x1]
    %v2979 = vlaneseq
    %v2980 = vshrl.u32 %v2979, 7
    %v2981 = vsub.s32 0, %v2980
    %v2982 = vrot.slane %v2978, %v2981
    %2984 = vrot.lane.b32.xlu0 %v2982, 64
    %v2985 = vpop.permute.xlu0 %2984
    %v2987 = vmul.f32 %v2845, %v2985
    %v2988 = vld [vmem:[%s12 + $0x1] sm:$0x1]
    %v2989 = vlaneseq
    %v2990 = vshrl.u32 %v2989, 7
    %v2991 = vsub.s32 0, %v2990
    %v2992 = vrot.slane %v2988, %v2991
    %2994 = vrot.lane.b32.xlu0 %v2992, 64
    %v2995 = vpop.permute.xlu0 %2994
    %v2997 = vadd.f32 %v2987, %v2995
    %v2998 = vmax.f32 %v2997, 0.0
    %v2999 = vld [vmem:[%s16] sm:$0xff]
    %v3000 = vld [vmem:[%s16 + $0x8] sm:$0xff]
    %v3001 = vld [vmem:[%s16 + $0x10] sm:$0xff]
    %v3002 = vld [vmem:[%s16 + $0x18] sm:$0xff]
    %v3003 = vld [vmem:[%s16 + $0x20] sm:$0xff]
    %v3004 = vld [vmem:[%s16 + $0x28] sm:$0xff]
    %v3005 = vld [vmem:[%s16 + $0x30] sm:$0xff]
    %v3006 = vld [vmem:[%s16 + $0x38] sm:$0xff]
    %v3007 = vld [vmem:[#allocation10] sm:$0x1]
    %v3008 = vlaneseq
    %v3009 = vshrl.u32 %v3008, 7
    %v3010 = vsub.s32 0, %v3009
    %v3011 = vrot.slane %v3007, %v3010
    %3013 = vrot.lane.b32.xlu0 %v3011, 96
    %v3014 = vpop.permute.xlu0 %3013
    %v3016 = vmul.f32 %v2975, %v3014
    %v3017 = vld [vmem:[#allocation10 + $0x1] sm:$0x1]
    %v3018 = vlaneseq
    %v3019 = vshrl.u32 %v3018, 7
    %v3020 = vsub.s32 0, %v3019
    %v3021 = vrot.slane %v3017, %v3020
    %3023 = vrot.lane.b32.xlu0 %v3021, 96
    %v3024 = vpop.permute.xlu0 %3023
    %v3026 = vadd.f32 %v3016, %v3024
    %v3027 = vmax.f32 %v3026, 0.0
    %v3028 = vld [vmem:[%s17] sm:$0xff]
    %v3029 = vld [vmem:[%s17 + $0x8] sm:$0xff]
    %v3030 = vld [vmem:[%s17 + $0x10] sm:$0xff]
    %v3031 = vld [vmem:[%s17 + $0x18] sm:$0xff]
    %3033 = vrot.lane.b32.xlu0 %v3027, 32
    %v3034 = vpop.permute.xlu0 %3033
    %v3035 = vsel %vm584, %v3034, 0
    %3037 = vmatprep.subr.mxu0 0.0
    %3038 = vmatpush1.msra.mxu0 0.0
    %3039 = vmatprep.subr.mxu0 0.0
    %3040 = vmatpush1.msra.mxu0 0.0
    %3041 = vmatprep.subr.mxu0 0.0
    %3042 = vmatpush1.msra.mxu0 0.0
    %3043 = vmatprep.subr.mxu0 0.0
    %3044 = vmatpush1.msra.mxu0 0.0
    %3045 = vmatprep.subr.mxu0 0.0
    %3046 = vmatpush1.msra.mxu0 0.0
    %3047 = vmatprep.subr.mxu0 0.0
    %3048 = vmatpush1.msra.mxu0 0.0
    %3049 = vmatprep.subr.mxu0 0.0
    %3050 = vmatpush1.msra.mxu0 0.0
    %3051 = vmatprep.subr.mxu0 0.0
    %3052 = vmatpush1.msra.mxu0 0.0
    %3053 = vmatprep.subr.mxu0 0.0
    %3054 = vmatpush1.msra.mxu0 0.0
    %3055 = vmatprep.subr.mxu0 0.0
    %3056 = vmatpush1.msra.mxu0 0.0
    %3057 = vmatprep.subr.mxu0 0.0
    %3058 = vmatpush1.msra.mxu0 0.0
    %3059 = vmatprep.subr.mxu0 0.0
    %3060 = vmatpush1.msra.mxu0 0.0
    %3061 = vmatprep.subr.mxu0 0.0
    %3062 = vmatpush1.msra.mxu0 %v3031
    %3063 = vmatprep.subr.mxu0 0.0
    %3064 = vmatpush1.msra.mxu0 %v3030
    %3065 = vmatprep.subr.mxu0 0.0
    %3066 = vmatpush1.msra.mxu0 %v3029
    %3067 = vmatprep.subr.mxu0 0.0
    %3068 = vmatpush1.msra.mxu0 %v3028
    %3069 = vmatprep.subr.mxu0 0.0
    %3070 = vmatpush2.msra.mxu0 0.0
    %3071 = vmatprep.subr.mxu0 0.0
    %3072 = vmatpush2.msra.mxu0 0.0
    %3073 = vmatprep.subr.mxu0 0.0
    %3074 = vmatpush2.msra.mxu0 0.0
    %3075 = vmatprep.subr.mxu0 0.0
    %3076 = vmatpush2.msra.mxu0 0.0
    %3077 = vmatprep.subr.mxu0 0.0
    %3078 = vmatpush2.msra.mxu0 0.0
    %3079 = vmatprep.subr.mxu0 0.0
    %3080 = vmatpush2.msra.mxu0 0.0
    %3081 = vmatprep.subr.mxu0 0.0
    %3082 = vmatpush2.msra.mxu0 0.0
    %3083 = vmatprep.subr.mxu0 0.0
    %3084 = vmatpush2.msra.mxu0 0.0
    %3085 = vmatprep.subr.mxu0 0.0
    %3086 = vmatpush2.msra.mxu0 0.0
    %3087 = vmatprep.subr.mxu0 0.0
    %3088 = vmatpush2.msra.mxu0 0.0
    %3089 = vmatprep.subr.mxu0 0.0
    %3090 = vmatpush2.msra.mxu0 0.0
    %3091 = vmatprep.subr.mxu0 0.0
    %3092 = vmatpush2.msra.mxu0 0.0
    %3093 = vmatprep.subr.mxu0 0.0
    %3094 = vmatpush2.msra.mxu0 0.0
    %3095 = vmatprep.subr.mxu0 0.0
    %3096 = vmatpush2.msra.mxu0 0.0
    %3097 = vmatprep.subr.mxu0 0.0
    %3098 = vmatpush2.msra.mxu0 0.0
    %3099 = vmatprep.subr.mxu0 0.0
    %3100 = vmatpush2.msra.mxu0 0.0
    %3101 = vmatprep.mubr.f32.mxu0 0.0
    %3102 = vmatmul.mubr.f32.gmra.mxu0 %v3035
    %v3103 = vpop.f32.mrf.mxu0
    %v3104 = vadd.f32 0.0, %v3103
    %v3105 = vpop.f32.mrf.mxu0
    %3106 = vdwg.mxu0
    %3108 = vrot.lane.b32.xlu0 %v2998, 64
    %v3109 = vpop.permute.xlu0 %3108
    %v3110 = vsel %vm506, %v3109, 0
    %3112 = vmatprep.subr.mxu0 0.0
    %3113 = vmatpush1.msra.mxu0 0.0
    %3114 = vmatprep.subr.mxu0 0.0
    %3115 = vmatpush1.msra.mxu0 0.0
    %3116 = vmatprep.subr.mxu0 0.0
    %3117 = vmatpush1.msra.mxu0 0.0
    %3118 = vmatprep.subr.mxu0 0.0
    %3119 = vmatpush1.msra.mxu0 0.0
    %3120 = vmatprep.subr.mxu0 0.0
    %3121 = vmatpush1.msra.mxu0 0.0
    %3122 = vmatprep.subr.mxu0 0.0
    %3123 = vmatpush1.msra.mxu0 0.0
    %3124 = vmatprep.subr.mxu0 0.0
    %3125 = vmatpush1.msra.mxu0 0.0
    %3126 = vmatprep.subr.mxu0 0.0
    %3127 = vmatpush1.msra.mxu0 0.0
    %3128 = vmatprep.subr.mxu0 0.0
    %3129 = vmatpush1.msra.mxu0 %v3006
    %3130 = vmatprep.subr.mxu0 0.0
    %3131 = vmatpush1.msra.mxu0 %v3005
    %3132 = vmatprep.subr.mxu0 0.0
    %3133 = vmatpush1.msra.mxu0 %v3004
    %3134 = vmatprep.subr.mxu0 0.0
    %3135 = vmatpush1.msra.mxu0 %v3003
    %3136 = vmatprep.subr.mxu0 0.0
    %3137 = vmatpush1.msra.mxu0 %v3002
    %3138 = vmatprep.subr.mxu0 0.0
    %3139 = vmatpush1.msra.mxu0 %v3001
    %3140 = vmatprep.subr.mxu0 0.0
    %3141 = vmatpush1.msra.mxu0 %v3000
    %3142 = vmatprep.subr.mxu0 0.0
    %3143 = vmatpush1.msra.mxu0 %v2999
    %3144 = vmatprep.subr.mxu0 0.0
    %3145 = vmatpush2.msra.mxu0 0.0
    %3146 = vmatprep.subr.mxu0 0.0
    %3147 = vmatpush2.msra.mxu0 0.0
    %3148 = vmatprep.subr.mxu0 0.0
    %3149 = vmatpush2.msra.mxu0 0.0
    %3150 = vmatprep.subr.mxu0 0.0
    %3151 = vmatpush2.msra.mxu0 0.0
    %3152 = vmatprep.subr.mxu0 0.0
    %3153 = vmatpush2.msra.mxu0 0.0
    %3154 = vmatprep.subr.mxu0 0.0
    %3155 = vmatpush2.msra.mxu0 0.0
    %3156 = vmatprep.subr.mxu0 0.0
    %3157 = vmatpush2.msra.mxu0 0.0
    %3158 = vmatprep.subr.mxu0 0.0
    %3159 = vmatpush2.msra.mxu0 0.0
    %3160 = vmatprep.subr.mxu0 0.0
    %3161 = vmatpush2.msra.mxu0 0.0
    %3162 = vmatprep.subr.mxu0 0.0
    %3163 = vmatpush2.msra.mxu0 0.0
    %3164 = vmatprep.subr.mxu0 0.0
    %3165 = vmatpush2.msra.mxu0 0.0
    %3166 = vmatprep.subr.mxu0 0.0
    %3167 = vmatpush2.msra.mxu0 0.0
    %3168 = vmatprep.subr.mxu0 0.0
    %3169 = vmatpush2.msra.mxu0 0.0
    %3170 = vmatprep.subr.mxu0 0.0
    %3171 = vmatpush2.msra.mxu0 0.0
    %3172 = vmatprep.subr.mxu0 0.0
    %3173 = vmatpush2.msra.mxu0 0.0
    %3174 = vmatprep.subr.mxu0 0.0
    %3175 = vmatpush2.msra.mxu0 0.0
    %3176 = vmatprep.mubr.f32.mxu0 0.0
    %3177 = vmatmul.mubr.f32.gmra.mxu0 %v3110
    %v3178 = vpop.f32.mrf.mxu0
    %v3179 = vadd.f32 %v3104, %v3178
    %v3180 = vpop.f32.mrf.mxu0
    %3181 = vdwg.mxu0
    %v3182 = vld [vmem:[#allocation12] sm:$0x1]
    %v3183 = vlaneseq
    %v3184 = vshrl.u32 %v3183, 7
    %v3185 = vsub.s32 0, %v3184
    %v3186 = vrot.slane %v3182, %v3185
    %v3187 = vmul.f32 %v2976, %v3186
    %v3188 = vld [vmem:[#allocation12 + $0x1] sm:$0x1]
    %v3189 = vlaneseq
    %v3190 = vshrl.u32 %v3189, 7
    %v3191 = vsub.s32 0, %v3190
    %v3192 = vrot.slane %v3188, %v3191
    %v3193 = vadd.f32 %v3187, %v3192
    %v3194 = vmax.f32 %v3193, 0.0
    %v3195 = vld [vmem:[%s18] sm:$0xff]
    %v3197 = vsel %vm159, %v3194, 0
    %3199 = vmatprep.subr.mxu0 0.0
    %3200 = vmatpush1.msra.mxu0 0.0
    %3201 = vmatprep.subr.mxu0 0.0
    %3202 = vmatpush1.msra.mxu0 0.0
    %3203 = vmatprep.subr.mxu0 0.0
    %3204 = vmatpush1.msra.mxu0 0.0
    %3205 = vmatprep.subr.mxu0 0.0
    %3206 = vmatpush1.msra.mxu0 0.0
    %3207 = vmatprep.subr.mxu0 0.0
    %3208 = vmatpush1.msra.mxu0 0.0
    %3209 = vmatprep.subr.mxu0 0.0
    %3210 = vmatpush1.msra.mxu0 0.0
    %3211 = vmatprep.subr.mxu0 0.0
    %3212 = vmatpush1.msra.mxu0 0.0
    %3213 = vmatprep.subr.mxu0 0.0
    %3214 = vmatpush1.msra.mxu0 0.0
    %3215 = vmatprep.subr.mxu0 0.0
    %3216 = vmatpush1.msra.mxu0 0.0
    %3217 = vmatprep.subr.mxu0 0.0
    %3218 = vmatpush1.msra.mxu0 0.0
    %3219 = vmatprep.subr.mxu0 0.0
    %3220 = vmatpush1.msra.mxu0 0.0
    %3221 = vmatprep.subr.mxu0 0.0
    %3222 = vmatpush1.msra.mxu0 0.0
    %3223 = vmatprep.subr.mxu0 0.0
    %3224 = vmatpush1.msra.mxu0 0.0
    %3225 = vmatprep.subr.mxu0 0.0
    %3226 = vmatpush1.msra.mxu0 0.0
    %3227 = vmatprep.subr.mxu0 0.0
    %3228 = vmatpush1.msra.mxu0 0.0
    %3229 = vmatprep.subr.mxu0 0.0
    %3230 = vmatpush1.msra.mxu0 %v3195
    %3231 = vmatprep.subr.mxu0 0.0
    %3232 = vmatpush2.msra.mxu0 0.0
    %3233 = vmatprep.subr.mxu0 0.0
    %3234 = vmatpush2.msra.mxu0 0.0
    %3235 = vmatprep.subr.mxu0 0.0
    %3236 = vmatpush2.msra.mxu0 0.0
    %3237 = vmatprep.subr.mxu0 0.0
    %3238 = vmatpush2.msra.mxu0 0.0
    %3239 = vmatprep.subr.mxu0 0.0
    %3240 = vmatpush2.msra.mxu0 0.0
    %3241 = vmatprep.subr.mxu0 0.0
    %3242 = vmatpush2.msra.mxu0 0.0
    %3243 = vmatprep.subr.mxu0 0.0
    %3244 = vmatpush2.msra.mxu0 0.0
    %3245 = vmatprep.subr.mxu0 0.0
    %3246 = vmatpush2.msra.mxu0 0.0
    %3247 = vmatprep.subr.mxu0 0.0
    %3248 = vmatpush2.msra.mxu0 0.0
    %3249 = vmatprep.subr.mxu0 0.0
    %3250 = vmatpush2.msra.mxu0 0.0
    %3251 = vmatprep.subr.mxu0 0.0
    %3252 = vmatpush2.msra.mxu0 0.0
    %3253 = vmatprep.subr.mxu0 0.0
    %3254 = vmatpush2.msra.mxu0 0.0
    %3255 = vmatprep.subr.mxu0 0.0
    %3256 = vmatpush2.msra.mxu0 0.0
    %3257 = vmatprep.subr.mxu0 0.0
    %3258 = vmatpush2.msra.mxu0 0.0
    %3259 = vmatprep.subr.mxu0 0.0
    %3260 = vmatpush2.msra.mxu0 0.0
    %3261 = vmatprep.subr.mxu0 0.0
    %3262 = vmatpush2.msra.mxu0 0.0
    %3263 = vmatprep.mubr.f32.mxu0 0.0
    %3264 = vmatmul.mubr.f32.gmra.mxu0 %v3197
    %v3265 = vpop.f32.mrf.mxu0
    %v3266 = vadd.f32 0.0, %v3265
    %v3267 = vpop.f32.mrf.mxu0
    %3268 = vdwg.mxu0
    %v3269 = vadd.f32 %v3179, %v3266
    %v3270 = vld [vmem:[%s15] sm:$0x1]
    %v3271 = vlaneseq
    %v3272 = vshrl.u32 %v3271, 7
    %v3273 = vsub.s32 0, %v3272
    %v3274 = vrot.slane %v3270, %v3273
    %v3275 = vmul.f32 %v2977, %v3274
    %v3276 = vld [vmem:[%s15 + $0x1] sm:$0x1]
    %v3277 = vlaneseq
    %v3278 = vshrl.u32 %v3277, 7
    %v3279 = vsub.s32 0, %v3278
    %v3280 = vrot.slane %v3276, %v3279
    %v3281 = vadd.f32 %v3275, %v3280
    %v3282 = vmax.f32 %v3281, 0.0
    %v3283 = vld [vmem:[%s19] sm:$0x1]
    %3285 = vset.pattern.permute.xlu0 0
    %3286 = vperm.xlu0 %3285, %v3282
    %v3287 = vpop.permute.xlu0 %3286
    %v3290 = vlaneseq
    %v3291 = vshrl.u32 %v3290, 7
    %v3292 = vsub.s32 0, %v3291
    %v3293 = vrot.slane %v3283, %v3292
    %v3295 = vmul.f32 %v3287, %v3293
    %v3296 = vadd.f32 %v3269, %v3295
    %v3297 = vld [vmem:[%s20] sm:$0x1]
    %v3299 = vlaneseq
    %v3300 = vshrl.u32 %v3299, 7
    %v3301 = vsub.s32 0, %v3300
    %v3302 = vrot.slane %v3297, %v3301
    %v3304 = vadd.f32 %v3296, %v3302
    %v3305 = vld [vmem:[%s21] sm:$0x1]
    %v3306 = vlaneseq
    %v3307 = vshrl.u32 %v3306, 7
    %v3308 = vsub.s32 0, %v3307
    %v3309 = vrot.slane %v3305, %v3308
    %v3310 = vmul.f32 %v3304, %v3309
    %v3311 = vld [vmem:[%s21 + $0x1] sm:$0x1]
    %v3312 = vlaneseq
    %v3313 = vshrl.u32 %v3312, 7
    %v3314 = vsub.s32 0, %v3313
    %v3315 = vrot.slane %v3311, %v3314
    %v3316 = vadd.f32 %v3310, %v3315
    %v3317 = vmax.f32 %v3316, 0.0
    %v3318 = vld [vmem:[%s22] sm:$0x1]
    %v3320 = vlaneseq
    %v3321 = vshrl.u32 %v3320, 7
    %v3322 = vsub.s32 0, %v3321
    %v3323 = vrot.slane %v3318, %v3322
    %v3325 = vmul.f32 %v3317, %v3323
    %vm3326 = vcmask 130048
    %v3327 = vsel %vm3326, %v3325, 0.0
    %3328 = vadd.xlane.f32.xlu0 %v3327
    %v3329 = vpop.xlane.xlu0 %3328
    %v3330 = vld [vmem:[#allocation4] sm:$0x1]
    %v3332 = vlaneseq
    %v3333 = vshrl.u32 %v3332, 7
    %v3334 = vsub.s32 0, %v3333
    %v3335 = vrot.slane %v3330, %v3334
    %v3337 = vadd.f32 %v3329, %v3335
    %vm3338 = vcmask 7168
    %3339 = vst.msk [vmem:[%s24] sm:$0xff] %vm3338, %v3337
    // Predicated region
    $region118: #{tpu_custom_call.1} parent=1 // pred_check
      _
    $region119: #{tpu_custom_call.1} parent=1 // pred_check_branch
      %3341 = sbr.rel (0) target = $region121
    $region120: #{tpu_custom_call.1} parent=1 // pred_region
      _
    $region121: #{tpu_custom_call.1} parent=1 // pred_fallthru
      _
    // Predicated region
    $region122: #{tpu_custom_call.1} parent=1 // pred_check
      _
    $region123: #{tpu_custom_call.1} parent=1 // pred_check_branch
      %3343 = sbr.rel (0) target = $region125
    $region124: #{tpu_custom_call.1} parent=1 // pred_region
      _
    $region125: #{tpu_custom_call.1} parent=1 // pred_fallthru
      _
    %3344 = vsyncpa [#allocation6], 1
    %3345 = vsyncpa [#allocation8], 1
    %3346 = vsyncpa [#allocation11], 1

</llo_original>
